<compile_context>
chip_gen: v6e
topology: v6e:2x2x1
jax: 0.10.0
libtpu: 0.0.40
codegen_flags: <defaults>
</compile_context>

<pallas_src>
import functools

import jax
import jax.numpy as jnp
from jax import lax
from jax.experimental import pallas as pl
from jax.experimental.pallas import tpu as pltpu


def _round_up(x, m):
    return (x + m - 1) // m * m


def _domain_classifier_kernel(ids_ref,      # (tb, ts) i32   VMEM block
                              mask_ref,     # (tb, ts) f32   VMEM block
                              table_ref,    # (V_pad, D_pad) bf16, VMEM-resident
                              w1_ref,       # (D_pad, H_pad) bf16, resident
                              b1_ref,       # (1, H_pad)     f32,  resident
                              w2_ref,       # (H_pad, L_pad) bf16, resident
                              b2_ref,       # (1, L_pad)     f32,  resident
                              out_ref,      # (tb, L_pad)    f32
                              acc_ref,      # (tb, D_pad)    f32 scratch
                              den_ref,      # (tb, 1)        f32 scratch
                              *, vpad):
    s = pl.program_id(1)                    # seq chunk ("arbitrary", reduction)
    tb, ts = ids_ref.shape

    @pl.when(s == 0)
    def _init():
        acc_ref[...] = jnp.zeros_like(acc_ref)
        den_ref[...] = jnp.zeros_like(den_ref)

    ids = ids_ref[...]                      # (tb, ts) i32
    m = mask_ref[...]                       # (tb, ts) f32 (0/1)

    # Bag-of-words one-hot: cnt[b, v] = sum_s mask[b,s] * [ids[b,s] == v].
    iota_v = lax.broadcasted_iota(jnp.int32, (tb, ts, vpad), 2)
    oh = (ids[:, :, None] == iota_v).astype(jnp.float32) * m[:, :, None]
    cnt = jnp.sum(oh, axis=1)               # (tb, vpad) f32, integer values <= ts

    # Masked-sum pooling on the MXU: cnt (exact in bf16, <= block_s) @ bf16 table.
    acc_ref[...] += jnp.dot(cnt.astype(jnp.bfloat16), table_ref[...],
                            preferred_element_type=jnp.float32)
    den_ref[...] += jnp.sum(m, axis=1, keepdims=True)

    # Epilogue: mean + MLP, once per batch tile, VMEM-resident bf16 weights.
    @pl.when(s == pl.num_programs(1) - 1)
    def _epilogue():
        den = jnp.maximum(den_ref[...], 1.0)            # guard all-zero-mask rows
        mean = acc_ref[...] * pl.reciprocal(den)        # (tb, D_pad) f32
        h = jnp.dot(mean.astype(jnp.bfloat16), w1_ref[...],
                    preferred_element_type=jnp.float32) + b1_ref[...]
        h = jnp.maximum(h, 0.0)
        logits = jnp.dot(h.astype(jnp.bfloat16), w2_ref[...],
                         preferred_element_type=jnp.float32) + b2_ref[...]
        out_ref[...] = logits.astype(out_ref.dtype)


@functools.partial(jax.jit, static_argnames=("block_b", "block_s"))
def _domain_classifier_logits_padded(embed_table, w1, b1, w2, b2,
                                     input_ids, attention_mask,
                                     *, block_b, block_s):
    V, D = embed_table.shape
    H = w1.shape[1]
    L = w2.shape[1]
    B, S = input_ids.shape

    dp = _round_up(D, 128)
    hp = _round_up(H, 128)
    lp = _round_up(L, 128)      # lane-dense output block; wrapper slices [:, :L]
    vp = _round_up(V, 128)

    bp = _round_up(B, block_b)
    sp = _round_up(S, block_s)
    nb = bp // block_b
    ns = sp // block_s

    # Pack / pad parameters (in a real model this is precomputed once).
    # Table and Linear weights are stored & fed to the MXU as bf16; biases f32.
    table = jnp.zeros((vp, dp), jnp.bfloat16).at[:V, :D].set(
        embed_table.astype(jnp.bfloat16))
    w1p = jnp.zeros((dp, hp), jnp.bfloat16).at[:D, :H].set(w1.astype(jnp.bfloat16))
    b1p = jnp.zeros((1, hp), jnp.float32).at[0, :H].set(b1)
    w2p = jnp.zeros((hp, lp), jnp.bfloat16).at[:H, :L].set(w2.astype(jnp.bfloat16))
    b2p = jnp.zeros((1, lp), jnp.float32).at[0, :L].set(b2)

    ids = jnp.zeros((bp, sp), jnp.int32).at[:B, :S].set(input_ids.astype(jnp.int32))
    mask = jnp.zeros((bp, sp), jnp.float32).at[:B, :S].set(
        attention_mask.astype(jnp.float32))

    kernel = functools.partial(_domain_classifier_kernel, vpad=vp)

    grid_spec = pltpu.PrefetchScalarGridSpec(
        num_scalar_prefetch=0,
        grid=(nb, ns),
        in_specs=[
            pl.BlockSpec((block_b, block_s), lambda b, s: (b, s)),   # ids tile
            pl.BlockSpec((block_b, block_s), lambda b, s: (b, s)),   # mask tile
            pl.BlockSpec((vp, dp), lambda b, s: (0, 0)),   # table: VMEM-resident
            pl.BlockSpec((dp, hp), lambda b, s: (0, 0)),   # weights resident
            pl.BlockSpec((1, hp), lambda b, s: (0, 0)),
            pl.BlockSpec((hp, lp), lambda b, s: (0, 0)),
            pl.BlockSpec((1, lp), lambda b, s: (0, 0)),
        ],
        out_specs=pl.BlockSpec((block_b, lp), lambda b, s: (b, 0)),
        scratch_shapes=[
            pltpu.VMEM((block_b, dp), jnp.float32),        # pooled-sum accumulator
            pltpu.VMEM((block_b, 1), jnp.float32),         # mask-count accumulator
        ],
    )

    return pl.pallas_call(
        kernel,
        grid_spec=grid_spec,
        out_shape=jax.ShapeDtypeStruct((bp, lp), jnp.float32),
        compiler_params=pltpu.CompilerParams(
            dimension_semantics=("parallel", "arbitrary"),
        ),
    )(ids, mask, table, w1p, b1p, w2p, b2p)


def domain_classifier_logits(params, input_ids, attention_mask,
                             *, block_b=8, block_s=128):
    # block_s is lane-dense (multiple of 128).  Production: raise block_s to
    # 256-512 and pick block_b so ceil(B/block_b) >= 2 (v7x megacore sharding).
    B = input_ids.shape[0]
    L = params["w2"].shape[1]
    padded = _domain_classifier_logits_padded(
        params["embed_table"], params["w1"], params["b1"],
        params["w2"], params["b2"],
        input_ids, attention_mask, block_b=block_b, block_s=block_s)
    return padded[:B, :L]


def domain_classifier_forward(params, input_ids, attention_mask, labels=None,
                              *, block_b=8, block_s=128):
    """Mirrors DomainClassifier.forward. Returns (logits,) or (loss, logits)."""
    if input_ids.shape != attention_mask.shape:
        raise ValueError(
            f"DomainClassifier.forward: batch and attention masks must have the "
            f"same shape, got {input_ids.shape} and {attention_mask.shape}.")
    logits = domain_classifier_logits(params, input_ids, attention_mask,
                                      block_b=block_b, block_s=block_s)
    outputs = (logits,)
    if labels is not None:
        # nn.CrossEntropyLoss (mean reduction) on the kernel output (JAX glue).
        logp = jax.nn.log_softmax(logits, axis=-1)
        nll = -jnp.take_along_axis(logp, labels[:, None], axis=-1)[:, 0]
        outputs = (jnp.mean(nll),) + outputs
    return outputs


def _init_params(key, vocab_size, embed_dim, hidden_dim, n_labels):
    k_emb, k_w1, k_b1, k_w2, k_b2 = jax.random.split(key, 5)
    embed_table = jax.random.normal(k_emb, (vocab_size, embed_dim), jnp.float32)
    # PyTorch Linear default init: U(-1/sqrt(fan_in), 1/sqrt(fan_in)).
    lim1 = 1.0 / (embed_dim ** 0.5)
    lim2 = 1.0 / (hidden_dim ** 0.5)
    w1 = jax.random.uniform(k_w1, (embed_dim, hidden_dim), jnp.float32, -lim1, lim1)
    b1 = jax.random.uniform(k_b1, (hidden_dim,), jnp.float32, -lim1, lim1)
    w2 = jax.random.uniform(k_w2, (hidden_dim, n_labels), jnp.float32, -lim2, lim2)
    b2 = jax.random.uniform(k_b2, (n_labels,), jnp.float32, -lim2, lim2)
    return dict(embed_table=embed_table, w1=w1, b1=b1, w2=w2, b2=b2)


def _reference_forward(params, input_ids, attention_mask):
    # Matches the kernel's numerics: table / w1 / w2 stored as bf16, matmul inputs
    # bf16, accumulation / biases / pooling in f32.
    table_bf16 = params["embed_table"].astype(jnp.bfloat16)
    w1_bf16 = params["w1"].astype(jnp.bfloat16)
    w2_bf16 = params["w2"].astype(jnp.bfloat16)
    embeds = jnp.take(table_bf16, input_ids, axis=0).astype(jnp.float32)
    mask_f = attention_mask.astype(jnp.float32)
    masked = embeds * mask_f[:, :, None]
    mean = masked.sum(1) / mask_f.sum(-1)[:, None]
    h = jnp.dot(mean.astype(jnp.bfloat16), w1_bf16,
                preferred_element_type=jnp.float32) + params["b1"]
    h = jnp.maximum(h, 0.0)
    return jnp.dot(h.astype(jnp.bfloat16), w2_bf16,
                   preferred_element_type=jnp.float32) + params["b2"]


if __name__ == "__main__":
    key = jax.random.PRNGKey(0)
    k_params, k_ids, k_mask, k_labels = jax.random.split(key, 4)

    VOCAB, EMBED_DIM, HIDDEN_DIM, N_LABELS = 500, 64, 128, 2
    B, S = 16, 256                    # -> grid (2 batch tiles, 2 sequence chunks)

    params = _init_params(k_params, VOCAB, EMBED_DIM, HIDDEN_DIM, N_LABELS)

    input_ids = jax.random.randint(k_ids, (B, S), 0, VOCAB, dtype=jnp.int32)
    # Random 0/1 mask, but force first token on so no real row is all-zero.
    attention_mask = (jax.random.uniform(k_mask, (B, S)) > 0.3).astype(jnp.int32)
    attention_mask = attention_mask.at[:, 0].set(1)
    labels = jax.random.randint(k_labels, (B,), 0, N_LABELS, dtype=jnp.int32)

    loss, logits = domain_classifier_forward(params, input_ids, attention_mask,
                                             labels=labels)
    logits = jax.block_until_ready(logits)
    loss = jax.block_until_ready(loss)

    ref = _reference_forward(params, input_ids, attention_mask)
    assert logits.shape == (B, N_LABELS)
    max_err = float(jnp.max(jnp.abs(logits - ref)))
    assert jnp.allclose(logits, ref, atol=1e-2, rtol=1e-2), (
        f"mismatch vs reference (max abs err {max_err})")
    assert bool(jnp.isfinite(loss))

    print("KERNEL_OK")
</pallas_src>

<mosaic_0001>
module attributes {stable_mosaic.version = 11 : i64} {
  func.func @_domain_classifier_kernel(%arg0: i32, %arg1: i32, %arg2: memref<8x128xi32, #tpu.memory_space<vmem>>, %arg3: memref<8x128xf32, #tpu.memory_space<vmem>>, %arg4: memref<512x128xbf16, #tpu.memory_space<vmem>>, %arg5: memref<128x128xbf16, #tpu.memory_space<vmem>>, %arg6: memref<1x128xf32, #tpu.memory_space<vmem>>, %arg7: memref<128x128xbf16, #tpu.memory_space<vmem>>, %arg8: memref<1x128xf32, #tpu.memory_space<vmem>>, %arg9: memref<8x128xf32, #tpu.memory_space<vmem>>, %arg10: memref<8x128xf32, #tpu.memory_space<vmem>>, %arg11: memref<8x1xf32, #tpu.memory_space<vmem>>) attributes {dimension_semantics = [#tpu.dimension_semantics<parallel>, #tpu.dimension_semantics<arbitrary>], iteration_bounds = array<i64: 2, 2>, scalar_prefetch = 0 : i64, scratch_operands = 2 : i64, tpu.core_type = #tpu.core_type<tc>, window_params = [{transform_indices = @transform_0, window_bounds = array<i64: 8, 128>}, {transform_indices = @transform_1, window_bounds = array<i64: 8, 128>}, {pipeline_mode = #tpu.pipeline_mode<synchronous>, transform_indices = @transform_2, window_bounds = array<i64: 512, 128>}, {pipeline_mode = #tpu.pipeline_mode<synchronous>, transform_indices = @transform_3, window_bounds = array<i64: 128, 128>}, {pipeline_mode = #tpu.pipeline_mode<synchronous>, transform_indices = @transform_4, window_bounds = array<i64: 1, 128>}, {pipeline_mode = #tpu.pipeline_mode<synchronous>, transform_indices = @transform_5, window_bounds = array<i64: 128, 128>}, {pipeline_mode = #tpu.pipeline_mode<synchronous>, transform_indices = @transform_6, window_bounds = array<i64: 1, 128>}, {transform_indices = @transform_7, window_bounds = array<i64: 8, 128>}]} {
    %c0_i32 = arith.constant 0 : i32
    %0 = arith.cmpi eq, %arg1, %c0_i32 : i32
    %1 = arith.extui %0 : i1 to i32
    %c0_i32_0 = arith.constant 0 : i32
    %2 = arith.cmpi ne, %1, %c0_i32_0 : i32
    scf.if %2 {
      %cst_17 = arith.constant 0.000000e+00 : f32
      %29 = vector.broadcast %cst_17 : f32 to vector<8x128xf32>
      %c0_18 = arith.constant 0 : index
      %c0_19 = arith.constant 0 : index
      %30 = vector.load %arg10[%c0_18, %c0_19] : memref<8x128xf32, #tpu.memory_space<vmem>>, vector<8x128xf32>
      tpu.vector_store %arg10[%c0_18, %c0_19], %29 {strides = array<i32>} : memref<8x128xf32, #tpu.memory_space<vmem>>, vector<8x128xf32>,
      %cst_20 = arith.constant 0.000000e+00 : f32
      %31 = vector.broadcast %cst_20 : f32 to vector<8x1xf32>
      %c0_21 = arith.constant 0 : index
      %c0_22 = arith.constant 0 : index
      %32 = vector.load %arg11[%c0_21, %c0_22] : memref<8x1xf32, #tpu.memory_space<vmem>>, vector<8x1xf32>
      tpu.vector_store %arg11[%c0_21, %c0_22], %31 {strides = array<i32>} : memref<8x1xf32, #tpu.memory_space<vmem>>, vector<8x1xf32>,
    } else {
    }
    %c0 = arith.constant 0 : index
    %c0_1 = arith.constant 0 : index
    %3 = vector.load %arg2[%c0, %c0_1] : memref<8x128xi32, #tpu.memory_space<vmem>>, vector<8x128xi32>
    %c0_2 = arith.constant 0 : index
    %c0_3 = arith.constant 0 : index
    %4 = vector.load %arg3[%c0_2, %c0_3] : memref<8x128xf32, #tpu.memory_space<vmem>>, vector<8x128xf32>
    %5 = tpu.iota {dimensions = array<i32: 2>} : vector<8x128x512xi32>
    %6 = vector.shape_cast %3 : vector<8x128xi32> to vector<8x128x1xi32>
    %7 = vector.broadcast %6 : vector<8x128x1xi32> to vector<8x128x512xi32>
    %8 = arith.cmpi eq, %7, %5 : vector<8x128x512xi32>
    %9 = arith.extui %8 : vector<8x128x512xi1> to vector<8x128x512xi32>
    %10 = arith.sitofp %9 : vector<8x128x512xi32> to vector<8x128x512xf32>
    %11 = vector.shape_cast %4 : vector<8x128xf32> to vector<8x128x1xf32>
    %12 = vector.broadcast %11 : vector<8x128x1xf32> to vector<8x128x512xf32>
    %13 = arith.mulf %10, %12 : vector<8x128x512xf32>
    %cst = arith.constant dense<0.000000e+00> : vector<8x512xf32>
    %14 = vector.multi_reduction <add>, %13, %cst [1] : vector<8x128x512xf32> to vector<8x512xf32>
    %c0_4 = arith.constant 0 : index
    %c0_5 = arith.constant 0 : index
    %15 = vector.load %arg10[%c0_4, %c0_5] : memref<8x128xf32, #tpu.memory_space<vmem>>, vector<8x128xf32>
    %16 = arith.truncf %14 : vector<8x512xf32> to vector<8x512xbf16>
    %c0_6 = arith.constant 0 : index
    %c0_7 = arith.constant 0 : index
    %17 = vector.load %arg4[%c0_6, %c0_7] : memref<512x128xbf16, #tpu.memory_space<vmem>>, vector<512x128xbf16>
    %cst_8 = arith.constant dense<0.000000e+00> : vector<8x128xf32>
    %18 = tpu.matmul %16, %17, %cst_8 {dimension_numbers = #tpu.dot_dimension_numbers<[1], [0], [0], [1], [0, 0, 1, 1], [], []>} : vector<8x512xbf16>, vector<512x128xbf16>, vector<8x128xf32> -> vector<8x128xf32>
    %19 = arith.addf %15, %18 : vector<8x128xf32>
    %c0_9 = arith.constant 0 : index
    %c0_10 = arith.constant 0 : index
    %20 = vector.load %arg10[%c0_9, %c0_10] : memref<8x128xf32, #tpu.memory_space<vmem>>, vector<8x128xf32>
    tpu.vector_store %arg10[%c0_9, %c0_10], %19 {strides = array<i32>} : memref<8x128xf32, #tpu.memory_space<vmem>>, vector<8x128xf32>,
    %c0_11 = arith.constant 0 : index
    %c0_12 = arith.constant 0 : index
    %21 = vector.load %arg11[%c0_11, %c0_12] : memref<8x1xf32, #tpu.memory_space<vmem>>, vector<8x1xf32>
    %cst_13 = arith.constant dense<0.000000e+00> : vector<8xf32>
    %22 = vector.multi_reduction <add>, %4, %cst_13 [1] : vector<8x128xf32> to vector<8xf32>
    %23 = vector.shape_cast %22 : vector<8xf32> to vector<8x1xf32>
    %24 = arith.addf %21, %23 : vector<8x1xf32>
    %c0_14 = arith.constant 0 : index
    %c0_15 = arith.constant 0 : index
    %25 = vector.load %arg11[%c0_14, %c0_15] : memref<8x1xf32, #tpu.memory_space<vmem>>, vector<8x1xf32>
    tpu.vector_store %arg11[%c0_14, %c0_15], %24 {strides = array<i32>} : memref<8x1xf32, #tpu.memory_space<vmem>>, vector<8x1xf32>,
    %c1_i32 = arith.constant 1 : i32
    %26 = arith.cmpi eq, %arg1, %c1_i32 : i32
    %27 = arith.extui %26 : i1 to i32
    %c0_i32_16 = arith.constant 0 : i32
    %28 = arith.cmpi ne, %27, %c0_i32_16 : i32
    scf.if %28 {
      %c0_17 = arith.constant 0 : index
      %c0_18 = arith.constant 0 : index
      %29 = vector.load %arg11[%c0_17, %c0_18] : memref<8x1xf32, #tpu.memory_space<vmem>>, vector<8x1xf32>
      %cst_19 = arith.constant 1.000000e+00 : f32
      %30 = vector.broadcast %cst_19 : f32 to vector<8x1xf32>
      %31 = arith.maximumf %29, %30 : vector<8x1xf32>
      %c0_20 = arith.constant 0 : index
      %c0_21 = arith.constant 0 : index
      %32 = vector.load %arg10[%c0_20, %c0_21] : memref<8x128xf32, #tpu.memory_space<vmem>>, vector<8x128xf32>
      %33 = tpu.reciprocal %31 : vector<8x1xf32> -> vector<8x1xf32>
      %34 = vector.broadcast %33 : vector<8x1xf32> to vector<8x128xf32>
      %35 = arith.mulf %32, %34 : vector<8x128xf32>
      %36 = arith.truncf %35 : vector<8x128xf32> to vector<8x128xbf16>
      %c0_22 = arith.constant 0 : index
      %c0_23 = arith.constant 0 : index
      %37 = vector.load %arg5[%c0_22, %c0_23] : memref<128x128xbf16, #tpu.memory_space<vmem>>, vector<128x128xbf16>
      %cst_24 = arith.constant dense<0.000000e+00> : vector<8x128xf32>
      %38 = tpu.matmul %36, %37, %cst_24 {dimension_numbers = #tpu.dot_dimension_numbers<[1], [0], [0], [1], [0, 0, 1, 1], [], []>} : vector<8x128xbf16>, vector<128x128xbf16>, vector<8x128xf32> -> vector<8x128xf32>
      %c0_25 = arith.constant 0 : index
      %c0_26 = arith.constant 0 : index
      %39 = vector.load %arg6[%c0_25, %c0_26] : memref<1x128xf32, #tpu.memory_space<vmem>>, vector<1x128xf32>
      %40 = vector.broadcast %39 : vector<1x128xf32> to vector<8x128xf32>
      %41 = arith.addf %38, %40 : vector<8x128xf32>
      %cst_27 = arith.constant 0.000000e+00 : f32
      %42 = vector.broadcast %cst_27 : f32 to vector<8x128xf32>
      %43 = arith.maximumf %41, %42 : vector<8x128xf32>
      %44 = arith.truncf %43 : vector<8x128xf32> to vector<8x128xbf16>
      %c0_28 = arith.constant 0 : index
      %c0_29 = arith.constant 0 : index
      %45 = vector.load %arg7[%c0_28, %c0_29] : memref<128x128xbf16, #tpu.memory_space<vmem>>, vector<128x128xbf16>
      %cst_30 = arith.constant dense<0.000000e+00> : vector<8x128xf32>
      %46 = tpu.matmul %44, %45, %cst_30 {dimension_numbers = #tpu.dot_dimension_numbers<[1], [0], [0], [1], [0, 0, 1, 1], [], []>} : vector<8x128xbf16>, vector<128x128xbf16>, vector<8x128xf32> -> vector<8x128xf32>
      %c0_31 = arith.constant 0 : index
      %c0_32 = arith.constant 0 : index
      %47 = vector.load %arg8[%c0_31, %c0_32] : memref<1x128xf32, #tpu.memory_space<vmem>>, vector<1x128xf32>
      %48 = vector.broadcast %47 : vector<1x128xf32> to vector<8x128xf32>
      %49 = arith.addf %46, %48 : vector<8x128xf32>
      %c0_33 = arith.constant 0 : index
      %c0_34 = arith.constant 0 : index
      %50 = vector.load %arg9[%c0_33, %c0_34] : memref<8x128xf32, #tpu.memory_space<vmem>>, vector<8x128xf32>
      tpu.vector_store %arg9[%c0_33, %c0_34], %49 {strides = array<i32>} : memref<8x128xf32, #tpu.memory_space<vmem>>, vector<8x128xf32>,
    } else {
    }
    return
  }
  func.func @transform_0(%arg0: i32, %arg1: i32) -> (i32, i32) {
    %c0_i32 = arith.constant 0 : i32
    return %arg0, %arg1 : i32, i32
  }
  func.func @transform_1(%arg0: i32, %arg1: i32) -> (i32, i32) {
    %c0_i32 = arith.constant 0 : i32
    return %arg0, %arg1 : i32, i32
  }
  func.func @transform_2(%arg0: i32, %arg1: i32) -> (i32, i32) {
    %c0_i32 = arith.constant 0 : i32
    %c0_i32_0 = arith.constant 0 : i32
    %c0_i32_1 = arith.constant 0 : i32
    return %c0_i32, %c0_i32_0 : i32, i32
  }
  func.func @transform_3(%arg0: i32, %arg1: i32) -> (i32, i32) {
    %c0_i32 = arith.constant 0 : i32
    %c0_i32_0 = arith.constant 0 : i32
    %c0_i32_1 = arith.constant 0 : i32
    return %c0_i32, %c0_i32_0 : i32, i32
  }
  func.func @transform_4(%arg0: i32, %arg1: i32) -> (i32, i32) {
    %c0_i32 = arith.constant 0 : i32
    %c0_i32_0 = arith.constant 0 : i32
    %c0_i32_1 = arith.constant 0 : i32
    return %c0_i32, %c0_i32_0 : i32, i32
  }
  func.func @transform_5(%arg0: i32, %arg1: i32) -> (i32, i32) {
    %c0_i32 = arith.constant 0 : i32
    %c0_i32_0 = arith.constant 0 : i32
    %c0_i32_1 = arith.constant 0 : i32
    return %c0_i32, %c0_i32_0 : i32, i32
  }
  func.func @transform_6(%arg0: i32, %arg1: i32) -> (i32, i32) {
    %c0_i32 = arith.constant 0 : i32
    %c0_i32_0 = arith.constant 0 : i32
    %c0_i32_1 = arith.constant 0 : i32
    return %c0_i32, %c0_i32_0 : i32, i32
  }
  func.func @transform_7(%arg0: i32, %arg1: i32) -> (i32, i32) {
    %c0_i32 = arith.constant 0 : i32
    %c0_i32_0 = arith.constant 0 : i32
    return %arg0, %c0_i32 : i32, i32
  }
}

</mosaic_0001>

<llo_original>
// kernel: _domain_classifier_logits_padded.1
$region0: #{_domain_classifier_logits_padded.1}
  #allocation0 [shape = 'u32[]', space=smem, size = 0x4, offset = 0x4, fixed_abs, tag = 'smem constant byte address 0x4 - core index']
  #allocation1 [shape = 'u32[144,128]{1,0:T(1,128)}', space=vmem, size = 0x12000, scoped, tag = 'internal scratch']
  #allocation2 [shape = 'f32[8,128]{1,0:T(8,128)}', space=vmem, size = 0x1000, scoped, tag = 'scratch operand']
  #allocation3 [shape = 'f32[8,1]{1,0:T(8,128)}', space=vmem, size = 0x1000, scoped, tag = 'scratch operand']
  %s0 = inlined_call_operand.vmem [shape: s32[16,256], index: 0, kind: input, shape index: {}]
  %s1 = inlined_call_operand.vmem [shape: f32[16,256], index: 1, kind: input, shape index: {}]
  %s2 = inlined_call_operand.vmem [shape: bf16[512,128], index: 2, kind: input, shape index: {}]
  %s3 = inlined_call_operand.vmem [shape: bf16[128,128], index: 3, kind: input, shape index: {}]
  %s4 = inlined_call_operand.vmem [shape: f32[1,128], index: 4, kind: input, shape index: {}]
  %s5 = inlined_call_operand.vmem [shape: bf16[128,128], index: 5, kind: input, shape index: {}]
  %s6 = inlined_call_operand.vmem [shape: f32[1,128], index: 6, kind: input, shape index: {}]
  %s7 = inlined_call_operand.hbm [shape: f32[16,128], index: 7, kind: output, shape index: {}]
  %s8 = sld [smem:[#allocation0]]
  $region69: #{_domain_classifier_logits_padded.1} parent=0
    _
  %s10 = ssub.s32 1, %s8
  %s11 = scalar_select 0, %s10, %s8
  $region1: #{_domain_classifier_logits_padded.1} parent=0
    #allocation4 [shape = 'u8[8192]{0}', space=vmem, size = 0x2000, scoped, tag = 'output window, operand 0']
    #allocation5 [shape = 's32[2]{0}', space=sflag, size = 0x8, scoped, tag = 'scoped memory for _domain_classifier_logits_padded.1']
    %12 = vsyncpa [#allocation5], 0
    %s13 = scalar_lea.sflag [#allocation5], 1
    %14 = vsyncpa %s13, 0
    loop: start=0, step=1, limit=6
    $region2: #{_domain_classifier_logits_padded.1} parent=1 // loop_pre_header
      _
    $region3: #{_domain_classifier_logits_padded.1} parent=1 // loop_header
      %s16 = sphi 0, %s20
      %p17 = scmp.ge.s32.totalorder %s16, 6
      %s23 = sphi 0, %s35
      %s24 = sphi 0, %s31
      %s25 = sphi 0, %s23
      %s26 = sphi 0, %s24
      %s27 = sphi 0, %s25
      %s28 = sphi 0, %s26
      %s40 = sphi 0, %s42
      %s43 = sphi 0, %s40
      %s44 = sphi 0, %s43
      %s60 = sphi 0, %s44
      %s68 = sphi 0, %s70
      %s71 = sphi 0, %s68
      %s72 = sphi 0, %s71
      %s88 = sphi 0, %s72
      %s92 = sphi 0, %s92
      %s94 = sphi 0, %s92
      %s95 = sphi 0, %s94
      %s109 = sphi 0, %s95
      %s113 = sphi 0, %s113
      %s115 = sphi 0, %s113
      %s116 = sphi 0, %s115
      %s130 = sphi 0, %s116
      %s134 = sphi 0, %s134
      %s136 = sphi 0, %s134
      %s137 = sphi 0, %s136
      %s151 = sphi 0, %s137
      %s155 = sphi 0, %s155
      %s157 = sphi 0, %s155
      %s158 = sphi 0, %s157
      %s172 = sphi 0, %s158
      %s176 = sphi 0, %s176
      %s178 = sphi 0, %s176
      %s179 = sphi 0, %s178
      %s193 = sphi 0, %s179
      %s199 = sphi 0, %s201
      %s202 = sphi 0, %s199
      %s203 = sphi 0, %s202
      %s219 = sphi 0, %s203
    $region4: #{_domain_classifier_logits_padded.1} parent=1 // loop_header_branch
      %19 = sbr.rel (%p17) target = $region8
    $region5: #{_domain_classifier_logits_padded.1} parent=1 // loop_body
      %s21 = ssub.s32 %s16, 1
      %s22 = ssub.s32 %s16, 2
      %s29 = sadd.s32 1, %s24
      %p30 = scmp.ge.s32.totalorder %s29, 2
      %s31 = scalar_select %p30, 0, %s29
      %s32 = sadd.s32 1, %s23
      %s33 = scalar_select %p30, %s32, %s23
      %p34 = scmp.ge.s32.totalorder %s33, 2
      %s35 = scalar_select %p34, 0, %s33
      %s36 = ssub.s32 %s23, %s35
      %s37 = ssub.s32 %s24, %s31
      %s38 = sor.u32 %s36, %s37
      %p39 = scmp.eq.s32.totalorder %s38, 0
      %s41 = sadd.s32 %s40, 1
      %s42 = scalar_select %p39, %s40, %s41
      %p45 = pneg %p39
      %p46 = scmp.eq.s32.totalorder %s16, 3
      %p47 = por %p45, %p46
      %p48 = scmp.ne.s32.totalorder %s40, %s43
      %p49 = scmp.eq.s32.totalorder %s16, 0
      %p50 = por %p48, %p49
      %p51 = scmp.ne.s32.totalorder %s40, %s43
      %p52 = scmp.eq.s32.totalorder %s21, 3
      %p53 = por %p51, %p52
      %p54 = scmp.ne.s32.totalorder %s43, %s44
      %p55 = scmp.eq.s32.totalorder %s21, 0
      %p56 = por %p54, %p55
      %p57 = scmp.ne.s32.totalorder %s43, %s44
      %p58 = scmp.eq.s32.totalorder %s22, 3
      %p59 = por %p57, %p58
      %p61 = scmp.ne.s32.totalorder %s44, %s60
      %p62 = scmp.eq.s32.totalorder %s22, 0
      %p63 = por %p61, %p62
      %s64 = ssub.s32 %s23, %s35
      %s65 = ssub.s32 %s24, %s31
      %s66 = sor.u32 %s64, %s65
      %p67 = scmp.eq.s32.totalorder %s66, 0
      %s69 = sadd.s32 %s68, 1
      %s70 = scalar_select %p67, %s68, %s69
      %p73 = pneg %p67
      %p74 = scmp.eq.s32.totalorder %s16, 3
      %p75 = por %p73, %p74
      %p76 = scmp.ne.s32.totalorder %s68, %s71
      %p77 = scmp.eq.s32.totalorder %s16, 0
      %p78 = por %p76, %p77
      %p79 = scmp.ne.s32.totalorder %s68, %s71
      %p80 = scmp.eq.s32.totalorder %s21, 3
      %p81 = por %p79, %p80
      %p82 = scmp.ne.s32.totalorder %s71, %s72
      %p83 = scmp.eq.s32.totalorder %s21, 0
      %p84 = por %p82, %p83
      %p85 = scmp.ne.s32.totalorder %s71, %s72
      %p86 = scmp.eq.s32.totalorder %s22, 3
      %p87 = por %p85, %p86
      %p89 = scmp.ne.s32.totalorder %s72, %s88
      %p90 = scmp.eq.s32.totalorder %s22, 0
      %p91 = por %p89, %p90
      %s93 = sadd.s32 %s92, 1
      %p96 = scmp.eq.s32.totalorder %s16, 3
      %p97 = scmp.ne.s32.totalorder %s92, %s94
      %p98 = scmp.eq.s32.totalorder %s16, 0
      %p99 = por %p97, %p98
      %p100 = scmp.ne.s32.totalorder %s92, %s94
      %p101 = scmp.eq.s32.totalorder %s21, 3
      %p102 = por %p100, %p101
      %p103 = scmp.ne.s32.totalorder %s94, %s95
      %p104 = scmp.eq.s32.totalorder %s21, 0
      %p105 = por %p103, %p104
      %p106 = scmp.ne.s32.totalorder %s94, %s95
      %p107 = scmp.eq.s32.totalorder %s22, 3
      %p108 = por %p106, %p107
      %p110 = scmp.ne.s32.totalorder %s95, %s109
      %p111 = scmp.eq.s32.totalorder %s22, 0
      %p112 = por %p110, %p111
      %s114 = sadd.s32 %s113, 1
      %p117 = scmp.eq.s32.totalorder %s16, 3
      %p118 = scmp.ne.s32.totalorder %s113, %s115
      %p119 = scmp.eq.s32.totalorder %s16, 0
      %p120 = por %p118, %p119
      %p121 = scmp.ne.s32.totalorder %s113, %s115
      %p122 = scmp.eq.s32.totalorder %s21, 3
      %p123 = por %p121, %p122
      %p124 = scmp.ne.s32.totalorder %s115, %s116
      %p125 = scmp.eq.s32.totalorder %s21, 0
      %p126 = por %p124, %p125
      %p127 = scmp.ne.s32.totalorder %s115, %s116
      %p128 = scmp.eq.s32.totalorder %s22, 3
      %p129 = por %p127, %p128
      %p131 = scmp.ne.s32.totalorder %s116, %s130
      %p132 = scmp.eq.s32.totalorder %s22, 0
      %p133 = por %p131, %p132
      %s135 = sadd.s32 %s134, 1
      %p138 = scmp.eq.s32.totalorder %s16, 3
      %p139 = scmp.ne.s32.totalorder %s134, %s136
      %p140 = scmp.eq.s32.totalorder %s16, 0
      %p141 = por %p139, %p140
      %p142 = scmp.ne.s32.totalorder %s134, %s136
      %p143 = scmp.eq.s32.totalorder %s21, 3
      %p144 = por %p142, %p143
      %p145 = scmp.ne.s32.totalorder %s136, %s137
      %p146 = scmp.eq.s32.totalorder %s21, 0
      %p147 = por %p145, %p146
      %p148 = scmp.ne.s32.totalorder %s136, %s137
      %p149 = scmp.eq.s32.totalorder %s22, 3
      %p150 = por %p148, %p149
      %p152 = scmp.ne.s32.totalorder %s137, %s151
      %p153 = scmp.eq.s32.totalorder %s22, 0
      %p154 = por %p152, %p153
      %s156 = sadd.s32 %s155, 1
      %p159 = scmp.eq.s32.totalorder %s16, 3
      %p160 = scmp.ne.s32.totalorder %s155, %s157
      %p161 = scmp.eq.s32.totalorder %s16, 0
      %p162 = por %p160, %p161
      %p163 = scmp.ne.s32.totalorder %s155, %s157
      %p164 = scmp.eq.s32.totalorder %s21, 3
      %p165 = por %p163, %p164
      %p166 = scmp.ne.s32.totalorder %s157, %s158
      %p167 = scmp.eq.s32.totalorder %s21, 0
      %p168 = por %p166, %p167
      %p169 = scmp.ne.s32.totalorder %s157, %s158
      %p170 = scmp.eq.s32.totalorder %s22, 3
      %p171 = por %p169, %p170
      %p173 = scmp.ne.s32.totalorder %s158, %s172
      %p174 = scmp.eq.s32.totalorder %s22, 0
      %p175 = por %p173, %p174
      %s177 = sadd.s32 %s176, 1
      %p180 = scmp.eq.s32.totalorder %s16, 3
      %p181 = scmp.ne.s32.totalorder %s176, %s178
      %p182 = scmp.eq.s32.totalorder %s16, 0
      %p183 = por %p181, %p182
      %p184 = scmp.ne.s32.totalorder %s176, %s178
      %p185 = scmp.eq.s32.totalorder %s21, 3
      %p186 = por %p184, %p185
      %p187 = scmp.ne.s32.totalorder %s178, %s179
      %p188 = scmp.eq.s32.totalorder %s21, 0
      %p189 = por %p187, %p188
      %p190 = scmp.ne.s32.totalorder %s178, %s179
      %p191 = scmp.eq.s32.totalorder %s22, 3
      %p192 = por %p190, %p191
      %p194 = scmp.ne.s32.totalorder %s179, %s193
      %p195 = scmp.eq.s32.totalorder %s22, 0
      %p196 = por %p194, %p195
      %s197 = ssub.s32 %s23, %s35
      %p198 = scmp.eq.s32.totalorder %s197, 0
      %s200 = sadd.s32 %s199, 1
      %s201 = scalar_select %p198, %s199, %s200
      %p204 = pneg %p198
      %p205 = scmp.eq.s32.totalorder %s16, 3
      %p206 = por %p204, %p205
      %p207 = scmp.ne.s32.totalorder %s199, %s202
      %p208 = scmp.eq.s32.totalorder %s16, 0
      %p209 = por %p207, %p208
      %p210 = scmp.ne.s32.totalorder %s199, %s202
      %p211 = scmp.eq.s32.totalorder %s21, 3
      %p212 = por %p210, %p211
      %p213 = scmp.ne.s32.totalorder %s202, %s203
      %p214 = scmp.eq.s32.totalorder %s21, 0
      %p215 = por %p213, %p214
      %p216 = scmp.ne.s32.totalorder %s202, %s203
      %p217 = scmp.eq.s32.totalorder %s22, 3
      %p218 = por %p216, %p217
      %p220 = scmp.ne.s32.totalorder %s203, %s219
      %p221 = scmp.eq.s32.totalorder %s22, 0
      %p222 = por %p220, %p221
      %p223 = scmp.le.s32.totalorder 1, %s16
      %p224 = scmp.lt.s32.totalorder %s16, 5
      %p225 = pnand %p223, %p224
      %p226 = pneg %p225
      // Predicated region
      $region9: #{_domain_classifier_logits_padded.1} parent=5 // pred_check
        _
      $region10: #{_domain_classifier_logits_padded.1} parent=5 // pred_check_branch
        %228 = sbr.rel (%p225) target = $region12
      $region11: #{_domain_classifier_logits_padded.1} parent=5 // pred_region
        %s229 = ssub.s32 %s16, 1
        // Predicated region
        $region13: #{_domain_classifier_logits_padded.1} parent=11 // pred_check
          %p230 = pneg %p105
        $region14: #{_domain_classifier_logits_padded.1} parent=11 // pred_check_branch
          %232 = sbr.rel (%p230) target = $region16
        $region15: #{_domain_classifier_logits_padded.1} parent=11 // pred_region
          _
        $region16: #{_domain_classifier_logits_padded.1} parent=11 // pred_fallthru
          _
        // Predicated region
        $region17: #{_domain_classifier_logits_padded.1} parent=11 // pred_check
          %p233 = pneg %p126
        $region18: #{_domain_classifier_logits_padded.1} parent=11 // pred_check_branch
          %235 = sbr.rel (%p233) target = $region20
        $region19: #{_domain_classifier_logits_padded.1} parent=11 // pred_region
          _
        $region20: #{_domain_classifier_logits_padded.1} parent=11 // pred_fallthru
          _
        // Predicated region
        $region21: #{_domain_classifier_logits_padded.1} parent=11 // pred_check
          %p236 = pneg %p147
        $region22: #{_domain_classifier_logits_padded.1} parent=11 // pred_check_branch
          %238 = sbr.rel (%p236) target = $region24
        $region23: #{_domain_classifier_logits_padded.1} parent=11 // pred_region
          _
        $region24: #{_domain_classifier_logits_padded.1} parent=11 // pred_fallthru
          _
        // Predicated region
        $region25: #{_domain_classifier_logits_padded.1} parent=11 // pred_check
          %p239 = pneg %p168
        $region26: #{_domain_classifier_logits_padded.1} parent=11 // pred_check_branch
          %241 = sbr.rel (%p239) target = $region28
        $region27: #{_domain_classifier_logits_padded.1} parent=11 // pred_region
          _
        $region28: #{_domain_classifier_logits_padded.1} parent=11 // pred_fallthru
          _
        // Predicated region
        $region29: #{_domain_classifier_logits_padded.1} parent=11 // pred_check
          %p242 = pneg %p189
        $region30: #{_domain_classifier_logits_padded.1} parent=11 // pred_check_branch
          %244 = sbr.rel (%p242) target = $region32
        $region31: #{_domain_classifier_logits_padded.1} parent=11 // pred_region
          _
        $region32: #{_domain_classifier_logits_padded.1} parent=11 // pred_fallthru
          _
      $region12: #{_domain_classifier_logits_padded.1} parent=5 // pred_fallthru
        _
      %p245 = scmp.lt.s32.totalorder %s16, 4
      // Predicated region
      $region33: #{_domain_classifier_logits_padded.1} parent=5 // pred_check
        %p246 = pneg %p245
      $region34: #{_domain_classifier_logits_padded.1} parent=5 // pred_check_branch
        %248 = sbr.rel (%p246) target = $region36
      $region35: #{_domain_classifier_logits_padded.1} parent=5 // pred_region
        // Predicated region
        $region37: #{_domain_classifier_logits_padded.1} parent=35 // pred_check
          %p249 = pneg %p50
        $region38: #{_domain_classifier_logits_padded.1} parent=35 // pred_check_branch
          %251 = sbr.rel (%p249) target = $region40
        $region39: #{_domain_classifier_logits_padded.1} parent=35 // pred_region
          %p252 = scmp.lt.s32.totalorder %s23, 1
          %s253 = scalar_select %p252, %s23, 1
          %p254 = scmp.lt.s32.totalorder %s24, 1
          %s255 = scalar_select %p254, %s24, 1
          %s256 = smul.addr %s253, 2
          %s257 = sadd.s32 %s255, %s256
          %s258 = smul.addr %s257, 8
          %s259 = scalar_lea.vmem %s0, %s258
        $region40: #{_domain_classifier_logits_padded.1} parent=35 // pred_fallthru
          _
        // Predicated region
        $region41: #{_domain_classifier_logits_padded.1} parent=35 // pred_check
          %p260 = pneg %p78
        $region42: #{_domain_classifier_logits_padded.1} parent=35 // pred_check_branch
          %262 = sbr.rel (%p260) target = $region44
        $region43: #{_domain_classifier_logits_padded.1} parent=35 // pred_region
          %p263 = scmp.lt.s32.totalorder %s23, 1
          %s264 = scalar_select %p263, %s23, 1
          %p265 = scmp.lt.s32.totalorder %s24, 1
          %s266 = scalar_select %p265, %s24, 1
          %s267 = smul.addr %s264, 2
          %s268 = sadd.s32 %s266, %s267
          %s269 = smul.addr %s268, 8
          %s270 = scalar_lea.vmem %s1, %s269
        $region44: #{_domain_classifier_logits_padded.1} parent=35 // pred_fallthru
          _
      $region36: #{_domain_classifier_logits_padded.1} parent=5 // pred_fallthru
        _
      %p271 = scmp.le.s32.totalorder 1, %s16
      %p272 = scmp.lt.s32.totalorder %s16, 5
      %p273 = pnand %p271, %p272
      %p274 = pneg %p273
      // Predicated region
      $region45: #{_domain_classifier_logits_padded.1} parent=5 // pred_check
        _
      $region46: #{_domain_classifier_logits_padded.1} parent=5 // pred_check_branch
        %276 = sbr.rel (%p273) target = $region48
      $region47: #{_domain_classifier_logits_padded.1} parent=5 // pred_region
        %s277 = ssub.s32 %s16, 1
        %p278 = scmp.lt.s32.totalorder %s25, 1
        %s279 = scalar_select %p278, %s25, 1
        %p280 = scmp.lt.s32.totalorder %s26, 1
        %s281 = scalar_select %p280, %s26, 1
        %s282 = smul.addr %s279, 2
        %s283 = sadd.s32 %s281, %s282
        %s284 = smul.addr %s283, 8
        %s285 = scalar_lea.vmem %s0, %s284
        %p286 = pneg %p56
        %p287 = pneg %p53
        %p288 = scmp.lt.s32.totalorder %s25, 1
        %s289 = scalar_select %p288, %s25, 1
        %p290 = scmp.lt.s32.totalorder %s26, 1
        %s291 = scalar_select %p290, %s26, 1
        %s292 = smul.addr %s289, 2
        %s293 = sadd.s32 %s291, %s292
        %s294 = smul.addr %s293, 8
        %s295 = scalar_lea.vmem %s1, %s294
        %p296 = pneg %p84
        %p297 = pneg %p81
        %p298 = pneg %p105
        %p299 = pneg %p102
        %p300 = pneg %p126
        %p301 = pneg %p123
        %p302 = pneg %p147
        %p303 = pneg %p144
        %p304 = pneg %p168
        %p305 = pneg %p165
        %p306 = pneg %p189
        %p307 = pneg %p186
        %p308 = pneg %p215
        %p309 = pneg %p212
        %s310 = sand.u32 %s202, 1
        %s311 = scalar_lea.sflag [#allocation5], %s310
        %s312 = sand.u32 %s202, 1
        %s313 = smul.addr %s312, 8
        %s314 = scalar_lea.vmem [#allocation4], %s313
        %p315 = scmp.lt.s32.totalorder %s25, 1
        %s316 = scalar_select %p315, %s25, 1
        %p317 = scmp.lt.s32.totalorder %s26, 1
        %s318 = scalar_select %p317, %s26, 1
        %s319 = smul.addr %s316, 2
        %s320 = sadd.s32 %s318, %s319
        %s321 = smul.addr %s320, 8
        %s322 = scalar_lea.vmem %s0, %s321
        %p323 = scmp.lt.s32.totalorder %s25, 1
        %s324 = scalar_select %p323, %s25, 1
        %p325 = scmp.lt.s32.totalorder %s26, 1
        %s326 = scalar_select %p325, %s26, 1
        %s327 = smul.addr %s324, 2
        %s328 = sadd.s32 %s326, %s327
        %s329 = smul.addr %s328, 8
        %s330 = scalar_lea.vmem %s1, %s329
        %p332 = scmp.eq.s32.totalorder %s26, 0
        // Predicated region
        $region49: #{_domain_classifier_logits_padded.1} parent=47 // pred_check
          %p333 = pneg %p332
        $region50: #{_domain_classifier_logits_padded.1} parent=47 // pred_check_branch
          %335 = sbr.rel (%p333) target = $region52
        $region51: #{_domain_classifier_logits_padded.1} parent=47 // pred_region
          %336 = vst [vmem:[#allocation2] sm:$0xff] 0.0
          %vm337 = vcmask 7168
          %338 = vst.msk [vmem:[#allocation3] sm:$0xff] %vm337, 0.0
        $region52: #{_domain_classifier_logits_padded.1} parent=47 // pred_fallthru
          _
        %v339 = vld [vmem:[%s322] sm:$0xff]
        %v340 = vld [vmem:[%s330] sm:$0xff]
        %v341 = vlaneseq
        %v342 = vand.u32 %v341, 127
        %v343 = vadd.s32 %v342, 128
        %v344 = vadd.s32 %v342, 256
        %v345 = vadd.s32 %v342, 384
        %v346 = vlaneseq
        %v347 = vshrl.u32 %v346, 7
        %v348 = vsub.s32 0, %v347
        %v349 = vrot.slane %v339, %v348
        %351 = vbcast.lane.b32.xlu0 %v349, 256
        %v352 = vpop.permute.xlu0 %351
        %s354 = sor.u32 256, 8
        %355 = vbcast.lane.b32.xlu0 %v349, %s354
        %v356 = vpop.permute.xlu0 %355
        %s358 = sor.u32 256, 16
        %359 = vbcast.lane.b32.xlu0 %v349, %s358
        %v360 = vpop.permute.xlu0 %359
        %s362 = sor.u32 256, 24
        %363 = vbcast.lane.b32.xlu0 %v349, %s362
        %v364 = vpop.permute.xlu0 %363
        %s366 = sor.u32 256, 32
        %367 = vbcast.lane.b32.xlu0 %v349, %s366
        %v368 = vpop.permute.xlu0 %367
        %s370 = sor.u32 256, 40
        %371 = vbcast.lane.b32.xlu0 %v349, %s370
        %v372 = vpop.permute.xlu0 %371
        %s374 = sor.u32 256, 48
        %375 = vbcast.lane.b32.xlu0 %v349, %s374
        %v376 = vpop.permute.xlu0 %375
        %s378 = sor.u32 256, 56
        %379 = vbcast.lane.b32.xlu0 %v349, %s378
        %v380 = vpop.permute.xlu0 %379
        %s382 = sor.u32 256, 64
        %383 = vbcast.lane.b32.xlu0 %v349, %s382
        %v384 = vpop.permute.xlu0 %383
        %s386 = sor.u32 256, 72
        %387 = vbcast.lane.b32.xlu0 %v349, %s386
        %v388 = vpop.permute.xlu0 %387
        %s390 = sor.u32 256, 80
        %391 = vbcast.lane.b32.xlu0 %v349, %s390
        %v392 = vpop.permute.xlu0 %391
        %s394 = sor.u32 256, 88
        %395 = vbcast.lane.b32.xlu0 %v349, %s394
        %v396 = vpop.permute.xlu0 %395
        %s398 = sor.u32 256, 96
        %399 = vbcast.lane.b32.xlu0 %v349, %s398
        %v400 = vpop.permute.xlu0 %399
        %s402 = sor.u32 256, 104
        %403 = vbcast.lane.b32.xlu0 %v349, %s402
        %v404 = vpop.permute.xlu0 %403
        %s406 = sor.u32 256, 112
        %407 = vbcast.lane.b32.xlu0 %v349, %s406
        %v408 = vpop.permute.xlu0 %407
        %s410 = sor.u32 256, 120
        %411 = vbcast.lane.b32.xlu0 %v349, %s410
        %v412 = vpop.permute.xlu0 %411
        %v413 = vlaneseq
        %v414 = vshrl.u32 %v413, 7
        %v415 = vsub.s32 1, %v414
        %v416 = vrot.slane %v339, %v415
        %418 = vbcast.lane.b32.xlu0 %v416, 256
        %v419 = vpop.permute.xlu0 %418
        %s421 = sor.u32 256, 8
        %422 = vbcast.lane.b32.xlu0 %v416, %s421
        %v423 = vpop.permute.xlu0 %422
        %s425 = sor.u32 256, 16
        %426 = vbcast.lane.b32.xlu0 %v416, %s425
        %v427 = vpop.permute.xlu0 %426
        %s429 = sor.u32 256, 24
        %430 = vbcast.lane.b32.xlu0 %v416, %s429
        %v431 = vpop.permute.xlu0 %430
        %s433 = sor.u32 256, 32
        %434 = vbcast.lane.b32.xlu0 %v416, %s433
        %v435 = vpop.permute.xlu0 %434
        %s437 = sor.u32 256, 40
        %438 = vbcast.lane.b32.xlu0 %v416, %s437
        %v439 = vpop.permute.xlu0 %438
        %s441 = sor.u32 256, 48
        %442 = vbcast.lane.b32.xlu0 %v416, %s441
        %v443 = vpop.permute.xlu0 %442
        %s445 = sor.u32 256, 56
        %446 = vbcast.lane.b32.xlu0 %v416, %s445
        %v447 = vpop.permute.xlu0 %446
        %s449 = sor.u32 256, 64
        %450 = vbcast.lane.b32.xlu0 %v416, %s449
        %v451 = vpop.permute.xlu0 %450
        %s453 = sor.u32 256, 72
        %454 = vbcast.lane.b32.xlu0 %v416, %s453
        %v455 = vpop.permute.xlu0 %454
        %s457 = sor.u32 256, 80
        %458 = vbcast.lane.b32.xlu0 %v416, %s457
        %v459 = vpop.permute.xlu0 %458
        %s461 = sor.u32 256, 88
        %462 = vbcast.lane.b32.xlu0 %v416, %s461
        %v463 = vpop.permute.xlu0 %462
        %s465 = sor.u32 256, 96
        %466 = vbcast.lane.b32.xlu0 %v416, %s465
        %v467 = vpop.permute.xlu0 %466
        %s469 = sor.u32 256, 104
        %470 = vbcast.lane.b32.xlu0 %v416, %s469
        %v471 = vpop.permute.xlu0 %470
        %s473 = sor.u32 256, 112
        %474 = vbcast.lane.b32.xlu0 %v416, %s473
        %v475 = vpop.permute.xlu0 %474
        %s477 = sor.u32 256, 120
        %478 = vbcast.lane.b32.xlu0 %v416, %s477
        %v479 = vpop.permute.xlu0 %478
        %v480 = vlaneseq
        %v481 = vshrl.u32 %v480, 7
        %v482 = vsub.s32 2, %v481
        %v483 = vrot.slane %v339, %v482
        %485 = vbcast.lane.b32.xlu0 %v483, 256
        %v486 = vpop.permute.xlu0 %485
        %s488 = sor.u32 256, 8
        %489 = vbcast.lane.b32.xlu0 %v483, %s488
        %v490 = vpop.permute.xlu0 %489
        %s492 = sor.u32 256, 16
        %493 = vbcast.lane.b32.xlu0 %v483, %s492
        %v494 = vpop.permute.xlu0 %493
        %s496 = sor.u32 256, 24
        %497 = vbcast.lane.b32.xlu0 %v483, %s496
        %v498 = vpop.permute.xlu0 %497
        %s500 = sor.u32 256, 32
        %501 = vbcast.lane.b32.xlu0 %v483, %s500
        %v502 = vpop.permute.xlu0 %501
        %s504 = sor.u32 256, 40
        %505 = vbcast.lane.b32.xlu0 %v483, %s504
        %v506 = vpop.permute.xlu0 %505
        %s508 = sor.u32 256, 48
        %509 = vbcast.lane.b32.xlu0 %v483, %s508
        %v510 = vpop.permute.xlu0 %509
        %s512 = sor.u32 256, 56
        %513 = vbcast.lane.b32.xlu0 %v483, %s512
        %v514 = vpop.permute.xlu0 %513
        %s516 = sor.u32 256, 64
        %517 = vbcast.lane.b32.xlu0 %v483, %s516
        %v518 = vpop.permute.xlu0 %517
        %s520 = sor.u32 256, 72
        %521 = vbcast.lane.b32.xlu0 %v483, %s520
        %v522 = vpop.permute.xlu0 %521
        %s524 = sor.u32 256, 80
        %525 = vbcast.lane.b32.xlu0 %v483, %s524
        %v526 = vpop.permute.xlu0 %525
        %s528 = sor.u32 256, 88
        %529 = vbcast.lane.b32.xlu0 %v483, %s528
        %v530 = vpop.permute.xlu0 %529
        %s532 = sor.u32 256, 96
        %533 = vbcast.lane.b32.xlu0 %v483, %s532
        %v534 = vpop.permute.xlu0 %533
        %s536 = sor.u32 256, 104
        %537 = vbcast.lane.b32.xlu0 %v483, %s536
        %v538 = vpop.permute.xlu0 %537
        %s540 = sor.u32 256, 112
        %541 = vbcast.lane.b32.xlu0 %v483, %s540
        %v542 = vpop.permute.xlu0 %541
        %s544 = sor.u32 256, 120
        %545 = vbcast.lane.b32.xlu0 %v483, %s544
        %v546 = vpop.permute.xlu0 %545
        %v547 = vlaneseq
        %v548 = vshrl.u32 %v547, 7
        %v549 = vsub.s32 3, %v548
        %v550 = vrot.slane %v339, %v549
        %552 = vbcast.lane.b32.xlu0 %v550, 256
        %v553 = vpop.permute.xlu0 %552
        %s555 = sor.u32 256, 8
        %556 = vbcast.lane.b32.xlu0 %v550, %s555
        %v557 = vpop.permute.xlu0 %556
        %s559 = sor.u32 256, 16
        %560 = vbcast.lane.b32.xlu0 %v550, %s559
        %v561 = vpop.permute.xlu0 %560
        %s563 = sor.u32 256, 24
        %564 = vbcast.lane.b32.xlu0 %v550, %s563
        %v565 = vpop.permute.xlu0 %564
        %s567 = sor.u32 256, 32
        %568 = vbcast.lane.b32.xlu0 %v550, %s567
        %v569 = vpop.permute.xlu0 %568
        %s571 = sor.u32 256, 40
        %572 = vbcast.lane.b32.xlu0 %v550, %s571
        %v573 = vpop.permute.xlu0 %572
        %s575 = sor.u32 256, 48
        %576 = vbcast.lane.b32.xlu0 %v550, %s575
        %v577 = vpop.permute.xlu0 %576
        %s579 = sor.u32 256, 56
        %580 = vbcast.lane.b32.xlu0 %v550, %s579
        %v581 = vpop.permute.xlu0 %580
        %s583 = sor.u32 256, 64
        %584 = vbcast.lane.b32.xlu0 %v550, %s583
        %v585 = vpop.permute.xlu0 %584
        %s587 = sor.u32 256, 72
        %588 = vbcast.lane.b32.xlu0 %v550, %s587
        %v589 = vpop.permute.xlu0 %588
        %s591 = sor.u32 256, 80
        %592 = vbcast.lane.b32.xlu0 %v550, %s591
        %v593 = vpop.permute.xlu0 %592
        %s595 = sor.u32 256, 88
        %596 = vbcast.lane.b32.xlu0 %v550, %s595
        %v597 = vpop.permute.xlu0 %596
        %s599 = sor.u32 256, 96
        %600 = vbcast.lane.b32.xlu0 %v550, %s599
        %v601 = vpop.permute.xlu0 %600
        %s603 = sor.u32 256, 104
        %604 = vbcast.lane.b32.xlu0 %v550, %s603
        %v605 = vpop.permute.xlu0 %604
        %s607 = sor.u32 256, 112
        %608 = vbcast.lane.b32.xlu0 %v550, %s607
        %v609 = vpop.permute.xlu0 %608
        %s611 = sor.u32 256, 120
        %612 = vbcast.lane.b32.xlu0 %v550, %s611
        %v613 = vpop.permute.xlu0 %612
        %v614 = vlaneseq
        %v615 = vshrl.u32 %v614, 7
        %v616 = vsub.s32 4, %v615
        %v617 = vrot.slane %v339, %v616
        %619 = vbcast.lane.b32.xlu0 %v617, 256
        %v620 = vpop.permute.xlu0 %619
        %s622 = sor.u32 256, 8
        %623 = vbcast.lane.b32.xlu0 %v617, %s622
        %v624 = vpop.permute.xlu0 %623
        %s626 = sor.u32 256, 16
        %627 = vbcast.lane.b32.xlu0 %v617, %s626
        %v628 = vpop.permute.xlu0 %627
        %s630 = sor.u32 256, 24
        %631 = vbcast.lane.b32.xlu0 %v617, %s630
        %v632 = vpop.permute.xlu0 %631
        %s634 = sor.u32 256, 32
        %635 = vbcast.lane.b32.xlu0 %v617, %s634
        %v636 = vpop.permute.xlu0 %635
        %s638 = sor.u32 256, 40
        %639 = vbcast.lane.b32.xlu0 %v617, %s638
        %v640 = vpop.permute.xlu0 %639
        %s642 = sor.u32 256, 48
        %643 = vbcast.lane.b32.xlu0 %v617, %s642
        %v644 = vpop.permute.xlu0 %643
        %s646 = sor.u32 256, 56
        %647 = vbcast.lane.b32.xlu0 %v617, %s646
        %v648 = vpop.permute.xlu0 %647
        %s650 = sor.u32 256, 64
        %651 = vbcast.lane.b32.xlu0 %v617, %s650
        %v652 = vpop.permute.xlu0 %651
        %s654 = sor.u32 256, 72
        %655 = vbcast.lane.b32.xlu0 %v617, %s654
        %v656 = vpop.permute.xlu0 %655
        %s658 = sor.u32 256, 80
        %659 = vbcast.lane.b32.xlu0 %v617, %s658
        %v660 = vpop.permute.xlu0 %659
        %s662 = sor.u32 256, 88
        %663 = vbcast.lane.b32.xlu0 %v617, %s662
        %v664 = vpop.permute.xlu0 %663
        %s666 = sor.u32 256, 96
        %667 = vbcast.lane.b32.xlu0 %v617, %s666
        %v668 = vpop.permute.xlu0 %667
        %s670 = sor.u32 256, 104
        %671 = vbcast.lane.b32.xlu0 %v617, %s670
        %v672 = vpop.permute.xlu0 %671
        %s674 = sor.u32 256, 112
        %675 = vbcast.lane.b32.xlu0 %v617, %s674
        %v676 = vpop.permute.xlu0 %675
        %s678 = sor.u32 256, 120
        %679 = vbcast.lane.b32.xlu0 %v617, %s678
        %v680 = vpop.permute.xlu0 %679
        %v681 = vlaneseq
        %v682 = vshrl.u32 %v681, 7
        %v683 = vsub.s32 5, %v682
        %v684 = vrot.slane %v339, %v683
        %686 = vbcast.lane.b32.xlu0 %v684, 256
        %v687 = vpop.permute.xlu0 %686
        %s689 = sor.u32 256, 8
        %690 = vbcast.lane.b32.xlu0 %v684, %s689
        %v691 = vpop.permute.xlu0 %690
        %s693 = sor.u32 256, 16
        %694 = vbcast.lane.b32.xlu0 %v684, %s693
        %v695 = vpop.permute.xlu0 %694
        %s697 = sor.u32 256, 24
        %698 = vbcast.lane.b32.xlu0 %v684, %s697
        %v699 = vpop.permute.xlu0 %698
        %s701 = sor.u32 256, 32
        %702 = vbcast.lane.b32.xlu0 %v684, %s701
        %v703 = vpop.permute.xlu0 %702
        %s705 = sor.u32 256, 40
        %706 = vbcast.lane.b32.xlu0 %v684, %s705
        %v707 = vpop.permute.xlu0 %706
        %s709 = sor.u32 256, 48
        %710 = vbcast.lane.b32.xlu0 %v684, %s709
        %v711 = vpop.permute.xlu0 %710
        %s713 = sor.u32 256, 56
        %714 = vbcast.lane.b32.xlu0 %v684, %s713
        %v715 = vpop.permute.xlu0 %714
        %s717 = sor.u32 256, 64
        %718 = vbcast.lane.b32.xlu0 %v684, %s717
        %v719 = vpop.permute.xlu0 %718
        %s721 = sor.u32 256, 72
        %722 = vbcast.lane.b32.xlu0 %v684, %s721
        %v723 = vpop.permute.xlu0 %722
        %s725 = sor.u32 256, 80
        %726 = vbcast.lane.b32.xlu0 %v684, %s725
        %v727 = vpop.permute.xlu0 %726
        %s729 = sor.u32 256, 88
        %730 = vbcast.lane.b32.xlu0 %v684, %s729
        %v731 = vpop.permute.xlu0 %730
        %s733 = sor.u32 256, 96
        %734 = vbcast.lane.b32.xlu0 %v684, %s733
        %v735 = vpop.permute.xlu0 %734
        %s737 = sor.u32 256, 104
        %738 = vbcast.lane.b32.xlu0 %v684, %s737
        %v739 = vpop.permute.xlu0 %738
        %s741 = sor.u32 256, 112
        %742 = vbcast.lane.b32.xlu0 %v684, %s741
        %v743 = vpop.permute.xlu0 %742
        %s745 = sor.u32 256, 120
        %746 = vbcast.lane.b32.xlu0 %v684, %s745
        %v747 = vpop.permute.xlu0 %746
        %v748 = vlaneseq
        %v749 = vshrl.u32 %v748, 7
        %v750 = vsub.s32 6, %v749
        %v751 = vrot.slane %v339, %v750
        %753 = vbcast.lane.b32.xlu0 %v751, 256
        %v754 = vpop.permute.xlu0 %753
        %s756 = sor.u32 256, 8
        %757 = vbcast.lane.b32.xlu0 %v751, %s756
        %v758 = vpop.permute.xlu0 %757
        %s760 = sor.u32 256, 16
        %761 = vbcast.lane.b32.xlu0 %v751, %s760
        %v762 = vpop.permute.xlu0 %761
        %s764 = sor.u32 256, 24
        %765 = vbcast.lane.b32.xlu0 %v751, %s764
        %v766 = vpop.permute.xlu0 %765
        %s768 = sor.u32 256, 32
        %769 = vbcast.lane.b32.xlu0 %v751, %s768
        %v770 = vpop.permute.xlu0 %769
        %s772 = sor.u32 256, 40
        %773 = vbcast.lane.b32.xlu0 %v751, %s772
        %v774 = vpop.permute.xlu0 %773
        %s776 = sor.u32 256, 48
        %777 = vbcast.lane.b32.xlu0 %v751, %s776
        %v778 = vpop.permute.xlu0 %777
        %s780 = sor.u32 256, 56
        %781 = vbcast.lane.b32.xlu0 %v751, %s780
        %v782 = vpop.permute.xlu0 %781
        %s784 = sor.u32 256, 64
        %785 = vbcast.lane.b32.xlu0 %v751, %s784
        %v786 = vpop.permute.xlu0 %785
        %s788 = sor.u32 256, 72
        %789 = vbcast.lane.b32.xlu0 %v751, %s788
        %v790 = vpop.permute.xlu0 %789
        %s792 = sor.u32 256, 80
        %793 = vbcast.lane.b32.xlu0 %v751, %s792
        %v794 = vpop.permute.xlu0 %793
        %s796 = sor.u32 256, 88
        %797 = vbcast.lane.b32.xlu0 %v751, %s796
        %v798 = vpop.permute.xlu0 %797
        %s800 = sor.u32 256, 96
        %801 = vbcast.lane.b32.xlu0 %v751, %s800
        %v802 = vpop.permute.xlu0 %801
        %s804 = sor.u32 256, 104
        %805 = vbcast.lane.b32.xlu0 %v751, %s804
        %v806 = vpop.permute.xlu0 %805
        %s808 = sor.u32 256, 112
        %809 = vbcast.lane.b32.xlu0 %v751, %s808
        %v810 = vpop.permute.xlu0 %809
        %s812 = sor.u32 256, 120
        %813 = vbcast.lane.b32.xlu0 %v751, %s812
        %v814 = vpop.permute.xlu0 %813
        %v815 = vlaneseq
        %v816 = vshrl.u32 %v815, 7
        %v817 = vsub.s32 7, %v816
        %v818 = vrot.slane %v339, %v817
        %820 = vbcast.lane.b32.xlu0 %v818, 256
        %v821 = vpop.permute.xlu0 %820
        %s823 = sor.u32 256, 8
        %824 = vbcast.lane.b32.xlu0 %v818, %s823
        %v825 = vpop.permute.xlu0 %824
        %s827 = sor.u32 256, 16
        %828 = vbcast.lane.b32.xlu0 %v818, %s827
        %v829 = vpop.permute.xlu0 %828
        %s831 = sor.u32 256, 24
        %832 = vbcast.lane.b32.xlu0 %v818, %s831
        %v833 = vpop.permute.xlu0 %832
        %s835 = sor.u32 256, 32
        %836 = vbcast.lane.b32.xlu0 %v818, %s835
        %v837 = vpop.permute.xlu0 %836
        %s839 = sor.u32 256, 40
        %840 = vbcast.lane.b32.xlu0 %v818, %s839
        %v841 = vpop.permute.xlu0 %840
        %s843 = sor.u32 256, 48
        %844 = vbcast.lane.b32.xlu0 %v818, %s843
        %v845 = vpop.permute.xlu0 %844
        %s847 = sor.u32 256, 56
        %848 = vbcast.lane.b32.xlu0 %v818, %s847
        %v849 = vpop.permute.xlu0 %848
        %s851 = sor.u32 256, 64
        %852 = vbcast.lane.b32.xlu0 %v818, %s851
        %v853 = vpop.permute.xlu0 %852
        %s855 = sor.u32 256, 72
        %856 = vbcast.lane.b32.xlu0 %v818, %s855
        %v857 = vpop.permute.xlu0 %856
        %s859 = sor.u32 256, 80
        %860 = vbcast.lane.b32.xlu0 %v818, %s859
        %v861 = vpop.permute.xlu0 %860
        %s863 = sor.u32 256, 88
        %864 = vbcast.lane.b32.xlu0 %v818, %s863
        %v865 = vpop.permute.xlu0 %864
        %s867 = sor.u32 256, 96
        %868 = vbcast.lane.b32.xlu0 %v818, %s867
        %v869 = vpop.permute.xlu0 %868
        %s871 = sor.u32 256, 104
        %872 = vbcast.lane.b32.xlu0 %v818, %s871
        %v873 = vpop.permute.xlu0 %872
        %s875 = sor.u32 256, 112
        %876 = vbcast.lane.b32.xlu0 %v818, %s875
        %v877 = vpop.permute.xlu0 %876
        %s879 = sor.u32 256, 120
        %880 = vbcast.lane.b32.xlu0 %v818, %s879
        %v881 = vpop.permute.xlu0 %880
        %vm882 = vcmp.eq.s32.totalorder %v352, %v342
        %vm883 = vcmp.eq.s32.totalorder %v352, %v343
        %vm884 = vcmp.eq.s32.totalorder %v352, %v344
        %vm885 = vcmp.eq.s32.totalorder %v352, %v345
        %vm886 = vcmp.eq.s32.totalorder %v356, %v342
        %vm887 = vcmp.eq.s32.totalorder %v356, %v343
        %vm888 = vcmp.eq.s32.totalorder %v356, %v344
        %vm889 = vcmp.eq.s32.totalorder %v356, %v345
        %vm890 = vcmp.eq.s32.totalorder %v360, %v342
        %vm891 = vcmp.eq.s32.totalorder %v360, %v343
        %vm892 = vcmp.eq.s32.totalorder %v360, %v344
        %vm893 = vcmp.eq.s32.totalorder %v360, %v345
        %vm894 = vcmp.eq.s32.totalorder %v364, %v342
        %vm895 = vcmp.eq.s32.totalorder %v364, %v343
        %vm896 = vcmp.eq.s32.totalorder %v364, %v344
        %vm897 = vcmp.eq.s32.totalorder %v364, %v345
        %vm898 = vcmp.eq.s32.totalorder %v368, %v342
        %vm899 = vcmp.eq.s32.totalorder %v368, %v343
        %vm900 = vcmp.eq.s32.totalorder %v368, %v344
        %vm901 = vcmp.eq.s32.totalorder %v368, %v345
        %vm902 = vcmp.eq.s32.totalorder %v372, %v342
        %vm903 = vcmp.eq.s32.totalorder %v372, %v343
        %vm904 = vcmp.eq.s32.totalorder %v372, %v344
        %vm905 = vcmp.eq.s32.totalorder %v372, %v345
        %vm906 = vcmp.eq.s32.totalorder %v376, %v342
        %vm907 = vcmp.eq.s32.totalorder %v376, %v343
        %vm908 = vcmp.eq.s32.totalorder %v376, %v344
        %vm909 = vcmp.eq.s32.totalorder %v376, %v345
        %vm910 = vcmp.eq.s32.totalorder %v380, %v342
        %vm911 = vcmp.eq.s32.totalorder %v380, %v343
        %vm912 = vcmp.eq.s32.totalorder %v380, %v344
        %vm913 = vcmp.eq.s32.totalorder %v380, %v345
        %vm914 = vcmp.eq.s32.totalorder %v384, %v342
        %vm915 = vcmp.eq.s32.totalorder %v384, %v343
        %vm916 = vcmp.eq.s32.totalorder %v384, %v344
        %vm917 = vcmp.eq.s32.totalorder %v384, %v345
        %vm918 = vcmp.eq.s32.totalorder %v388, %v342
        %vm919 = vcmp.eq.s32.totalorder %v388, %v343
        %vm920 = vcmp.eq.s32.totalorder %v388, %v344
        %vm921 = vcmp.eq.s32.totalorder %v388, %v345
        %vm922 = vcmp.eq.s32.totalorder %v392, %v342
        %vm923 = vcmp.eq.s32.totalorder %v392, %v343
        %vm924 = vcmp.eq.s32.totalorder %v392, %v344
        %vm925 = vcmp.eq.s32.totalorder %v392, %v345
        %vm926 = vcmp.eq.s32.totalorder %v396, %v342
        %vm927 = vcmp.eq.s32.totalorder %v396, %v343
        %vm928 = vcmp.eq.s32.totalorder %v396, %v344
        %vm929 = vcmp.eq.s32.totalorder %v396, %v345
        %vm930 = vcmp.eq.s32.totalorder %v400, %v342
        %vm931 = vcmp.eq.s32.totalorder %v400, %v343
        %vm932 = vcmp.eq.s32.totalorder %v400, %v344
        %vm933 = vcmp.eq.s32.totalorder %v400, %v345
        %vm934 = vcmp.eq.s32.totalorder %v404, %v342
        %vm935 = vcmp.eq.s32.totalorder %v404, %v343
        %vm936 = vcmp.eq.s32.totalorder %v404, %v344
        %vm937 = vcmp.eq.s32.totalorder %v404, %v345
        %vm938 = vcmp.eq.s32.totalorder %v408, %v342
        %vm939 = vcmp.eq.s32.totalorder %v408, %v343
        %vm940 = vcmp.eq.s32.totalorder %v408, %v344
        %vm941 = vcmp.eq.s32.totalorder %v408, %v345
        %vm942 = vcmp.eq.s32.totalorder %v412, %v342
        %vm943 = vcmp.eq.s32.totalorder %v412, %v343
        %vm944 = vcmp.eq.s32.totalorder %v412, %v344
        %vm945 = vcmp.eq.s32.totalorder %v412, %v345
        %vm946 = vcmp.eq.s32.totalorder %v419, %v342
        %vm947 = vcmp.eq.s32.totalorder %v419, %v343
        %vm948 = vcmp.eq.s32.totalorder %v419, %v344
        %vm949 = vcmp.eq.s32.totalorder %v419, %v345
        %vm950 = vcmp.eq.s32.totalorder %v423, %v342
        %vm951 = vcmp.eq.s32.totalorder %v423, %v343
        %vm952 = vcmp.eq.s32.totalorder %v423, %v344
        %vm953 = vcmp.eq.s32.totalorder %v423, %v345
        %vm954 = vcmp.eq.s32.totalorder %v427, %v342
        %vm955 = vcmp.eq.s32.totalorder %v427, %v343
        %vm956 = vcmp.eq.s32.totalorder %v427, %v344
        %vm957 = vcmp.eq.s32.totalorder %v427, %v345
        %vm958 = vcmp.eq.s32.totalorder %v431, %v342
        %vm959 = vcmp.eq.s32.totalorder %v431, %v343
        %vm960 = vcmp.eq.s32.totalorder %v431, %v344
        %vm961 = vcmp.eq.s32.totalorder %v431, %v345
        %vm962 = vcmp.eq.s32.totalorder %v435, %v342
        %vm963 = vcmp.eq.s32.totalorder %v435, %v343
        %vm964 = vcmp.eq.s32.totalorder %v435, %v344
        %vm965 = vcmp.eq.s32.totalorder %v435, %v345
        %vm966 = vcmp.eq.s32.totalorder %v439, %v342
        %vm967 = vcmp.eq.s32.totalorder %v439, %v343
        %vm968 = vcmp.eq.s32.totalorder %v439, %v344
        %vm969 = vcmp.eq.s32.totalorder %v439, %v345
        %vm970 = vcmp.eq.s32.totalorder %v443, %v342
        %vm971 = vcmp.eq.s32.totalorder %v443, %v343
        %vm972 = vcmp.eq.s32.totalorder %v443, %v344
        %vm973 = vcmp.eq.s32.totalorder %v443, %v345
        %vm974 = vcmp.eq.s32.totalorder %v447, %v342
        %vm975 = vcmp.eq.s32.totalorder %v447, %v343
        %vm976 = vcmp.eq.s32.totalorder %v447, %v344
        %vm977 = vcmp.eq.s32.totalorder %v447, %v345
        %vm978 = vcmp.eq.s32.totalorder %v451, %v342
        %vm979 = vcmp.eq.s32.totalorder %v451, %v343
        %vm980 = vcmp.eq.s32.totalorder %v451, %v344
        %vm981 = vcmp.eq.s32.totalorder %v451, %v345
        %vm982 = vcmp.eq.s32.totalorder %v455, %v342
        %vm983 = vcmp.eq.s32.totalorder %v455, %v343
        %vm984 = vcmp.eq.s32.totalorder %v455, %v344
        %vm985 = vcmp.eq.s32.totalorder %v455, %v345
        %vm986 = vcmp.eq.s32.totalorder %v459, %v342
        %vm987 = vcmp.eq.s32.totalorder %v459, %v343
        %vm988 = vcmp.eq.s32.totalorder %v459, %v344
        %vm989 = vcmp.eq.s32.totalorder %v459, %v345
        %vm990 = vcmp.eq.s32.totalorder %v463, %v342
        %vm991 = vcmp.eq.s32.totalorder %v463, %v343
        %vm992 = vcmp.eq.s32.totalorder %v463, %v344
        %vm993 = vcmp.eq.s32.totalorder %v463, %v345
        %vm994 = vcmp.eq.s32.totalorder %v467, %v342
        %vm995 = vcmp.eq.s32.totalorder %v467, %v343
        %vm996 = vcmp.eq.s32.totalorder %v467, %v344
        %vm997 = vcmp.eq.s32.totalorder %v467, %v345
        %vm998 = vcmp.eq.s32.totalorder %v471, %v342
        %vm999 = vcmp.eq.s32.totalorder %v471, %v343
        %vm1000 = vcmp.eq.s32.totalorder %v471, %v344
        %vm1001 = vcmp.eq.s32.totalorder %v471, %v345
        %vm1002 = vcmp.eq.s32.totalorder %v475, %v342
        %vm1003 = vcmp.eq.s32.totalorder %v475, %v343
        %vm1004 = vcmp.eq.s32.totalorder %v475, %v344
        %vm1005 = vcmp.eq.s32.totalorder %v475, %v345
        %vm1006 = vcmp.eq.s32.totalorder %v479, %v342
        %vm1007 = vcmp.eq.s32.totalorder %v479, %v343
        %vm1008 = vcmp.eq.s32.totalorder %v479, %v344
        %vm1009 = vcmp.eq.s32.totalorder %v479, %v345
        %vm1010 = vcmp.eq.s32.totalorder %v486, %v342
        %vm1011 = vcmp.eq.s32.totalorder %v486, %v343
        %vm1012 = vcmp.eq.s32.totalorder %v486, %v344
        %vm1013 = vcmp.eq.s32.totalorder %v486, %v345
        %vm1014 = vcmp.eq.s32.totalorder %v490, %v342
        %vm1015 = vcmp.eq.s32.totalorder %v490, %v343
        %vm1016 = vcmp.eq.s32.totalorder %v490, %v344
        %vm1017 = vcmp.eq.s32.totalorder %v490, %v345
        %vm1018 = vcmp.eq.s32.totalorder %v494, %v342
        %vm1019 = vcmp.eq.s32.totalorder %v494, %v343
        %vm1020 = vcmp.eq.s32.totalorder %v494, %v344
        %vm1021 = vcmp.eq.s32.totalorder %v494, %v345
        %vm1022 = vcmp.eq.s32.totalorder %v498, %v342
        %vm1023 = vcmp.eq.s32.totalorder %v498, %v343
        %vm1024 = vcmp.eq.s32.totalorder %v498, %v344
        %vm1025 = vcmp.eq.s32.totalorder %v498, %v345
        %vm1026 = vcmp.eq.s32.totalorder %v502, %v342
        %vm1027 = vcmp.eq.s32.totalorder %v502, %v343
        %vm1028 = vcmp.eq.s32.totalorder %v502, %v344
        %vm1029 = vcmp.eq.s32.totalorder %v502, %v345
        %vm1030 = vcmp.eq.s32.totalorder %v506, %v342
        %vm1031 = vcmp.eq.s32.totalorder %v506, %v343
        %vm1032 = vcmp.eq.s32.totalorder %v506, %v344
        %vm1033 = vcmp.eq.s32.totalorder %v506, %v345
        %vm1034 = vcmp.eq.s32.totalorder %v510, %v342
        %vm1035 = vcmp.eq.s32.totalorder %v510, %v343
        %vm1036 = vcmp.eq.s32.totalorder %v510, %v344
        %vm1037 = vcmp.eq.s32.totalorder %v510, %v345
        %vm1038 = vcmp.eq.s32.totalorder %v514, %v342
        %vm1039 = vcmp.eq.s32.totalorder %v514, %v343
        %vm1040 = vcmp.eq.s32.totalorder %v514, %v344
        %vm1041 = vcmp.eq.s32.totalorder %v514, %v345
        %vm1042 = vcmp.eq.s32.totalorder %v518, %v342
        %vm1043 = vcmp.eq.s32.totalorder %v518, %v343
        %vm1044 = vcmp.eq.s32.totalorder %v518, %v344
        %vm1045 = vcmp.eq.s32.totalorder %v518, %v345
        %vm1046 = vcmp.eq.s32.totalorder %v522, %v342
        %vm1047 = vcmp.eq.s32.totalorder %v522, %v343
        %vm1048 = vcmp.eq.s32.totalorder %v522, %v344
        %vm1049 = vcmp.eq.s32.totalorder %v522, %v345
        %vm1050 = vcmp.eq.s32.totalorder %v526, %v342
        %vm1051 = vcmp.eq.s32.totalorder %v526, %v343
        %vm1052 = vcmp.eq.s32.totalorder %v526, %v344
        %vm1053 = vcmp.eq.s32.totalorder %v526, %v345
        %vm1054 = vcmp.eq.s32.totalorder %v530, %v342
        %vm1055 = vcmp.eq.s32.totalorder %v530, %v343
        %vm1056 = vcmp.eq.s32.totalorder %v530, %v344
        %vm1057 = vcmp.eq.s32.totalorder %v530, %v345
        %vm1058 = vcmp.eq.s32.totalorder %v534, %v342
        %vm1059 = vcmp.eq.s32.totalorder %v534, %v343
        %vm1060 = vcmp.eq.s32.totalorder %v534, %v344
        %vm1061 = vcmp.eq.s32.totalorder %v534, %v345
        %vm1062 = vcmp.eq.s32.totalorder %v538, %v342
        %vm1063 = vcmp.eq.s32.totalorder %v538, %v343
        %vm1064 = vcmp.eq.s32.totalorder %v538, %v344
        %vm1065 = vcmp.eq.s32.totalorder %v538, %v345
        %vm1066 = vcmp.eq.s32.totalorder %v542, %v342
        %vm1067 = vcmp.eq.s32.totalorder %v542, %v343
        %vm1068 = vcmp.eq.s32.totalorder %v542, %v344
        %vm1069 = vcmp.eq.s32.totalorder %v542, %v345
        %vm1070 = vcmp.eq.s32.totalorder %v546, %v342
        %vm1071 = vcmp.eq.s32.totalorder %v546, %v343
        %vm1072 = vcmp.eq.s32.totalorder %v546, %v344
        %vm1073 = vcmp.eq.s32.totalorder %v546, %v345
        %vm1074 = vcmp.eq.s32.totalorder %v553, %v342
        %vm1075 = vcmp.eq.s32.totalorder %v553, %v343
        %vm1076 = vcmp.eq.s32.totalorder %v553, %v344
        %vm1077 = vcmp.eq.s32.totalorder %v553, %v345
        %vm1078 = vcmp.eq.s32.totalorder %v557, %v342
        %vm1079 = vcmp.eq.s32.totalorder %v557, %v343
        %vm1080 = vcmp.eq.s32.totalorder %v557, %v344
        %vm1081 = vcmp.eq.s32.totalorder %v557, %v345
        %vm1082 = vcmp.eq.s32.totalorder %v561, %v342
        %vm1083 = vcmp.eq.s32.totalorder %v561, %v343
        %vm1084 = vcmp.eq.s32.totalorder %v561, %v344
        %vm1085 = vcmp.eq.s32.totalorder %v561, %v345
        %vm1086 = vcmp.eq.s32.totalorder %v565, %v342
        %vm1087 = vcmp.eq.s32.totalorder %v565, %v343
        %vm1088 = vcmp.eq.s32.totalorder %v565, %v344
        %vm1089 = vcmp.eq.s32.totalorder %v565, %v345
        %vm1090 = vcmp.eq.s32.totalorder %v569, %v342
        %vm1091 = vcmp.eq.s32.totalorder %v569, %v343
        %vm1092 = vcmp.eq.s32.totalorder %v569, %v344
        %vm1093 = vcmp.eq.s32.totalorder %v569, %v345
        %vm1094 = vcmp.eq.s32.totalorder %v573, %v342
        %vm1095 = vcmp.eq.s32.totalorder %v573, %v343
        %vm1096 = vcmp.eq.s32.totalorder %v573, %v344
        %vm1097 = vcmp.eq.s32.totalorder %v573, %v345
        %vm1098 = vcmp.eq.s32.totalorder %v577, %v342
        %vm1099 = vcmp.eq.s32.totalorder %v577, %v343
        %vm1100 = vcmp.eq.s32.totalorder %v577, %v344
        %vm1101 = vcmp.eq.s32.totalorder %v577, %v345
        %vm1102 = vcmp.eq.s32.totalorder %v581, %v342
        %vm1103 = vcmp.eq.s32.totalorder %v581, %v343
        %vm1104 = vcmp.eq.s32.totalorder %v581, %v344
        %vm1105 = vcmp.eq.s32.totalorder %v581, %v345
        %vm1106 = vcmp.eq.s32.totalorder %v585, %v342
        %vm1107 = vcmp.eq.s32.totalorder %v585, %v343
        %vm1108 = vcmp.eq.s32.totalorder %v585, %v344
        %vm1109 = vcmp.eq.s32.totalorder %v585, %v345
        %vm1110 = vcmp.eq.s32.totalorder %v589, %v342
        %vm1111 = vcmp.eq.s32.totalorder %v589, %v343
        %vm1112 = vcmp.eq.s32.totalorder %v589, %v344
        %vm1113 = vcmp.eq.s32.totalorder %v589, %v345
        %vm1114 = vcmp.eq.s32.totalorder %v593, %v342
        %vm1115 = vcmp.eq.s32.totalorder %v593, %v343
        %vm1116 = vcmp.eq.s32.totalorder %v593, %v344
        %vm1117 = vcmp.eq.s32.totalorder %v593, %v345
        %vm1118 = vcmp.eq.s32.totalorder %v597, %v342
        %vm1119 = vcmp.eq.s32.totalorder %v597, %v343
        %vm1120 = vcmp.eq.s32.totalorder %v597, %v344
        %vm1121 = vcmp.eq.s32.totalorder %v597, %v345
        %vm1122 = vcmp.eq.s32.totalorder %v601, %v342
        %vm1123 = vcmp.eq.s32.totalorder %v601, %v343
        %vm1124 = vcmp.eq.s32.totalorder %v601, %v344
        %vm1125 = vcmp.eq.s32.totalorder %v601, %v345
        %vm1126 = vcmp.eq.s32.totalorder %v605, %v342
        %vm1127 = vcmp.eq.s32.totalorder %v605, %v343
        %vm1128 = vcmp.eq.s32.totalorder %v605, %v344
        %vm1129 = vcmp.eq.s32.totalorder %v605, %v345
        %vm1130 = vcmp.eq.s32.totalorder %v609, %v342
        %vm1131 = vcmp.eq.s32.totalorder %v609, %v343
        %vm1132 = vcmp.eq.s32.totalorder %v609, %v344
        %vm1133 = vcmp.eq.s32.totalorder %v609, %v345
        %vm1134 = vcmp.eq.s32.totalorder %v613, %v342
        %vm1135 = vcmp.eq.s32.totalorder %v613, %v343
        %vm1136 = vcmp.eq.s32.totalorder %v613, %v344
        %vm1137 = vcmp.eq.s32.totalorder %v613, %v345
        %vm1138 = vcmp.eq.s32.totalorder %v620, %v342
        %vm1139 = vcmp.eq.s32.totalorder %v620, %v343
        %vm1140 = vcmp.eq.s32.totalorder %v620, %v344
        %vm1141 = vcmp.eq.s32.totalorder %v620, %v345
        %vm1142 = vcmp.eq.s32.totalorder %v624, %v342
        %vm1143 = vcmp.eq.s32.totalorder %v624, %v343
        %vm1144 = vcmp.eq.s32.totalorder %v624, %v344
        %vm1145 = vcmp.eq.s32.totalorder %v624, %v345
        %vm1146 = vcmp.eq.s32.totalorder %v628, %v342
        %vm1147 = vcmp.eq.s32.totalorder %v628, %v343
        %vm1148 = vcmp.eq.s32.totalorder %v628, %v344
        %vm1149 = vcmp.eq.s32.totalorder %v628, %v345
        %vm1150 = vcmp.eq.s32.totalorder %v632, %v342
        %vm1151 = vcmp.eq.s32.totalorder %v632, %v343
        %vm1152 = vcmp.eq.s32.totalorder %v632, %v344
        %vm1153 = vcmp.eq.s32.totalorder %v632, %v345
        %vm1154 = vcmp.eq.s32.totalorder %v636, %v342
        %vm1155 = vcmp.eq.s32.totalorder %v636, %v343
        %vm1156 = vcmp.eq.s32.totalorder %v636, %v344
        %vm1157 = vcmp.eq.s32.totalorder %v636, %v345
        %vm1158 = vcmp.eq.s32.totalorder %v640, %v342
        %vm1159 = vcmp.eq.s32.totalorder %v640, %v343
        %vm1160 = vcmp.eq.s32.totalorder %v640, %v344
        %vm1161 = vcmp.eq.s32.totalorder %v640, %v345
        %vm1162 = vcmp.eq.s32.totalorder %v644, %v342
        %vm1163 = vcmp.eq.s32.totalorder %v644, %v343
        %vm1164 = vcmp.eq.s32.totalorder %v644, %v344
        %vm1165 = vcmp.eq.s32.totalorder %v644, %v345
        %vm1166 = vcmp.eq.s32.totalorder %v648, %v342
        %vm1167 = vcmp.eq.s32.totalorder %v648, %v343
        %vm1168 = vcmp.eq.s32.totalorder %v648, %v344
        %vm1169 = vcmp.eq.s32.totalorder %v648, %v345
        %vm1170 = vcmp.eq.s32.totalorder %v652, %v342
        %vm1171 = vcmp.eq.s32.totalorder %v652, %v343
        %vm1172 = vcmp.eq.s32.totalorder %v652, %v344
        %vm1173 = vcmp.eq.s32.totalorder %v652, %v345
        %vm1174 = vcmp.eq.s32.totalorder %v656, %v342
        %vm1175 = vcmp.eq.s32.totalorder %v656, %v343
        %vm1176 = vcmp.eq.s32.totalorder %v656, %v344
        %vm1177 = vcmp.eq.s32.totalorder %v656, %v345
        %vm1178 = vcmp.eq.s32.totalorder %v660, %v342
        %vm1179 = vcmp.eq.s32.totalorder %v660, %v343
        %vm1180 = vcmp.eq.s32.totalorder %v660, %v344
        %vm1181 = vcmp.eq.s32.totalorder %v660, %v345
        %vm1182 = vcmp.eq.s32.totalorder %v664, %v342
        %vm1183 = vcmp.eq.s32.totalorder %v664, %v343
        %vm1184 = vcmp.eq.s32.totalorder %v664, %v344
        %vm1185 = vcmp.eq.s32.totalorder %v664, %v345
        %vm1186 = vcmp.eq.s32.totalorder %v668, %v342
        %vm1187 = vcmp.eq.s32.totalorder %v668, %v343
        %vm1188 = vcmp.eq.s32.totalorder %v668, %v344
        %vm1189 = vcmp.eq.s32.totalorder %v668, %v345
        %vm1190 = vcmp.eq.s32.totalorder %v672, %v342
        %vm1191 = vcmp.eq.s32.totalorder %v672, %v343
        %vm1192 = vcmp.eq.s32.totalorder %v672, %v344
        %vm1193 = vcmp.eq.s32.totalorder %v672, %v345
        %vm1194 = vcmp.eq.s32.totalorder %v676, %v342
        %vm1195 = vcmp.eq.s32.totalorder %v676, %v343
        %vm1196 = vcmp.eq.s32.totalorder %v676, %v344
        %vm1197 = vcmp.eq.s32.totalorder %v676, %v345
        %vm1198 = vcmp.eq.s32.totalorder %v680, %v342
        %vm1199 = vcmp.eq.s32.totalorder %v680, %v343
        %vm1200 = vcmp.eq.s32.totalorder %v680, %v344
        %vm1201 = vcmp.eq.s32.totalorder %v680, %v345
        %vm1202 = vcmp.eq.s32.totalorder %v687, %v342
        %vm1203 = vcmp.eq.s32.totalorder %v687, %v343
        %vm1204 = vcmp.eq.s32.totalorder %v687, %v344
        %vm1205 = vcmp.eq.s32.totalorder %v687, %v345
        %vm1206 = vcmp.eq.s32.totalorder %v691, %v342
        %vm1207 = vcmp.eq.s32.totalorder %v691, %v343
        %vm1208 = vcmp.eq.s32.totalorder %v691, %v344
        %vm1209 = vcmp.eq.s32.totalorder %v691, %v345
        %vm1210 = vcmp.eq.s32.totalorder %v695, %v342
        %vm1211 = vcmp.eq.s32.totalorder %v695, %v343
        %vm1212 = vcmp.eq.s32.totalorder %v695, %v344
        %vm1213 = vcmp.eq.s32.totalorder %v695, %v345
        %vm1214 = vcmp.eq.s32.totalorder %v699, %v342
        %vm1215 = vcmp.eq.s32.totalorder %v699, %v343
        %vm1216 = vcmp.eq.s32.totalorder %v699, %v344
        %vm1217 = vcmp.eq.s32.totalorder %v699, %v345
        %vm1218 = vcmp.eq.s32.totalorder %v703, %v342
        %vm1219 = vcmp.eq.s32.totalorder %v703, %v343
        %vm1220 = vcmp.eq.s32.totalorder %v703, %v344
        %vm1221 = vcmp.eq.s32.totalorder %v703, %v345
        %vm1222 = vcmp.eq.s32.totalorder %v707, %v342
        %vm1223 = vcmp.eq.s32.totalorder %v707, %v343
        %vm1224 = vcmp.eq.s32.totalorder %v707, %v344
        %vm1225 = vcmp.eq.s32.totalorder %v707, %v345
        %vm1226 = vcmp.eq.s32.totalorder %v711, %v342
        %vm1227 = vcmp.eq.s32.totalorder %v711, %v343
        %vm1228 = vcmp.eq.s32.totalorder %v711, %v344
        %vm1229 = vcmp.eq.s32.totalorder %v711, %v345
        %vm1230 = vcmp.eq.s32.totalorder %v715, %v342
        %vm1231 = vcmp.eq.s32.totalorder %v715, %v343
        %vm1232 = vcmp.eq.s32.totalorder %v715, %v344
        %vm1233 = vcmp.eq.s32.totalorder %v715, %v345
        %vm1234 = vcmp.eq.s32.totalorder %v719, %v342
        %vm1235 = vcmp.eq.s32.totalorder %v719, %v343
        %vm1236 = vcmp.eq.s32.totalorder %v719, %v344
        %vm1237 = vcmp.eq.s32.totalorder %v719, %v345
        %vm1238 = vcmp.eq.s32.totalorder %v723, %v342
        %vm1239 = vcmp.eq.s32.totalorder %v723, %v343
        %vm1240 = vcmp.eq.s32.totalorder %v723, %v344
        %vm1241 = vcmp.eq.s32.totalorder %v723, %v345
        %vm1242 = vcmp.eq.s32.totalorder %v727, %v342
        %vm1243 = vcmp.eq.s32.totalorder %v727, %v343
        %vm1244 = vcmp.eq.s32.totalorder %v727, %v344
        %vm1245 = vcmp.eq.s32.totalorder %v727, %v345
        %vm1246 = vcmp.eq.s32.totalorder %v731, %v342
        %vm1247 = vcmp.eq.s32.totalorder %v731, %v343
        %vm1248 = vcmp.eq.s32.totalorder %v731, %v344
        %vm1249 = vcmp.eq.s32.totalorder %v731, %v345
        %vm1250 = vcmp.eq.s32.totalorder %v735, %v342
        %vm1251 = vcmp.eq.s32.totalorder %v735, %v343
        %vm1252 = vcmp.eq.s32.totalorder %v735, %v344
        %vm1253 = vcmp.eq.s32.totalorder %v735, %v345
        %vm1254 = vcmp.eq.s32.totalorder %v739, %v342
        %vm1255 = vcmp.eq.s32.totalorder %v739, %v343
        %vm1256 = vcmp.eq.s32.totalorder %v739, %v344
        %vm1257 = vcmp.eq.s32.totalorder %v739, %v345
        %vm1258 = vcmp.eq.s32.totalorder %v743, %v342
        %vm1259 = vcmp.eq.s32.totalorder %v743, %v343
        %vm1260 = vcmp.eq.s32.totalorder %v743, %v344
        %vm1261 = vcmp.eq.s32.totalorder %v743, %v345
        %vm1262 = vcmp.eq.s32.totalorder %v747, %v342
        %vm1263 = vcmp.eq.s32.totalorder %v747, %v343
        %vm1264 = vcmp.eq.s32.totalorder %v747, %v344
        %vm1265 = vcmp.eq.s32.totalorder %v747, %v345
        %vm1266 = vcmp.eq.s32.totalorder %v754, %v342
        %vm1267 = vcmp.eq.s32.totalorder %v754, %v343
        %vm1268 = vcmp.eq.s32.totalorder %v754, %v344
        %vm1269 = vcmp.eq.s32.totalorder %v754, %v345
        %vm1270 = vcmp.eq.s32.totalorder %v758, %v342
        %vm1271 = vcmp.eq.s32.totalorder %v758, %v343
        %vm1272 = vcmp.eq.s32.totalorder %v758, %v344
        %vm1273 = vcmp.eq.s32.totalorder %v758, %v345
        %vm1274 = vcmp.eq.s32.totalorder %v762, %v342
        %vm1275 = vcmp.eq.s32.totalorder %v762, %v343
        %vm1276 = vcmp.eq.s32.totalorder %v762, %v344
        %vm1277 = vcmp.eq.s32.totalorder %v762, %v345
        %vm1278 = vcmp.eq.s32.totalorder %v766, %v342
        %vm1279 = vcmp.eq.s32.totalorder %v766, %v343
        %vm1280 = vcmp.eq.s32.totalorder %v766, %v344
        %vm1281 = vcmp.eq.s32.totalorder %v766, %v345
        %vm1282 = vcmp.eq.s32.totalorder %v770, %v342
        %vm1283 = vcmp.eq.s32.totalorder %v770, %v343
        %vm1284 = vcmp.eq.s32.totalorder %v770, %v344
        %vm1285 = vcmp.eq.s32.totalorder %v770, %v345
        %vm1286 = vcmp.eq.s32.totalorder %v774, %v342
        %vm1287 = vcmp.eq.s32.totalorder %v774, %v343
        %vm1288 = vcmp.eq.s32.totalorder %v774, %v344
        %vm1289 = vcmp.eq.s32.totalorder %v774, %v345
        %vm1290 = vcmp.eq.s32.totalorder %v778, %v342
        %vm1291 = vcmp.eq.s32.totalorder %v778, %v343
        %vm1292 = vcmp.eq.s32.totalorder %v778, %v344
        %vm1293 = vcmp.eq.s32.totalorder %v778, %v345
        %vm1294 = vcmp.eq.s32.totalorder %v782, %v342
        %vm1295 = vcmp.eq.s32.totalorder %v782, %v343
        %vm1296 = vcmp.eq.s32.totalorder %v782, %v344
        %vm1297 = vcmp.eq.s32.totalorder %v782, %v345
        %vm1298 = vcmp.eq.s32.totalorder %v786, %v342
        %vm1299 = vcmp.eq.s32.totalorder %v786, %v343
        %vm1300 = vcmp.eq.s32.totalorder %v786, %v344
        %vm1301 = vcmp.eq.s32.totalorder %v786, %v345
        %vm1302 = vcmp.eq.s32.totalorder %v790, %v342
        %vm1303 = vcmp.eq.s32.totalorder %v790, %v343
        %vm1304 = vcmp.eq.s32.totalorder %v790, %v344
        %vm1305 = vcmp.eq.s32.totalorder %v790, %v345
        %vm1306 = vcmp.eq.s32.totalorder %v794, %v342
        %vm1307 = vcmp.eq.s32.totalorder %v794, %v343
        %vm1308 = vcmp.eq.s32.totalorder %v794, %v344
        %vm1309 = vcmp.eq.s32.totalorder %v794, %v345
        %vm1310 = vcmp.eq.s32.totalorder %v798, %v342
        %vm1311 = vcmp.eq.s32.totalorder %v798, %v343
        %vm1312 = vcmp.eq.s32.totalorder %v798, %v344
        %vm1313 = vcmp.eq.s32.totalorder %v798, %v345
        %vm1314 = vcmp.eq.s32.totalorder %v802, %v342
        %vm1315 = vcmp.eq.s32.totalorder %v802, %v343
        %vm1316 = vcmp.eq.s32.totalorder %v802, %v344
        %vm1317 = vcmp.eq.s32.totalorder %v802, %v345
        %vm1318 = vcmp.eq.s32.totalorder %v806, %v342
        %vm1319 = vcmp.eq.s32.totalorder %v806, %v343
        %vm1320 = vcmp.eq.s32.totalorder %v806, %v344
        %vm1321 = vcmp.eq.s32.totalorder %v806, %v345
        %vm1322 = vcmp.eq.s32.totalorder %v810, %v342
        %vm1323 = vcmp.eq.s32.totalorder %v810, %v343
        %vm1324 = vcmp.eq.s32.totalorder %v810, %v344
        %vm1325 = vcmp.eq.s32.totalorder %v810, %v345
        %vm1326 = vcmp.eq.s32.totalorder %v814, %v342
        %vm1327 = vcmp.eq.s32.totalorder %v814, %v343
        %vm1328 = vcmp.eq.s32.totalorder %v814, %v344
        %vm1329 = vcmp.eq.s32.totalorder %v814, %v345
        %vm1330 = vcmp.eq.s32.totalorder %v821, %v342
        %vm1331 = vcmp.eq.s32.totalorder %v821, %v343
        %vm1332 = vcmp.eq.s32.totalorder %v821, %v344
        %vm1333 = vcmp.eq.s32.totalorder %v821, %v345
        %vm1334 = vcmp.eq.s32.totalorder %v825, %v342
        %vm1335 = vcmp.eq.s32.totalorder %v825, %v343
        %vm1336 = vcmp.eq.s32.totalorder %v825, %v344
        %vm1337 = vcmp.eq.s32.totalorder %v825, %v345
        %vm1338 = vcmp.eq.s32.totalorder %v829, %v342
        %vm1339 = vcmp.eq.s32.totalorder %v829, %v343
        %vm1340 = vcmp.eq.s32.totalorder %v829, %v344
        %vm1341 = vcmp.eq.s32.totalorder %v829, %v345
        %vm1342 = vcmp.eq.s32.totalorder %v833, %v342
        %vm1343 = vcmp.eq.s32.totalorder %v833, %v343
        %vm1344 = vcmp.eq.s32.totalorder %v833, %v344
        %vm1345 = vcmp.eq.s32.totalorder %v833, %v345
        %vm1346 = vcmp.eq.s32.totalorder %v837, %v342
        %vm1347 = vcmp.eq.s32.totalorder %v837, %v343
        %vm1348 = vcmp.eq.s32.totalorder %v837, %v344
        %vm1349 = vcmp.eq.s32.totalorder %v837, %v345
        %vm1350 = vcmp.eq.s32.totalorder %v841, %v342
        %vm1351 = vcmp.eq.s32.totalorder %v841, %v343
        %vm1352 = vcmp.eq.s32.totalorder %v841, %v344
        %vm1353 = vcmp.eq.s32.totalorder %v841, %v345
        %vm1354 = vcmp.eq.s32.totalorder %v845, %v342
        %vm1355 = vcmp.eq.s32.totalorder %v845, %v343
        %vm1356 = vcmp.eq.s32.totalorder %v845, %v344
        %vm1357 = vcmp.eq.s32.totalorder %v845, %v345
        %vm1358 = vcmp.eq.s32.totalorder %v849, %v342
        %vm1359 = vcmp.eq.s32.totalorder %v849, %v343
        %vm1360 = vcmp.eq.s32.totalorder %v849, %v344
        %vm1361 = vcmp.eq.s32.totalorder %v849, %v345
        %vm1362 = vcmp.eq.s32.totalorder %v853, %v342
        %vm1363 = vcmp.eq.s32.totalorder %v853, %v343
        %vm1364 = vcmp.eq.s32.totalorder %v853, %v344
        %vm1365 = vcmp.eq.s32.totalorder %v853, %v345
        %vm1366 = vcmp.eq.s32.totalorder %v857, %v342
        %vm1367 = vcmp.eq.s32.totalorder %v857, %v343
        %vm1368 = vcmp.eq.s32.totalorder %v857, %v344
        %vm1369 = vcmp.eq.s32.totalorder %v857, %v345
        %vm1370 = vcmp.eq.s32.totalorder %v861, %v342
        %vm1371 = vcmp.eq.s32.totalorder %v861, %v343
        %vm1372 = vcmp.eq.s32.totalorder %v861, %v344
        %vm1373 = vcmp.eq.s32.totalorder %v861, %v345
        %vm1374 = vcmp.eq.s32.totalorder %v865, %v342
        %vm1375 = vcmp.eq.s32.totalorder %v865, %v343
        %vm1376 = vcmp.eq.s32.totalorder %v865, %v344
        %vm1377 = vcmp.eq.s32.totalorder %v865, %v345
        %vm1378 = vcmp.eq.s32.totalorder %v869, %v342
        %vm1379 = vcmp.eq.s32.totalorder %v869, %v343
        %vm1380 = vcmp.eq.s32.totalorder %v869, %v344
        %vm1381 = vcmp.eq.s32.totalorder %v869, %v345
        %vm1382 = vcmp.eq.s32.totalorder %v873, %v342
        %vm1383 = vcmp.eq.s32.totalorder %v873, %v343
        %vm1384 = vcmp.eq.s32.totalorder %v873, %v344
        %vm1385 = vcmp.eq.s32.totalorder %v873, %v345
        %vm1386 = vcmp.eq.s32.totalorder %v877, %v342
        %vm1387 = vcmp.eq.s32.totalorder %v877, %v343
        %vm1388 = vcmp.eq.s32.totalorder %v877, %v344
        %vm1389 = vcmp.eq.s32.totalorder %v877, %v345
        %vm1390 = vcmp.eq.s32.totalorder %v881, %v342
        %vm1391 = vcmp.eq.s32.totalorder %v881, %v343
        %vm1392 = vcmp.eq.s32.totalorder %v881, %v344
        %vm1393 = vcmp.eq.s32.totalorder %v881, %v345
        %v1394 = vsel %vm882, 1, 0
        %v1395 = vsel %vm883, 1, 0
        %v1396 = vsel %vm884, 1, 0
        %v1397 = vsel %vm885, 1, 0
        %v1398 = vsel %vm886, 1, 0
        %v1399 = vsel %vm887, 1, 0
        %v1400 = vsel %vm888, 1, 0
        %v1401 = vsel %vm889, 1, 0
        %v1402 = vsel %vm890, 1, 0
        %v1403 = vsel %vm891, 1, 0
        %v1404 = vsel %vm892, 1, 0
        %v1405 = vsel %vm893, 1, 0
        %v1406 = vsel %vm894, 1, 0
        %v1407 = vsel %vm895, 1, 0
        %v1408 = vsel %vm896, 1, 0
        %v1409 = vsel %vm897, 1, 0
        %v1410 = vsel %vm898, 1, 0
        %v1411 = vsel %vm899, 1, 0
        %v1412 = vsel %vm900, 1, 0
        %v1413 = vsel %vm901, 1, 0
        %v1414 = vsel %vm902, 1, 0
        %v1415 = vsel %vm903, 1, 0
        %v1416 = vsel %vm904, 1, 0
        %v1417 = vsel %vm905, 1, 0
        %v1418 = vsel %vm906, 1, 0
        %v1419 = vsel %vm907, 1, 0
        %v1420 = vsel %vm908, 1, 0
        %v1421 = vsel %vm909, 1, 0
        %v1422 = vsel %vm910, 1, 0
        %v1423 = vsel %vm911, 1, 0
        %v1424 = vsel %vm912, 1, 0
        %v1425 = vsel %vm913, 1, 0
        %v1426 = vsel %vm914, 1, 0
        %v1427 = vsel %vm915, 1, 0
        %v1428 = vsel %vm916, 1, 0
        %v1429 = vsel %vm917, 1, 0
        %v1430 = vsel %vm918, 1, 0
        %v1431 = vsel %vm919, 1, 0
        %v1432 = vsel %vm920, 1, 0
        %v1433 = vsel %vm921, 1, 0
        %v1434 = vsel %vm922, 1, 0
        %v1435 = vsel %vm923, 1, 0
        %v1436 = vsel %vm924, 1, 0
        %v1437 = vsel %vm925, 1, 0
        %v1438 = vsel %vm926, 1, 0
        %v1439 = vsel %vm927, 1, 0
        %v1440 = vsel %vm928, 1, 0
        %v1441 = vsel %vm929, 1, 0
        %v1442 = vsel %vm930, 1, 0
        %v1443 = vsel %vm931, 1, 0
        %v1444 = vsel %vm932, 1, 0
        %v1445 = vsel %vm933, 1, 0
        %v1446 = vsel %vm934, 1, 0
        %v1447 = vsel %vm935, 1, 0
        %v1448 = vsel %vm936, 1, 0
        %v1449 = vsel %vm937, 1, 0
        %v1450 = vsel %vm938, 1, 0
        %v1451 = vsel %vm939, 1, 0
        %v1452 = vsel %vm940, 1, 0
        %v1453 = vsel %vm941, 1, 0
        %v1454 = vsel %vm942, 1, 0
        %v1455 = vsel %vm943, 1, 0
        %v1456 = vsel %vm944, 1, 0
        %v1457 = vsel %vm945, 1, 0
        %v1458 = vsel %vm946, 1, 0
        %v1459 = vsel %vm947, 1, 0
        %v1460 = vsel %vm948, 1, 0
        %v1461 = vsel %vm949, 1, 0
        %v1462 = vsel %vm950, 1, 0
        %v1463 = vsel %vm951, 1, 0
        %v1464 = vsel %vm952, 1, 0
        %v1465 = vsel %vm953, 1, 0
        %v1466 = vsel %vm954, 1, 0
        %v1467 = vsel %vm955, 1, 0
        %v1468 = vsel %vm956, 1, 0
        %v1469 = vsel %vm957, 1, 0
        %v1470 = vsel %vm958, 1, 0
        %v1471 = vsel %vm959, 1, 0
        %v1472 = vsel %vm960, 1, 0
        %v1473 = vsel %vm961, 1, 0
        %v1474 = vsel %vm962, 1, 0
        %v1475 = vsel %vm963, 1, 0
        %v1476 = vsel %vm964, 1, 0
        %v1477 = vsel %vm965, 1, 0
        %v1478 = vsel %vm966, 1, 0
        %v1479 = vsel %vm967, 1, 0
        %v1480 = vsel %vm968, 1, 0
        %v1481 = vsel %vm969, 1, 0
        %v1482 = vsel %vm970, 1, 0
        %v1483 = vsel %vm971, 1, 0
        %v1484 = vsel %vm972, 1, 0
        %v1485 = vsel %vm973, 1, 0
        %v1486 = vsel %vm974, 1, 0
        %v1487 = vsel %vm975, 1, 0
        %v1488 = vsel %vm976, 1, 0
        %v1489 = vsel %vm977, 1, 0
        %v1490 = vsel %vm978, 1, 0
        %v1491 = vsel %vm979, 1, 0
        %v1492 = vsel %vm980, 1, 0
        %v1493 = vsel %vm981, 1, 0
        %v1494 = vsel %vm982, 1, 0
        %v1495 = vsel %vm983, 1, 0
        %v1496 = vsel %vm984, 1, 0
        %v1497 = vsel %vm985, 1, 0
        %v1498 = vsel %vm986, 1, 0
        %v1499 = vsel %vm987, 1, 0
        %v1500 = vsel %vm988, 1, 0
        %v1501 = vsel %vm989, 1, 0
        %v1502 = vsel %vm990, 1, 0
        %v1503 = vsel %vm991, 1, 0
        %v1504 = vsel %vm992, 1, 0
        %v1505 = vsel %vm993, 1, 0
        %v1506 = vsel %vm994, 1, 0
        %v1507 = vsel %vm995, 1, 0
        %v1508 = vsel %vm996, 1, 0
        %v1509 = vsel %vm997, 1, 0
        %v1510 = vsel %vm998, 1, 0
        %v1511 = vsel %vm999, 1, 0
        %v1512 = vsel %vm1000, 1, 0
        %v1513 = vsel %vm1001, 1, 0
        %v1514 = vsel %vm1002, 1, 0
        %v1515 = vsel %vm1003, 1, 0
        %v1516 = vsel %vm1004, 1, 0
        %v1517 = vsel %vm1005, 1, 0
        %v1518 = vsel %vm1006, 1, 0
        %v1519 = vsel %vm1007, 1, 0
        %v1520 = vsel %vm1008, 1, 0
        %v1521 = vsel %vm1009, 1, 0
        %v1522 = vsel %vm1010, 1, 0
        %v1523 = vsel %vm1011, 1, 0
        %v1524 = vsel %vm1012, 1, 0
        %v1525 = vsel %vm1013, 1, 0
        %v1526 = vsel %vm1014, 1, 0
        %v1527 = vsel %vm1015, 1, 0
        %v1528 = vsel %vm1016, 1, 0
        %v1529 = vsel %vm1017, 1, 0
        %v1530 = vsel %vm1018, 1, 0
        %v1531 = vsel %vm1019, 1, 0
        %v1532 = vsel %vm1020, 1, 0
        %v1533 = vsel %vm1021, 1, 0
        %v1534 = vsel %vm1022, 1, 0
        %v1535 = vsel %vm1023, 1, 0
        %v1536 = vsel %vm1024, 1, 0
        %v1537 = vsel %vm1025, 1, 0
        %v1538 = vsel %vm1026, 1, 0
        %v1539 = vsel %vm1027, 1, 0
        %v1540 = vsel %vm1028, 1, 0
        %v1541 = vsel %vm1029, 1, 0
        %v1542 = vsel %vm1030, 1, 0
        %v1543 = vsel %vm1031, 1, 0
        %v1544 = vsel %vm1032, 1, 0
        %v1545 = vsel %vm1033, 1, 0
        %v1546 = vsel %vm1034, 1, 0
        %v1547 = vsel %vm1035, 1, 0
        %v1548 = vsel %vm1036, 1, 0
        %v1549 = vsel %vm1037, 1, 0
        %v1550 = vsel %vm1038, 1, 0
        %v1551 = vsel %vm1039, 1, 0
        %v1552 = vsel %vm1040, 1, 0
        %v1553 = vsel %vm1041, 1, 0
        %v1554 = vsel %vm1042, 1, 0
        %v1555 = vsel %vm1043, 1, 0
        %v1556 = vsel %vm1044, 1, 0
        %v1557 = vsel %vm1045, 1, 0
        %v1558 = vsel %vm1046, 1, 0
        %v1559 = vsel %vm1047, 1, 0
        %v1560 = vsel %vm1048, 1, 0
        %v1561 = vsel %vm1049, 1, 0
        %v1562 = vsel %vm1050, 1, 0
        %v1563 = vsel %vm1051, 1, 0
        %v1564 = vsel %vm1052, 1, 0
        %v1565 = vsel %vm1053, 1, 0
        %v1566 = vsel %vm1054, 1, 0
        %v1567 = vsel %vm1055, 1, 0
        %v1568 = vsel %vm1056, 1, 0
        %v1569 = vsel %vm1057, 1, 0
        %v1570 = vsel %vm1058, 1, 0
        %v1571 = vsel %vm1059, 1, 0
        %v1572 = vsel %vm1060, 1, 0
        %v1573 = vsel %vm1061, 1, 0
        %v1574 = vsel %vm1062, 1, 0
        %v1575 = vsel %vm1063, 1, 0
        %v1576 = vsel %vm1064, 1, 0
        %v1577 = vsel %vm1065, 1, 0
        %v1578 = vsel %vm1066, 1, 0
        %v1579 = vsel %vm1067, 1, 0
        %v1580 = vsel %vm1068, 1, 0
        %v1581 = vsel %vm1069, 1, 0
        %v1582 = vsel %vm1070, 1, 0
        %v1583 = vsel %vm1071, 1, 0
        %v1584 = vsel %vm1072, 1, 0
        %v1585 = vsel %vm1073, 1, 0
        %v1586 = vsel %vm1074, 1, 0
        %v1587 = vsel %vm1075, 1, 0
        %v1588 = vsel %vm1076, 1, 0
        %v1589 = vsel %vm1077, 1, 0
        %v1590 = vsel %vm1078, 1, 0
        %v1591 = vsel %vm1079, 1, 0
        %v1592 = vsel %vm1080, 1, 0
        %v1593 = vsel %vm1081, 1, 0
        %v1594 = vsel %vm1082, 1, 0
        %v1595 = vsel %vm1083, 1, 0
        %v1596 = vsel %vm1084, 1, 0
        %v1597 = vsel %vm1085, 1, 0
        %v1598 = vsel %vm1086, 1, 0
        %v1599 = vsel %vm1087, 1, 0
        %v1600 = vsel %vm1088, 1, 0
        %v1601 = vsel %vm1089, 1, 0
        %v1602 = vsel %vm1090, 1, 0
        %v1603 = vsel %vm1091, 1, 0
        %v1604 = vsel %vm1092, 1, 0
        %v1605 = vsel %vm1093, 1, 0
        %v1606 = vsel %vm1094, 1, 0
        %v1607 = vsel %vm1095, 1, 0
        %v1608 = vsel %vm1096, 1, 0
        %v1609 = vsel %vm1097, 1, 0
        %v1610 = vsel %vm1098, 1, 0
        %v1611 = vsel %vm1099, 1, 0
        %v1612 = vsel %vm1100, 1, 0
        %v1613 = vsel %vm1101, 1, 0
        %v1614 = vsel %vm1102, 1, 0
        %v1615 = vsel %vm1103, 1, 0
        %v1616 = vsel %vm1104, 1, 0
        %v1617 = vsel %vm1105, 1, 0
        %v1618 = vsel %vm1106, 1, 0
        %v1619 = vsel %vm1107, 1, 0
        %v1620 = vsel %vm1108, 1, 0
        %v1621 = vsel %vm1109, 1, 0
        %v1622 = vsel %vm1110, 1, 0
        %v1623 = vsel %vm1111, 1, 0
        %v1624 = vsel %vm1112, 1, 0
        %v1625 = vsel %vm1113, 1, 0
        %v1626 = vsel %vm1114, 1, 0
        %v1627 = vsel %vm1115, 1, 0
        %v1628 = vsel %vm1116, 1, 0
        %v1629 = vsel %vm1117, 1, 0
        %v1630 = vsel %vm1118, 1, 0
        %v1631 = vsel %vm1119, 1, 0
        %v1632 = vsel %vm1120, 1, 0
        %v1633 = vsel %vm1121, 1, 0
        %v1634 = vsel %vm1122, 1, 0
        %v1635 = vsel %vm1123, 1, 0
        %v1636 = vsel %vm1124, 1, 0
        %v1637 = vsel %vm1125, 1, 0
        %v1638 = vsel %vm1126, 1, 0
        %v1639 = vsel %vm1127, 1, 0
        %v1640 = vsel %vm1128, 1, 0
        %v1641 = vsel %vm1129, 1, 0
        %v1642 = vsel %vm1130, 1, 0
        %v1643 = vsel %vm1131, 1, 0
        %v1644 = vsel %vm1132, 1, 0
        %v1645 = vsel %vm1133, 1, 0
        %v1646 = vsel %vm1134, 1, 0
        %v1647 = vsel %vm1135, 1, 0
        %v1648 = vsel %vm1136, 1, 0
        %v1649 = vsel %vm1137, 1, 0
        %v1650 = vsel %vm1138, 1, 0
        %v1651 = vsel %vm1139, 1, 0
        %v1652 = vsel %vm1140, 1, 0
        %v1653 = vsel %vm1141, 1, 0
        %v1654 = vsel %vm1142, 1, 0
        %v1655 = vsel %vm1143, 1, 0
        %v1656 = vsel %vm1144, 1, 0
        %v1657 = vsel %vm1145, 1, 0
        %v1658 = vsel %vm1146, 1, 0
        %v1659 = vsel %vm1147, 1, 0
        %v1660 = vsel %vm1148, 1, 0
        %v1661 = vsel %vm1149, 1, 0
        %v1662 = vsel %vm1150, 1, 0
        %v1663 = vsel %vm1151, 1, 0
        %v1664 = vsel %vm1152, 1, 0
        %v1665 = vsel %vm1153, 1, 0
        %v1666 = vsel %vm1154, 1, 0
        %v1667 = vsel %vm1155, 1, 0
        %v1668 = vsel %vm1156, 1, 0
        %v1669 = vsel %vm1157, 1, 0
        %v1670 = vsel %vm1158, 1, 0
        %v1671 = vsel %vm1159, 1, 0
        %v1672 = vsel %vm1160, 1, 0
        %v1673 = vsel %vm1161, 1, 0
        %v1674 = vsel %vm1162, 1, 0
        %v1675 = vsel %vm1163, 1, 0
        %v1676 = vsel %vm1164, 1, 0
        %v1677 = vsel %vm1165, 1, 0
        %v1678 = vsel %vm1166, 1, 0
        %v1679 = vsel %vm1167, 1, 0
        %v1680 = vsel %vm1168, 1, 0
        %v1681 = vsel %vm1169, 1, 0
        %v1682 = vsel %vm1170, 1, 0
        %v1683 = vsel %vm1171, 1, 0
        %v1684 = vsel %vm1172, 1, 0
        %v1685 = vsel %vm1173, 1, 0
        %v1686 = vsel %vm1174, 1, 0
        %v1687 = vsel %vm1175, 1, 0
        %v1688 = vsel %vm1176, 1, 0
        %v1689 = vsel %vm1177, 1, 0
        %v1690 = vsel %vm1178, 1, 0
        %v1691 = vsel %vm1179, 1, 0
        %v1692 = vsel %vm1180, 1, 0
        %v1693 = vsel %vm1181, 1, 0
        %v1694 = vsel %vm1182, 1, 0
        %v1695 = vsel %vm1183, 1, 0
        %v1696 = vsel %vm1184, 1, 0
        %v1697 = vsel %vm1185, 1, 0
        %v1698 = vsel %vm1186, 1, 0
        %v1699 = vsel %vm1187, 1, 0
        %v1700 = vsel %vm1188, 1, 0
        %v1701 = vsel %vm1189, 1, 0
        %v1702 = vsel %vm1190, 1, 0
        %v1703 = vsel %vm1191, 1, 0
        %v1704 = vsel %vm1192, 1, 0
        %v1705 = vsel %vm1193, 1, 0
        %v1706 = vsel %vm1194, 1, 0
        %v1707 = vsel %vm1195, 1, 0
        %v1708 = vsel %vm1196, 1, 0
        %v1709 = vsel %vm1197, 1, 0
        %v1710 = vsel %vm1198, 1, 0
        %v1711 = vsel %vm1199, 1, 0
        %v1712 = vsel %vm1200, 1, 0
        %v1713 = vsel %vm1201, 1, 0
        %v1714 = vsel %vm1202, 1, 0
        %v1715 = vsel %vm1203, 1, 0
        %v1716 = vsel %vm1204, 1, 0
        %v1717 = vsel %vm1205, 1, 0
        %v1718 = vsel %vm1206, 1, 0
        %v1719 = vsel %vm1207, 1, 0
        %v1720 = vsel %vm1208, 1, 0
        %v1721 = vsel %vm1209, 1, 0
        %v1722 = vsel %vm1210, 1, 0
        %v1723 = vsel %vm1211, 1, 0
        %v1724 = vsel %vm1212, 1, 0
        %v1725 = vsel %vm1213, 1, 0
        %v1726 = vsel %vm1214, 1, 0
        %v1727 = vsel %vm1215, 1, 0
        %v1728 = vsel %vm1216, 1, 0
        %v1729 = vsel %vm1217, 1, 0
        %v1730 = vsel %vm1218, 1, 0
        %v1731 = vsel %vm1219, 1, 0
        %v1732 = vsel %vm1220, 1, 0
        %v1733 = vsel %vm1221, 1, 0
        %v1734 = vsel %vm1222, 1, 0
        %v1735 = vsel %vm1223, 1, 0
        %v1736 = vsel %vm1224, 1, 0
        %v1737 = vsel %vm1225, 1, 0
        %v1738 = vsel %vm1226, 1, 0
        %v1739 = vsel %vm1227, 1, 0
        %v1740 = vsel %vm1228, 1, 0
        %v1741 = vsel %vm1229, 1, 0
        %v1742 = vsel %vm1230, 1, 0
        %v1743 = vsel %vm1231, 1, 0
        %v1744 = vsel %vm1232, 1, 0
        %v1745 = vsel %vm1233, 1, 0
        %v1746 = vsel %vm1234, 1, 0
        %v1747 = vsel %vm1235, 1, 0
        %v1748 = vsel %vm1236, 1, 0
        %v1749 = vsel %vm1237, 1, 0
        %v1750 = vsel %vm1238, 1, 0
        %v1751 = vsel %vm1239, 1, 0
        %v1752 = vsel %vm1240, 1, 0
        %v1753 = vsel %vm1241, 1, 0
        %v1754 = vsel %vm1242, 1, 0
        %v1755 = vsel %vm1243, 1, 0
        %v1756 = vsel %vm1244, 1, 0
        %v1757 = vsel %vm1245, 1, 0
        %v1758 = vsel %vm1246, 1, 0
        %v1759 = vsel %vm1247, 1, 0
        %v1760 = vsel %vm1248, 1, 0
        %v1761 = vsel %vm1249, 1, 0
        %v1762 = vsel %vm1250, 1, 0
        %v1763 = vsel %vm1251, 1, 0
        %v1764 = vsel %vm1252, 1, 0
        %v1765 = vsel %vm1253, 1, 0
        %v1766 = vsel %vm1254, 1, 0
        %v1767 = vsel %vm1255, 1, 0
        %v1768 = vsel %vm1256, 1, 0
        %v1769 = vsel %vm1257, 1, 0
        %v1770 = vsel %vm1258, 1, 0
        %v1771 = vsel %vm1259, 1, 0
        %v1772 = vsel %vm1260, 1, 0
        %v1773 = vsel %vm1261, 1, 0
        %v1774 = vsel %vm1262, 1, 0
        %v1775 = vsel %vm1263, 1, 0
        %v1776 = vsel %vm1264, 1, 0
        %v1777 = vsel %vm1265, 1, 0
        %v1778 = vsel %vm1266, 1, 0
        %v1779 = vsel %vm1267, 1, 0
        %v1780 = vsel %vm1268, 1, 0
        %v1781 = vsel %vm1269, 1, 0
        %v1782 = vsel %vm1270, 1, 0
        %v1783 = vsel %vm1271, 1, 0
        %v1784 = vsel %vm1272, 1, 0
        %v1785 = vsel %vm1273, 1, 0
        %v1786 = vsel %vm1274, 1, 0
        %v1787 = vsel %vm1275, 1, 0
        %v1788 = vsel %vm1276, 1, 0
        %v1789 = vsel %vm1277, 1, 0
        %v1790 = vsel %vm1278, 1, 0
        %v1791 = vsel %vm1279, 1, 0
        %v1792 = vsel %vm1280, 1, 0
        %v1793 = vsel %vm1281, 1, 0
        %v1794 = vsel %vm1282, 1, 0
        %v1795 = vsel %vm1283, 1, 0
        %v1796 = vsel %vm1284, 1, 0
        %v1797 = vsel %vm1285, 1, 0
        %v1798 = vsel %vm1286, 1, 0
        %v1799 = vsel %vm1287, 1, 0
        %v1800 = vsel %vm1288, 1, 0
        %v1801 = vsel %vm1289, 1, 0
        %v1802 = vsel %vm1290, 1, 0
        %v1803 = vsel %vm1291, 1, 0
        %v1804 = vsel %vm1292, 1, 0
        %v1805 = vsel %vm1293, 1, 0
        %v1806 = vsel %vm1294, 1, 0
        %v1807 = vsel %vm1295, 1, 0
        %v1808 = vsel %vm1296, 1, 0
        %v1809 = vsel %vm1297, 1, 0
        %v1810 = vsel %vm1298, 1, 0
        %v1811 = vsel %vm1299, 1, 0
        %v1812 = vsel %vm1300, 1, 0
        %v1813 = vsel %vm1301, 1, 0
        %v1814 = vsel %vm1302, 1, 0
        %v1815 = vsel %vm1303, 1, 0
        %v1816 = vsel %vm1304, 1, 0
        %v1817 = vsel %vm1305, 1, 0
        %v1818 = vsel %vm1306, 1, 0
        %v1819 = vsel %vm1307, 1, 0
        %v1820 = vsel %vm1308, 1, 0
        %v1821 = vsel %vm1309, 1, 0
        %v1822 = vsel %vm1310, 1, 0
        %v1823 = vsel %vm1311, 1, 0
        %v1824 = vsel %vm1312, 1, 0
        %v1825 = vsel %vm1313, 1, 0
        %v1826 = vsel %vm1314, 1, 0
        %v1827 = vsel %vm1315, 1, 0
        %v1828 = vsel %vm1316, 1, 0
        %v1829 = vsel %vm1317, 1, 0
        %v1830 = vsel %vm1318, 1, 0
        %v1831 = vsel %vm1319, 1, 0
        %v1832 = vsel %vm1320, 1, 0
        %v1833 = vsel %vm1321, 1, 0
        %v1834 = vsel %vm1322, 1, 0
        %v1835 = vsel %vm1323, 1, 0
        %v1836 = vsel %vm1324, 1, 0
        %v1837 = vsel %vm1325, 1, 0
        %v1838 = vsel %vm1326, 1, 0
        %v1839 = vsel %vm1327, 1, 0
        %v1840 = vsel %vm1328, 1, 0
        %v1841 = vsel %vm1329, 1, 0
        %v1842 = vsel %vm1330, 1, 0
        %v1843 = vsel %vm1331, 1, 0
        %v1844 = vsel %vm1332, 1, 0
        %v1845 = vsel %vm1333, 1, 0
        %v1846 = vsel %vm1334, 1, 0
        %v1847 = vsel %vm1335, 1, 0
        %v1848 = vsel %vm1336, 1, 0
        %v1849 = vsel %vm1337, 1, 0
        %v1850 = vsel %vm1338, 1, 0
        %v1851 = vsel %vm1339, 1, 0
        %v1852 = vsel %vm1340, 1, 0
        %v1853 = vsel %vm1341, 1, 0
        %v1854 = vsel %vm1342, 1, 0
        %v1855 = vsel %vm1343, 1, 0
        %v1856 = vsel %vm1344, 1, 0
        %v1857 = vsel %vm1345, 1, 0
        %v1858 = vsel %vm1346, 1, 0
        %v1859 = vsel %vm1347, 1, 0
        %v1860 = vsel %vm1348, 1, 0
        %v1861 = vsel %vm1349, 1, 0
        %v1862 = vsel %vm1350, 1, 0
        %v1863 = vsel %vm1351, 1, 0
        %v1864 = vsel %vm1352, 1, 0
        %v1865 = vsel %vm1353, 1, 0
        %v1866 = vsel %vm1354, 1, 0
        %v1867 = vsel %vm1355, 1, 0
        %v1868 = vsel %vm1356, 1, 0
        %v1869 = vsel %vm1357, 1, 0
        %v1870 = vsel %vm1358, 1, 0
        %v1871 = vsel %vm1359, 1, 0
        %v1872 = vsel %vm1360, 1, 0
        %v1873 = vsel %vm1361, 1, 0
        %v1874 = vsel %vm1362, 1, 0
        %v1875 = vsel %vm1363, 1, 0
        %v1876 = vsel %vm1364, 1, 0
        %v1877 = vsel %vm1365, 1, 0
        %v1878 = vsel %vm1366, 1, 0
        %v1879 = vsel %vm1367, 1, 0
        %v1880 = vsel %vm1368, 1, 0
        %v1881 = vsel %vm1369, 1, 0
        %v1882 = vsel %vm1370, 1, 0
        %v1883 = vsel %vm1371, 1, 0
        %v1884 = vsel %vm1372, 1, 0
        %v1885 = vsel %vm1373, 1, 0
        %v1886 = vsel %vm1374, 1, 0
        %v1887 = vsel %vm1375, 1, 0
        %v1888 = vsel %vm1376, 1, 0
        %v1889 = vsel %vm1377, 1, 0
        %v1890 = vsel %vm1378, 1, 0
        %v1891 = vsel %vm1379, 1, 0
        %v1892 = vsel %vm1380, 1, 0
        %v1893 = vsel %vm1381, 1, 0
        %v1894 = vsel %vm1382, 1, 0
        %v1895 = vsel %vm1383, 1, 0
        %v1896 = vsel %vm1384, 1, 0
        %v1897 = vsel %vm1385, 1, 0
        %v1898 = vsel %vm1386, 1, 0
        %v1899 = vsel %vm1387, 1, 0
        %v1900 = vsel %vm1388, 1, 0
        %v1901 = vsel %vm1389, 1, 0
        %v1902 = vsel %vm1390, 1, 0
        %v1903 = vsel %vm1391, 1, 0
        %v1904 = vsel %vm1392, 1, 0
        %v1905 = vsel %vm1393, 1, 0
        %v1906 = vcvt.s32.f32 %v1394
        %v1907 = vcvt.s32.f32 %v1395
        %v1908 = vcvt.s32.f32 %v1396
        %v1909 = vcvt.s32.f32 %v1397
        %v1910 = vcvt.s32.f32 %v1398
        %v1911 = vcvt.s32.f32 %v1399
        %v1912 = vcvt.s32.f32 %v1400
        %v1913 = vcvt.s32.f32 %v1401
        %v1914 = vcvt.s32.f32 %v1402
        %v1915 = vcvt.s32.f32 %v1403
        %v1916 = vcvt.s32.f32 %v1404
        %v1917 = vcvt.s32.f32 %v1405
        %v1918 = vcvt.s32.f32 %v1406
        %v1919 = vcvt.s32.f32 %v1407
        %v1920 = vcvt.s32.f32 %v1408
        %v1921 = vcvt.s32.f32 %v1409
        %v1922 = vcvt.s32.f32 %v1410
        %v1923 = vcvt.s32.f32 %v1411
        %v1924 = vcvt.s32.f32 %v1412
        %v1925 = vcvt.s32.f32 %v1413
        %v1926 = vcvt.s32.f32 %v1414
        %v1927 = vcvt.s32.f32 %v1415
        %v1928 = vcvt.s32.f32 %v1416
        %v1929 = vcvt.s32.f32 %v1417
        %v1930 = vcvt.s32.f32 %v1418
        %v1931 = vcvt.s32.f32 %v1419
        %v1932 = vcvt.s32.f32 %v1420
        %v1933 = vcvt.s32.f32 %v1421
        %v1934 = vcvt.s32.f32 %v1422
        %v1935 = vcvt.s32.f32 %v1423
        %v1936 = vcvt.s32.f32 %v1424
        %v1937 = vcvt.s32.f32 %v1425
        %v1938 = vcvt.s32.f32 %v1426
        %v1939 = vcvt.s32.f32 %v1427
        %v1940 = vcvt.s32.f32 %v1428
        %v1941 = vcvt.s32.f32 %v1429
        %v1942 = vcvt.s32.f32 %v1430
        %v1943 = vcvt.s32.f32 %v1431
        %v1944 = vcvt.s32.f32 %v1432
        %v1945 = vcvt.s32.f32 %v1433
        %v1946 = vcvt.s32.f32 %v1434
        %v1947 = vcvt.s32.f32 %v1435
        %v1948 = vcvt.s32.f32 %v1436
        %v1949 = vcvt.s32.f32 %v1437
        %v1950 = vcvt.s32.f32 %v1438
        %v1951 = vcvt.s32.f32 %v1439
        %v1952 = vcvt.s32.f32 %v1440
        %v1953 = vcvt.s32.f32 %v1441
        %v1954 = vcvt.s32.f32 %v1442
        %v1955 = vcvt.s32.f32 %v1443
        %v1956 = vcvt.s32.f32 %v1444
        %v1957 = vcvt.s32.f32 %v1445
        %v1958 = vcvt.s32.f32 %v1446
        %v1959 = vcvt.s32.f32 %v1447
        %v1960 = vcvt.s32.f32 %v1448
        %v1961 = vcvt.s32.f32 %v1449
        %v1962 = vcvt.s32.f32 %v1450
        %v1963 = vcvt.s32.f32 %v1451
        %v1964 = vcvt.s32.f32 %v1452
        %v1965 = vcvt.s32.f32 %v1453
        %v1966 = vcvt.s32.f32 %v1454
        %v1967 = vcvt.s32.f32 %v1455
        %v1968 = vcvt.s32.f32 %v1456
        %v1969 = vcvt.s32.f32 %v1457
        %v1970 = vcvt.s32.f32 %v1458
        %v1971 = vcvt.s32.f32 %v1459
        %v1972 = vcvt.s32.f32 %v1460
        %v1973 = vcvt.s32.f32 %v1461
        %v1974 = vcvt.s32.f32 %v1462
        %v1975 = vcvt.s32.f32 %v1463
        %v1976 = vcvt.s32.f32 %v1464
        %v1977 = vcvt.s32.f32 %v1465
        %v1978 = vcvt.s32.f32 %v1466
        %v1979 = vcvt.s32.f32 %v1467
        %v1980 = vcvt.s32.f32 %v1468
        %v1981 = vcvt.s32.f32 %v1469
        %v1982 = vcvt.s32.f32 %v1470
        %v1983 = vcvt.s32.f32 %v1471
        %v1984 = vcvt.s32.f32 %v1472
        %v1985 = vcvt.s32.f32 %v1473
        %v1986 = vcvt.s32.f32 %v1474
        %v1987 = vcvt.s32.f32 %v1475
        %v1988 = vcvt.s32.f32 %v1476
        %v1989 = vcvt.s32.f32 %v1477
        %v1990 = vcvt.s32.f32 %v1478
        %v1991 = vcvt.s32.f32 %v1479
        %v1992 = vcvt.s32.f32 %v1480
        %v1993 = vcvt.s32.f32 %v1481
        %v1994 = vcvt.s32.f32 %v1482
        %v1995 = vcvt.s32.f32 %v1483
        %v1996 = vcvt.s32.f32 %v1484
        %v1997 = vcvt.s32.f32 %v1485
        %v1998 = vcvt.s32.f32 %v1486
        %v1999 = vcvt.s32.f32 %v1487
        %v2000 = vcvt.s32.f32 %v1488
        %v2001 = vcvt.s32.f32 %v1489
        %v2002 = vcvt.s32.f32 %v1490
        %v2003 = vcvt.s32.f32 %v1491
        %v2004 = vcvt.s32.f32 %v1492
        %v2005 = vcvt.s32.f32 %v1493
        %v2006 = vcvt.s32.f32 %v1494
        %v2007 = vcvt.s32.f32 %v1495
        %v2008 = vcvt.s32.f32 %v1496
        %v2009 = vcvt.s32.f32 %v1497
        %v2010 = vcvt.s32.f32 %v1498
        %v2011 = vcvt.s32.f32 %v1499
        %v2012 = vcvt.s32.f32 %v1500
        %v2013 = vcvt.s32.f32 %v1501
        %v2014 = vcvt.s32.f32 %v1502
        %v2015 = vcvt.s32.f32 %v1503
        %v2016 = vcvt.s32.f32 %v1504
        %v2017 = vcvt.s32.f32 %v1505
        %v2018 = vcvt.s32.f32 %v1506
        %v2019 = vcvt.s32.f32 %v1507
        %v2020 = vcvt.s32.f32 %v1508
        %v2021 = vcvt.s32.f32 %v1509
        %v2022 = vcvt.s32.f32 %v1510
        %v2023 = vcvt.s32.f32 %v1511
        %v2024 = vcvt.s32.f32 %v1512
        %v2025 = vcvt.s32.f32 %v1513
        %v2026 = vcvt.s32.f32 %v1514
        %v2027 = vcvt.s32.f32 %v1515
        %v2028 = vcvt.s32.f32 %v1516
        %v2029 = vcvt.s32.f32 %v1517
        %v2030 = vcvt.s32.f32 %v1518
        %v2031 = vcvt.s32.f32 %v1519
        %v2032 = vcvt.s32.f32 %v1520
        %v2033 = vcvt.s32.f32 %v1521
        %v2034 = vcvt.s32.f32 %v1522
        %v2035 = vcvt.s32.f32 %v1523
        %v2036 = vcvt.s32.f32 %v1524
        %v2037 = vcvt.s32.f32 %v1525
        %v2038 = vcvt.s32.f32 %v1526
        %v2039 = vcvt.s32.f32 %v1527
        %v2040 = vcvt.s32.f32 %v1528
        %v2041 = vcvt.s32.f32 %v1529
        %v2042 = vcvt.s32.f32 %v1530
        %v2043 = vcvt.s32.f32 %v1531
        %v2044 = vcvt.s32.f32 %v1532
        %v2045 = vcvt.s32.f32 %v1533
        %v2046 = vcvt.s32.f32 %v1534
        %v2047 = vcvt.s32.f32 %v1535
        %v2048 = vcvt.s32.f32 %v1536
        %v2049 = vcvt.s32.f32 %v1537
        %v2050 = vcvt.s32.f32 %v1538
        %v2051 = vcvt.s32.f32 %v1539
        %v2052 = vcvt.s32.f32 %v1540
        %v2053 = vcvt.s32.f32 %v1541
        %v2054 = vcvt.s32.f32 %v1542
        %v2055 = vcvt.s32.f32 %v1543
        %v2056 = vcvt.s32.f32 %v1544
        %v2057 = vcvt.s32.f32 %v1545
        %v2058 = vcvt.s32.f32 %v1546
        %v2059 = vcvt.s32.f32 %v1547
        %v2060 = vcvt.s32.f32 %v1548
        %v2061 = vcvt.s32.f32 %v1549
        %v2062 = vcvt.s32.f32 %v1550
        %v2063 = vcvt.s32.f32 %v1551
        %v2064 = vcvt.s32.f32 %v1552
        %v2065 = vcvt.s32.f32 %v1553
        %v2066 = vcvt.s32.f32 %v1554
        %v2067 = vcvt.s32.f32 %v1555
        %v2068 = vcvt.s32.f32 %v1556
        %v2069 = vcvt.s32.f32 %v1557
        %v2070 = vcvt.s32.f32 %v1558
        %v2071 = vcvt.s32.f32 %v1559
        %v2072 = vcvt.s32.f32 %v1560
        %v2073 = vcvt.s32.f32 %v1561
        %v2074 = vcvt.s32.f32 %v1562
        %v2075 = vcvt.s32.f32 %v1563
        %v2076 = vcvt.s32.f32 %v1564
        %v2077 = vcvt.s32.f32 %v1565
        %v2078 = vcvt.s32.f32 %v1566
        %v2079 = vcvt.s32.f32 %v1567
        %v2080 = vcvt.s32.f32 %v1568
        %v2081 = vcvt.s32.f32 %v1569
        %v2082 = vcvt.s32.f32 %v1570
        %v2083 = vcvt.s32.f32 %v1571
        %v2084 = vcvt.s32.f32 %v1572
        %v2085 = vcvt.s32.f32 %v1573
        %v2086 = vcvt.s32.f32 %v1574
        %v2087 = vcvt.s32.f32 %v1575
        %v2088 = vcvt.s32.f32 %v1576
        %v2089 = vcvt.s32.f32 %v1577
        %v2090 = vcvt.s32.f32 %v1578
        %v2091 = vcvt.s32.f32 %v1579
        %v2092 = vcvt.s32.f32 %v1580
        %v2093 = vcvt.s32.f32 %v1581
        %v2094 = vcvt.s32.f32 %v1582
        %v2095 = vcvt.s32.f32 %v1583
        %v2096 = vcvt.s32.f32 %v1584
        %v2097 = vcvt.s32.f32 %v1585
        %v2098 = vcvt.s32.f32 %v1586
        %v2099 = vcvt.s32.f32 %v1587
        %v2100 = vcvt.s32.f32 %v1588
        %v2101 = vcvt.s32.f32 %v1589
        %v2102 = vcvt.s32.f32 %v1590
        %v2103 = vcvt.s32.f32 %v1591
        %v2104 = vcvt.s32.f32 %v1592
        %v2105 = vcvt.s32.f32 %v1593
        %v2106 = vcvt.s32.f32 %v1594
        %v2107 = vcvt.s32.f32 %v1595
        %v2108 = vcvt.s32.f32 %v1596
        %v2109 = vcvt.s32.f32 %v1597
        %v2110 = vcvt.s32.f32 %v1598
        %v2111 = vcvt.s32.f32 %v1599
        %v2112 = vcvt.s32.f32 %v1600
        %v2113 = vcvt.s32.f32 %v1601
        %v2114 = vcvt.s32.f32 %v1602
        %v2115 = vcvt.s32.f32 %v1603
        %v2116 = vcvt.s32.f32 %v1604
        %v2117 = vcvt.s32.f32 %v1605
        %v2118 = vcvt.s32.f32 %v1606
        %v2119 = vcvt.s32.f32 %v1607
        %v2120 = vcvt.s32.f32 %v1608
        %v2121 = vcvt.s32.f32 %v1609
        %v2122 = vcvt.s32.f32 %v1610
        %v2123 = vcvt.s32.f32 %v1611
        %v2124 = vcvt.s32.f32 %v1612
        %v2125 = vcvt.s32.f32 %v1613
        %v2126 = vcvt.s32.f32 %v1614
        %v2127 = vcvt.s32.f32 %v1615
        %v2128 = vcvt.s32.f32 %v1616
        %v2129 = vcvt.s32.f32 %v1617
        %v2130 = vcvt.s32.f32 %v1618
        %v2131 = vcvt.s32.f32 %v1619
        %v2132 = vcvt.s32.f32 %v1620
        %v2133 = vcvt.s32.f32 %v1621
        %v2134 = vcvt.s32.f32 %v1622
        %v2135 = vcvt.s32.f32 %v1623
        %v2136 = vcvt.s32.f32 %v1624
        %v2137 = vcvt.s32.f32 %v1625
        %v2138 = vcvt.s32.f32 %v1626
        %v2139 = vcvt.s32.f32 %v1627
        %v2140 = vcvt.s32.f32 %v1628
        %v2141 = vcvt.s32.f32 %v1629
        %v2142 = vcvt.s32.f32 %v1630
        %v2143 = vcvt.s32.f32 %v1631
        %v2144 = vcvt.s32.f32 %v1632
        %v2145 = vcvt.s32.f32 %v1633
        %v2146 = vcvt.s32.f32 %v1634
        %v2147 = vcvt.s32.f32 %v1635
        %v2148 = vcvt.s32.f32 %v1636
        %v2149 = vcvt.s32.f32 %v1637
        %v2150 = vcvt.s32.f32 %v1638
        %v2151 = vcvt.s32.f32 %v1639
        %v2152 = vcvt.s32.f32 %v1640
        %v2153 = vcvt.s32.f32 %v1641
        %v2154 = vcvt.s32.f32 %v1642
        %v2155 = vcvt.s32.f32 %v1643
        %v2156 = vcvt.s32.f32 %v1644
        %v2157 = vcvt.s32.f32 %v1645
        %v2158 = vcvt.s32.f32 %v1646
        %v2159 = vcvt.s32.f32 %v1647
        %v2160 = vcvt.s32.f32 %v1648
        %v2161 = vcvt.s32.f32 %v1649
        %v2162 = vcvt.s32.f32 %v1650
        %v2163 = vcvt.s32.f32 %v1651
        %v2164 = vcvt.s32.f32 %v1652
        %v2165 = vcvt.s32.f32 %v1653
        %v2166 = vcvt.s32.f32 %v1654
        %v2167 = vcvt.s32.f32 %v1655
        %v2168 = vcvt.s32.f32 %v1656
        %v2169 = vcvt.s32.f32 %v1657
        %v2170 = vcvt.s32.f32 %v1658
        %v2171 = vcvt.s32.f32 %v1659
        %v2172 = vcvt.s32.f32 %v1660
        %v2173 = vcvt.s32.f32 %v1661
        %v2174 = vcvt.s32.f32 %v1662
        %v2175 = vcvt.s32.f32 %v1663
        %v2176 = vcvt.s32.f32 %v1664
        %v2177 = vcvt.s32.f32 %v1665
        %v2178 = vcvt.s32.f32 %v1666
        %v2179 = vcvt.s32.f32 %v1667
        %v2180 = vcvt.s32.f32 %v1668
        %v2181 = vcvt.s32.f32 %v1669
        %v2182 = vcvt.s32.f32 %v1670
        %v2183 = vcvt.s32.f32 %v1671
        %v2184 = vcvt.s32.f32 %v1672
        %v2185 = vcvt.s32.f32 %v1673
        %v2186 = vcvt.s32.f32 %v1674
        %v2187 = vcvt.s32.f32 %v1675
        %v2188 = vcvt.s32.f32 %v1676
        %v2189 = vcvt.s32.f32 %v1677
        %v2190 = vcvt.s32.f32 %v1678
        %v2191 = vcvt.s32.f32 %v1679
        %v2192 = vcvt.s32.f32 %v1680
        %v2193 = vcvt.s32.f32 %v1681
        %v2194 = vcvt.s32.f32 %v1682
        %v2195 = vcvt.s32.f32 %v1683
        %v2196 = vcvt.s32.f32 %v1684
        %v2197 = vcvt.s32.f32 %v1685
        %v2198 = vcvt.s32.f32 %v1686
        %v2199 = vcvt.s32.f32 %v1687
        %v2200 = vcvt.s32.f32 %v1688
        %v2201 = vcvt.s32.f32 %v1689
        %v2202 = vcvt.s32.f32 %v1690
        %v2203 = vcvt.s32.f32 %v1691
        %v2204 = vcvt.s32.f32 %v1692
        %v2205 = vcvt.s32.f32 %v1693
        %v2206 = vcvt.s32.f32 %v1694
        %v2207 = vcvt.s32.f32 %v1695
        %v2208 = vcvt.s32.f32 %v1696
        %v2209 = vcvt.s32.f32 %v1697
        %v2210 = vcvt.s32.f32 %v1698
        %v2211 = vcvt.s32.f32 %v1699
        %v2212 = vcvt.s32.f32 %v1700
        %v2213 = vcvt.s32.f32 %v1701
        %v2214 = vcvt.s32.f32 %v1702
        %v2215 = vcvt.s32.f32 %v1703
        %v2216 = vcvt.s32.f32 %v1704
        %v2217 = vcvt.s32.f32 %v1705
        %v2218 = vcvt.s32.f32 %v1706
        %v2219 = vcvt.s32.f32 %v1707
        %v2220 = vcvt.s32.f32 %v1708
        %v2221 = vcvt.s32.f32 %v1709
        %v2222 = vcvt.s32.f32 %v1710
        %v2223 = vcvt.s32.f32 %v1711
        %v2224 = vcvt.s32.f32 %v1712
        %v2225 = vcvt.s32.f32 %v1713
        %v2226 = vcvt.s32.f32 %v1714
        %v2227 = vcvt.s32.f32 %v1715
        %v2228 = vcvt.s32.f32 %v1716
        %v2229 = vcvt.s32.f32 %v1717
        %v2230 = vcvt.s32.f32 %v1718
        %v2231 = vcvt.s32.f32 %v1719
        %v2232 = vcvt.s32.f32 %v1720
        %v2233 = vcvt.s32.f32 %v1721
        %v2234 = vcvt.s32.f32 %v1722
        %v2235 = vcvt.s32.f32 %v1723
        %v2236 = vcvt.s32.f32 %v1724
        %v2237 = vcvt.s32.f32 %v1725
        %v2238 = vcvt.s32.f32 %v1726
        %v2239 = vcvt.s32.f32 %v1727
        %v2240 = vcvt.s32.f32 %v1728
        %v2241 = vcvt.s32.f32 %v1729
        %v2242 = vcvt.s32.f32 %v1730
        %v2243 = vcvt.s32.f32 %v1731
        %v2244 = vcvt.s32.f32 %v1732
        %v2245 = vcvt.s32.f32 %v1733
        %v2246 = vcvt.s32.f32 %v1734
        %v2247 = vcvt.s32.f32 %v1735
        %v2248 = vcvt.s32.f32 %v1736
        %v2249 = vcvt.s32.f32 %v1737
        %v2250 = vcvt.s32.f32 %v1738
        %v2251 = vcvt.s32.f32 %v1739
        %v2252 = vcvt.s32.f32 %v1740
        %v2253 = vcvt.s32.f32 %v1741
        %v2254 = vcvt.s32.f32 %v1742
        %v2255 = vcvt.s32.f32 %v1743
        %v2256 = vcvt.s32.f32 %v1744
        %v2257 = vcvt.s32.f32 %v1745
        %v2258 = vcvt.s32.f32 %v1746
        %v2259 = vcvt.s32.f32 %v1747
        %v2260 = vcvt.s32.f32 %v1748
        %v2261 = vcvt.s32.f32 %v1749
        %v2262 = vcvt.s32.f32 %v1750
        %v2263 = vcvt.s32.f32 %v1751
        %v2264 = vcvt.s32.f32 %v1752
        %v2265 = vcvt.s32.f32 %v1753
        %v2266 = vcvt.s32.f32 %v1754
        %v2267 = vcvt.s32.f32 %v1755
        %v2268 = vcvt.s32.f32 %v1756
        %v2269 = vcvt.s32.f32 %v1757
        %v2270 = vcvt.s32.f32 %v1758
        %v2271 = vcvt.s32.f32 %v1759
        %v2272 = vcvt.s32.f32 %v1760
        %v2273 = vcvt.s32.f32 %v1761
        %v2274 = vcvt.s32.f32 %v1762
        %v2275 = vcvt.s32.f32 %v1763
        %v2276 = vcvt.s32.f32 %v1764
        %v2277 = vcvt.s32.f32 %v1765
        %v2278 = vcvt.s32.f32 %v1766
        %v2279 = vcvt.s32.f32 %v1767
        %v2280 = vcvt.s32.f32 %v1768
        %v2281 = vcvt.s32.f32 %v1769
        %v2282 = vcvt.s32.f32 %v1770
        %v2283 = vcvt.s32.f32 %v1771
        %v2284 = vcvt.s32.f32 %v1772
        %v2285 = vcvt.s32.f32 %v1773
        %v2286 = vcvt.s32.f32 %v1774
        %v2287 = vcvt.s32.f32 %v1775
        %v2288 = vcvt.s32.f32 %v1776
        %v2289 = vcvt.s32.f32 %v1777
        %v2290 = vcvt.s32.f32 %v1778
        %v2291 = vcvt.s32.f32 %v1779
        %v2292 = vcvt.s32.f32 %v1780
        %v2293 = vcvt.s32.f32 %v1781
        %v2294 = vcvt.s32.f32 %v1782
        %v2295 = vcvt.s32.f32 %v1783
        %v2296 = vcvt.s32.f32 %v1784
        %v2297 = vcvt.s32.f32 %v1785
        %v2298 = vcvt.s32.f32 %v1786
        %v2299 = vcvt.s32.f32 %v1787
        %v2300 = vcvt.s32.f32 %v1788
        %v2301 = vcvt.s32.f32 %v1789
        %v2302 = vcvt.s32.f32 %v1790
        %v2303 = vcvt.s32.f32 %v1791
        %v2304 = vcvt.s32.f32 %v1792
        %v2305 = vcvt.s32.f32 %v1793
        %v2306 = vcvt.s32.f32 %v1794
        %v2307 = vcvt.s32.f32 %v1795
        %v2308 = vcvt.s32.f32 %v1796
        %v2309 = vcvt.s32.f32 %v1797
        %v2310 = vcvt.s32.f32 %v1798
        %v2311 = vcvt.s32.f32 %v1799
        %v2312 = vcvt.s32.f32 %v1800
        %v2313 = vcvt.s32.f32 %v1801
        %v2314 = vcvt.s32.f32 %v1802
        %v2315 = vcvt.s32.f32 %v1803
        %v2316 = vcvt.s32.f32 %v1804
        %v2317 = vcvt.s32.f32 %v1805
        %v2318 = vcvt.s32.f32 %v1806
        %v2319 = vcvt.s32.f32 %v1807
        %v2320 = vcvt.s32.f32 %v1808
        %v2321 = vcvt.s32.f32 %v1809
        %v2322 = vcvt.s32.f32 %v1810
        %v2323 = vcvt.s32.f32 %v1811
        %v2324 = vcvt.s32.f32 %v1812
        %v2325 = vcvt.s32.f32 %v1813
        %v2326 = vcvt.s32.f32 %v1814
        %v2327 = vcvt.s32.f32 %v1815
        %v2328 = vcvt.s32.f32 %v1816
        %v2329 = vcvt.s32.f32 %v1817
        %v2330 = vcvt.s32.f32 %v1818
        %v2331 = vcvt.s32.f32 %v1819
        %v2332 = vcvt.s32.f32 %v1820
        %v2333 = vcvt.s32.f32 %v1821
        %v2334 = vcvt.s32.f32 %v1822
        %v2335 = vcvt.s32.f32 %v1823
        %v2336 = vcvt.s32.f32 %v1824
        %v2337 = vcvt.s32.f32 %v1825
        %v2338 = vcvt.s32.f32 %v1826
        %v2339 = vcvt.s32.f32 %v1827
        %v2340 = vcvt.s32.f32 %v1828
        %v2341 = vcvt.s32.f32 %v1829
        %v2342 = vcvt.s32.f32 %v1830
        %v2343 = vcvt.s32.f32 %v1831
        %v2344 = vcvt.s32.f32 %v1832
        %v2345 = vcvt.s32.f32 %v1833
        %v2346 = vcvt.s32.f32 %v1834
        %v2347 = vcvt.s32.f32 %v1835
        %v2348 = vcvt.s32.f32 %v1836
        %v2349 = vcvt.s32.f32 %v1837
        %v2350 = vcvt.s32.f32 %v1838
        %v2351 = vcvt.s32.f32 %v1839
        %v2352 = vcvt.s32.f32 %v1840
        %v2353 = vcvt.s32.f32 %v1841
        %v2354 = vcvt.s32.f32 %v1842
        %v2355 = vcvt.s32.f32 %v1843
        %v2356 = vcvt.s32.f32 %v1844
        %v2357 = vcvt.s32.f32 %v1845
        %v2358 = vcvt.s32.f32 %v1846
        %v2359 = vcvt.s32.f32 %v1847
        %v2360 = vcvt.s32.f32 %v1848
        %v2361 = vcvt.s32.f32 %v1849
        %v2362 = vcvt.s32.f32 %v1850
        %v2363 = vcvt.s32.f32 %v1851
        %v2364 = vcvt.s32.f32 %v1852
        %v2365 = vcvt.s32.f32 %v1853
        %v2366 = vcvt.s32.f32 %v1854
        %v2367 = vcvt.s32.f32 %v1855
        %v2368 = vcvt.s32.f32 %v1856
        %v2369 = vcvt.s32.f32 %v1857
        %v2370 = vcvt.s32.f32 %v1858
        %v2371 = vcvt.s32.f32 %v1859
        %v2372 = vcvt.s32.f32 %v1860
        %v2373 = vcvt.s32.f32 %v1861
        %v2374 = vcvt.s32.f32 %v1862
        %v2375 = vcvt.s32.f32 %v1863
        %v2376 = vcvt.s32.f32 %v1864
        %v2377 = vcvt.s32.f32 %v1865
        %v2378 = vcvt.s32.f32 %v1866
        %v2379 = vcvt.s32.f32 %v1867
        %v2380 = vcvt.s32.f32 %v1868
        %v2381 = vcvt.s32.f32 %v1869
        %v2382 = vcvt.s32.f32 %v1870
        %v2383 = vcvt.s32.f32 %v1871
        %v2384 = vcvt.s32.f32 %v1872
        %v2385 = vcvt.s32.f32 %v1873
        %v2386 = vcvt.s32.f32 %v1874
        %v2387 = vcvt.s32.f32 %v1875
        %v2388 = vcvt.s32.f32 %v1876
        %v2389 = vcvt.s32.f32 %v1877
        %v2390 = vcvt.s32.f32 %v1878
        %v2391 = vcvt.s32.f32 %v1879
        %v2392 = vcvt.s32.f32 %v1880
        %v2393 = vcvt.s32.f32 %v1881
        %v2394 = vcvt.s32.f32 %v1882
        %v2395 = vcvt.s32.f32 %v1883
        %v2396 = vcvt.s32.f32 %v1884
        %v2397 = vcvt.s32.f32 %v1885
        %v2398 = vcvt.s32.f32 %v1886
        %v2399 = vcvt.s32.f32 %v1887
        %v2400 = vcvt.s32.f32 %v1888
        %v2401 = vcvt.s32.f32 %v1889
        %v2402 = vcvt.s32.f32 %v1890
        %v2403 = vcvt.s32.f32 %v1891
        %v2404 = vcvt.s32.f32 %v1892
        %v2405 = vcvt.s32.f32 %v1893
        %v2406 = vcvt.s32.f32 %v1894
        %v2407 = vcvt.s32.f32 %v1895
        %v2408 = vcvt.s32.f32 %v1896
        %v2409 = vcvt.s32.f32 %v1897
        %v2410 = vcvt.s32.f32 %v1898
        %v2411 = vcvt.s32.f32 %v1899
        %v2412 = vcvt.s32.f32 %v1900
        %v2413 = vcvt.s32.f32 %v1901
        %v2414 = vcvt.s32.f32 %v1902
        %v2415 = vcvt.s32.f32 %v1903
        %v2416 = vcvt.s32.f32 %v1904
        %v2417 = vcvt.s32.f32 %v1905
        %v2418 = vlaneseq
        %v2419 = vshrl.u32 %v2418, 7
        %v2420 = vsub.s32 0, %v2419
        %v2421 = vrot.slane %v340, %v2420
        %2423 = vbcast.lane.b32.xlu0 %v2421, 256
        %v2424 = vpop.permute.xlu0 %2423
        %s2426 = sor.u32 256, 8
        %2427 = vbcast.lane.b32.xlu0 %v2421, %s2426
        %v2428 = vpop.permute.xlu0 %2427
        %s2430 = sor.u32 256, 16
        %2431 = vbcast.lane.b32.xlu0 %v2421, %s2430
        %v2432 = vpop.permute.xlu0 %2431
        %s2434 = sor.u32 256, 24
        %2435 = vbcast.lane.b32.xlu0 %v2421, %s2434
        %v2436 = vpop.permute.xlu0 %2435
        %s2438 = sor.u32 256, 32
        %2439 = vbcast.lane.b32.xlu0 %v2421, %s2438
        %v2440 = vpop.permute.xlu0 %2439
        %s2442 = sor.u32 256, 40
        %2443 = vbcast.lane.b32.xlu0 %v2421, %s2442
        %v2444 = vpop.permute.xlu0 %2443
        %s2446 = sor.u32 256, 48
        %2447 = vbcast.lane.b32.xlu0 %v2421, %s2446
        %v2448 = vpop.permute.xlu0 %2447
        %s2450 = sor.u32 256, 56
        %2451 = vbcast.lane.b32.xlu0 %v2421, %s2450
        %v2452 = vpop.permute.xlu0 %2451
        %s2454 = sor.u32 256, 64
        %2455 = vbcast.lane.b32.xlu0 %v2421, %s2454
        %v2456 = vpop.permute.xlu0 %2455
        %s2458 = sor.u32 256, 72
        %2459 = vbcast.lane.b32.xlu0 %v2421, %s2458
        %v2460 = vpop.permute.xlu0 %2459
        %s2462 = sor.u32 256, 80
        %2463 = vbcast.lane.b32.xlu0 %v2421, %s2462
        %v2464 = vpop.permute.xlu0 %2463
        %s2466 = sor.u32 256, 88
        %2467 = vbcast.lane.b32.xlu0 %v2421, %s2466
        %v2468 = vpop.permute.xlu0 %2467
        %s2470 = sor.u32 256, 96
        %2471 = vbcast.lane.b32.xlu0 %v2421, %s2470
        %v2472 = vpop.permute.xlu0 %2471
        %s2474 = sor.u32 256, 104
        %2475 = vbcast.lane.b32.xlu0 %v2421, %s2474
        %v2476 = vpop.permute.xlu0 %2475
        %s2478 = sor.u32 256, 112
        %2479 = vbcast.lane.b32.xlu0 %v2421, %s2478
        %v2480 = vpop.permute.xlu0 %2479
        %s2482 = sor.u32 256, 120
        %2483 = vbcast.lane.b32.xlu0 %v2421, %s2482
        %v2484 = vpop.permute.xlu0 %2483
        %v2485 = vlaneseq
        %v2486 = vshrl.u32 %v2485, 7
        %v2487 = vsub.s32 1, %v2486
        %v2488 = vrot.slane %v340, %v2487
        %2490 = vbcast.lane.b32.xlu0 %v2488, 256
        %v2491 = vpop.permute.xlu0 %2490
        %s2493 = sor.u32 256, 8
        %2494 = vbcast.lane.b32.xlu0 %v2488, %s2493
        %v2495 = vpop.permute.xlu0 %2494
        %s2497 = sor.u32 256, 16
        %2498 = vbcast.lane.b32.xlu0 %v2488, %s2497
        %v2499 = vpop.permute.xlu0 %2498
        %s2501 = sor.u32 256, 24
        %2502 = vbcast.lane.b32.xlu0 %v2488, %s2501
        %v2503 = vpop.permute.xlu0 %2502
        %s2505 = sor.u32 256, 32
        %2506 = vbcast.lane.b32.xlu0 %v2488, %s2505
        %v2507 = vpop.permute.xlu0 %2506
        %s2509 = sor.u32 256, 40
        %2510 = vbcast.lane.b32.xlu0 %v2488, %s2509
        %v2511 = vpop.permute.xlu0 %2510
        %s2513 = sor.u32 256, 48
        %2514 = vbcast.lane.b32.xlu0 %v2488, %s2513
        %v2515 = vpop.permute.xlu0 %2514
        %s2517 = sor.u32 256, 56
        %2518 = vbcast.lane.b32.xlu0 %v2488, %s2517
        %v2519 = vpop.permute.xlu0 %2518
        %s2521 = sor.u32 256, 64
        %2522 = vbcast.lane.b32.xlu0 %v2488, %s2521
        %v2523 = vpop.permute.xlu0 %2522
        %s2525 = sor.u32 256, 72
        %2526 = vbcast.lane.b32.xlu0 %v2488, %s2525
        %v2527 = vpop.permute.xlu0 %2526
        %s2529 = sor.u32 256, 80
        %2530 = vbcast.lane.b32.xlu0 %v2488, %s2529
        %v2531 = vpop.permute.xlu0 %2530
        %s2533 = sor.u32 256, 88
        %2534 = vbcast.lane.b32.xlu0 %v2488, %s2533
        %v2535 = vpop.permute.xlu0 %2534
        %s2537 = sor.u32 256, 96
        %2538 = vbcast.lane.b32.xlu0 %v2488, %s2537
        %v2539 = vpop.permute.xlu0 %2538
        %s2541 = sor.u32 256, 104
        %2542 = vbcast.lane.b32.xlu0 %v2488, %s2541
        %v2543 = vpop.permute.xlu0 %2542
        %s2545 = sor.u32 256, 112
        %2546 = vbcast.lane.b32.xlu0 %v2488, %s2545
        %v2547 = vpop.permute.xlu0 %2546
        %s2549 = sor.u32 256, 120
        %2550 = vbcast.lane.b32.xlu0 %v2488, %s2549
        %v2551 = vpop.permute.xlu0 %2550
        %v2552 = vlaneseq
        %v2553 = vshrl.u32 %v2552, 7
        %v2554 = vsub.s32 2, %v2553
        %v2555 = vrot.slane %v340, %v2554
        %2557 = vbcast.lane.b32.xlu0 %v2555, 256
        %v2558 = vpop.permute.xlu0 %2557
        %s2560 = sor.u32 256, 8
        %2561 = vbcast.lane.b32.xlu0 %v2555, %s2560
        %v2562 = vpop.permute.xlu0 %2561
        %s2564 = sor.u32 256, 16
        %2565 = vbcast.lane.b32.xlu0 %v2555, %s2564
        %v2566 = vpop.permute.xlu0 %2565
        %s2568 = sor.u32 256, 24
        %2569 = vbcast.lane.b32.xlu0 %v2555, %s2568
        %v2570 = vpop.permute.xlu0 %2569
        %s2572 = sor.u32 256, 32
        %2573 = vbcast.lane.b32.xlu0 %v2555, %s2572
        %v2574 = vpop.permute.xlu0 %2573
        %s2576 = sor.u32 256, 40
        %2577 = vbcast.lane.b32.xlu0 %v2555, %s2576
        %v2578 = vpop.permute.xlu0 %2577
        %s2580 = sor.u32 256, 48
        %2581 = vbcast.lane.b32.xlu0 %v2555, %s2580
        %v2582 = vpop.permute.xlu0 %2581
        %s2584 = sor.u32 256, 56
        %2585 = vbcast.lane.b32.xlu0 %v2555, %s2584
        %v2586 = vpop.permute.xlu0 %2585
        %s2588 = sor.u32 256, 64
        %2589 = vbcast.lane.b32.xlu0 %v2555, %s2588
        %v2590 = vpop.permute.xlu0 %2589
        %s2592 = sor.u32 256, 72
        %2593 = vbcast.lane.b32.xlu0 %v2555, %s2592
        %v2594 = vpop.permute.xlu0 %2593
        %s2596 = sor.u32 256, 80
        %2597 = vbcast.lane.b32.xlu0 %v2555, %s2596
        %v2598 = vpop.permute.xlu0 %2597
        %s2600 = sor.u32 256, 88
        %2601 = vbcast.lane.b32.xlu0 %v2555, %s2600
        %v2602 = vpop.permute.xlu0 %2601
        %s2604 = sor.u32 256, 96
        %2605 = vbcast.lane.b32.xlu0 %v2555, %s2604
        %v2606 = vpop.permute.xlu0 %2605
        %s2608 = sor.u32 256, 104
        %2609 = vbcast.lane.b32.xlu0 %v2555, %s2608
        %v2610 = vpop.permute.xlu0 %2609
        %s2612 = sor.u32 256, 112
        %2613 = vbcast.lane.b32.xlu0 %v2555, %s2612
        %v2614 = vpop.permute.xlu0 %2613
        %s2616 = sor.u32 256, 120
        %2617 = vbcast.lane.b32.xlu0 %v2555, %s2616
        %v2618 = vpop.permute.xlu0 %2617
        %v2619 = vlaneseq
        %v2620 = vshrl.u32 %v2619, 7
        %v2621 = vsub.s32 3, %v2620
        %v2622 = vrot.slane %v340, %v2621
        %2624 = vbcast.lane.b32.xlu0 %v2622, 256
        %v2625 = vpop.permute.xlu0 %2624
        %s2627 = sor.u32 256, 8
        %2628 = vbcast.lane.b32.xlu0 %v2622, %s2627
        %v2629 = vpop.permute.xlu0 %2628
        %s2631 = sor.u32 256, 16
        %2632 = vbcast.lane.b32.xlu0 %v2622, %s2631
        %v2633 = vpop.permute.xlu0 %2632
        %s2635 = sor.u32 256, 24
        %2636 = vbcast.lane.b32.xlu0 %v2622, %s2635
        %v2637 = vpop.permute.xlu0 %2636
        %s2639 = sor.u32 256, 32
        %2640 = vbcast.lane.b32.xlu0 %v2622, %s2639
        %v2641 = vpop.permute.xlu0 %2640
        %s2643 = sor.u32 256, 40
        %2644 = vbcast.lane.b32.xlu0 %v2622, %s2643
        %v2645 = vpop.permute.xlu0 %2644
        %s2647 = sor.u32 256, 48
        %2648 = vbcast.lane.b32.xlu0 %v2622, %s2647
        %v2649 = vpop.permute.xlu0 %2648
        %s2651 = sor.u32 256, 56
        %2652 = vbcast.lane.b32.xlu0 %v2622, %s2651
        %v2653 = vpop.permute.xlu0 %2652
        %s2655 = sor.u32 256, 64
        %2656 = vbcast.lane.b32.xlu0 %v2622, %s2655
        %v2657 = vpop.permute.xlu0 %2656
        %s2659 = sor.u32 256, 72
        %2660 = vbcast.lane.b32.xlu0 %v2622, %s2659
        %v2661 = vpop.permute.xlu0 %2660
        %s2663 = sor.u32 256, 80
        %2664 = vbcast.lane.b32.xlu0 %v2622, %s2663
        %v2665 = vpop.permute.xlu0 %2664
        %s2667 = sor.u32 256, 88
        %2668 = vbcast.lane.b32.xlu0 %v2622, %s2667
        %v2669 = vpop.permute.xlu0 %2668
        %s2671 = sor.u32 256, 96
        %2672 = vbcast.lane.b32.xlu0 %v2622, %s2671
        %v2673 = vpop.permute.xlu0 %2672
        %s2675 = sor.u32 256, 104
        %2676 = vbcast.lane.b32.xlu0 %v2622, %s2675
        %v2677 = vpop.permute.xlu0 %2676
        %s2679 = sor.u32 256, 112
        %2680 = vbcast.lane.b32.xlu0 %v2622, %s2679
        %v2681 = vpop.permute.xlu0 %2680
        %s2683 = sor.u32 256, 120
        %2684 = vbcast.lane.b32.xlu0 %v2622, %s2683
        %v2685 = vpop.permute.xlu0 %2684
        %v2686 = vlaneseq
        %v2687 = vshrl.u32 %v2686, 7
        %v2688 = vsub.s32 4, %v2687
        %v2689 = vrot.slane %v340, %v2688
        %2691 = vbcast.lane.b32.xlu0 %v2689, 256
        %v2692 = vpop.permute.xlu0 %2691
        %s2694 = sor.u32 256, 8
        %2695 = vbcast.lane.b32.xlu0 %v2689, %s2694
        %v2696 = vpop.permute.xlu0 %2695
        %s2698 = sor.u32 256, 16
        %2699 = vbcast.lane.b32.xlu0 %v2689, %s2698
        %v2700 = vpop.permute.xlu0 %2699
        %s2702 = sor.u32 256, 24
        %2703 = vbcast.lane.b32.xlu0 %v2689, %s2702
        %v2704 = vpop.permute.xlu0 %2703
        %s2706 = sor.u32 256, 32
        %2707 = vbcast.lane.b32.xlu0 %v2689, %s2706
        %v2708 = vpop.permute.xlu0 %2707
        %s2710 = sor.u32 256, 40
        %2711 = vbcast.lane.b32.xlu0 %v2689, %s2710
        %v2712 = vpop.permute.xlu0 %2711
        %s2714 = sor.u32 256, 48
        %2715 = vbcast.lane.b32.xlu0 %v2689, %s2714
        %v2716 = vpop.permute.xlu0 %2715
        %s2718 = sor.u32 256, 56
        %2719 = vbcast.lane.b32.xlu0 %v2689, %s2718
        %v2720 = vpop.permute.xlu0 %2719
        %s2722 = sor.u32 256, 64
        %2723 = vbcast.lane.b32.xlu0 %v2689, %s2722
        %v2724 = vpop.permute.xlu0 %2723
        %s2726 = sor.u32 256, 72
        %2727 = vbcast.lane.b32.xlu0 %v2689, %s2726
        %v2728 = vpop.permute.xlu0 %2727
        %s2730 = sor.u32 256, 80
        %2731 = vbcast.lane.b32.xlu0 %v2689, %s2730
        %v2732 = vpop.permute.xlu0 %2731
        %s2734 = sor.u32 256, 88
        %2735 = vbcast.lane.b32.xlu0 %v2689, %s2734
        %v2736 = vpop.permute.xlu0 %2735
        %s2738 = sor.u32 256, 96
        %2739 = vbcast.lane.b32.xlu0 %v2689, %s2738
        %v2740 = vpop.permute.xlu0 %2739
        %s2742 = sor.u32 256, 104
        %2743 = vbcast.lane.b32.xlu0 %v2689, %s2742
        %v2744 = vpop.permute.xlu0 %2743
        %s2746 = sor.u32 256, 112
        %2747 = vbcast.lane.b32.xlu0 %v2689, %s2746
        %v2748 = vpop.permute.xlu0 %2747
        %s2750 = sor.u32 256, 120
        %2751 = vbcast.lane.b32.xlu0 %v2689, %s2750
        %v2752 = vpop.permute.xlu0 %2751
        %v2753 = vlaneseq
        %v2754 = vshrl.u32 %v2753, 7
        %v2755 = vsub.s32 5, %v2754
        %v2756 = vrot.slane %v340, %v2755
        %2758 = vbcast.lane.b32.xlu0 %v2756, 256
        %v2759 = vpop.permute.xlu0 %2758
        %s2761 = sor.u32 256, 8
        %2762 = vbcast.lane.b32.xlu0 %v2756, %s2761
        %v2763 = vpop.permute.xlu0 %2762
        %s2765 = sor.u32 256, 16
        %2766 = vbcast.lane.b32.xlu0 %v2756, %s2765
        %v2767 = vpop.permute.xlu0 %2766
        %s2769 = sor.u32 256, 24
        %2770 = vbcast.lane.b32.xlu0 %v2756, %s2769
        %v2771 = vpop.permute.xlu0 %2770
        %s2773 = sor.u32 256, 32
        %2774 = vbcast.lane.b32.xlu0 %v2756, %s2773
        %v2775 = vpop.permute.xlu0 %2774
        %s2777 = sor.u32 256, 40
        %2778 = vbcast.lane.b32.xlu0 %v2756, %s2777
        %v2779 = vpop.permute.xlu0 %2778
        %s2781 = sor.u32 256, 48
        %2782 = vbcast.lane.b32.xlu0 %v2756, %s2781
        %v2783 = vpop.permute.xlu0 %2782
        %s2785 = sor.u32 256, 56
        %2786 = vbcast.lane.b32.xlu0 %v2756, %s2785
        %v2787 = vpop.permute.xlu0 %2786
        %s2789 = sor.u32 256, 64
        %2790 = vbcast.lane.b32.xlu0 %v2756, %s2789
        %v2791 = vpop.permute.xlu0 %2790
        %s2793 = sor.u32 256, 72
        %2794 = vbcast.lane.b32.xlu0 %v2756, %s2793
        %v2795 = vpop.permute.xlu0 %2794
        %s2797 = sor.u32 256, 80
        %2798 = vbcast.lane.b32.xlu0 %v2756, %s2797
        %v2799 = vpop.permute.xlu0 %2798
        %s2801 = sor.u32 256, 88
        %2802 = vbcast.lane.b32.xlu0 %v2756, %s2801
        %v2803 = vpop.permute.xlu0 %2802
        %s2805 = sor.u32 256, 96
        %2806 = vbcast.lane.b32.xlu0 %v2756, %s2805
        %v2807 = vpop.permute.xlu0 %2806
        %s2809 = sor.u32 256, 104
        %2810 = vbcast.lane.b32.xlu0 %v2756, %s2809
        %v2811 = vpop.permute.xlu0 %2810
        %s2813 = sor.u32 256, 112
        %2814 = vbcast.lane.b32.xlu0 %v2756, %s2813
        %v2815 = vpop.permute.xlu0 %2814
        %s2817 = sor.u32 256, 120
        %2818 = vbcast.lane.b32.xlu0 %v2756, %s2817
        %v2819 = vpop.permute.xlu0 %2818
        %v2820 = vlaneseq
        %v2821 = vshrl.u32 %v2820, 7
        %v2822 = vsub.s32 6, %v2821
        %v2823 = vrot.slane %v340, %v2822
        %2825 = vbcast.lane.b32.xlu0 %v2823, 256
        %v2826 = vpop.permute.xlu0 %2825
        %s2828 = sor.u32 256, 8
        %2829 = vbcast.lane.b32.xlu0 %v2823, %s2828
        %v2830 = vpop.permute.xlu0 %2829
        %s2832 = sor.u32 256, 16
        %2833 = vbcast.lane.b32.xlu0 %v2823, %s2832
        %v2834 = vpop.permute.xlu0 %2833
        %s2836 = sor.u32 256, 24
        %2837 = vbcast.lane.b32.xlu0 %v2823, %s2836
        %v2838 = vpop.permute.xlu0 %2837
        %s2840 = sor.u32 256, 32
        %2841 = vbcast.lane.b32.xlu0 %v2823, %s2840
        %v2842 = vpop.permute.xlu0 %2841
        %s2844 = sor.u32 256, 40
        %2845 = vbcast.lane.b32.xlu0 %v2823, %s2844
        %v2846 = vpop.permute.xlu0 %2845
        %s2848 = sor.u32 256, 48
        %2849 = vbcast.lane.b32.xlu0 %v2823, %s2848
        %v2850 = vpop.permute.xlu0 %2849
        %s2852 = sor.u32 256, 56
        %2853 = vbcast.lane.b32.xlu0 %v2823, %s2852
        %v2854 = vpop.permute.xlu0 %2853
        %s2856 = sor.u32 256, 64
        %2857 = vbcast.lane.b32.xlu0 %v2823, %s2856
        %v2858 = vpop.permute.xlu0 %2857
        %s2860 = sor.u32 256, 72
        %2861 = vbcast.lane.b32.xlu0 %v2823, %s2860
        %v2862 = vpop.permute.xlu0 %2861
        %s2864 = sor.u32 256, 80
        %2865 = vbcast.lane.b32.xlu0 %v2823, %s2864
        %v2866 = vpop.permute.xlu0 %2865
        %s2868 = sor.u32 256, 88
        %2869 = vbcast.lane.b32.xlu0 %v2823, %s2868
        %v2870 = vpop.permute.xlu0 %2869
        %s2872 = sor.u32 256, 96
        %2873 = vbcast.lane.b32.xlu0 %v2823, %s2872
        %v2874 = vpop.permute.xlu0 %2873
        %s2876 = sor.u32 256, 104
        %2877 = vbcast.lane.b32.xlu0 %v2823, %s2876
        %v2878 = vpop.permute.xlu0 %2877
        %s2880 = sor.u32 256, 112
        %2881 = vbcast.lane.b32.xlu0 %v2823, %s2880
        %v2882 = vpop.permute.xlu0 %2881
        %s2884 = sor.u32 256, 120
        %2885 = vbcast.lane.b32.xlu0 %v2823, %s2884
        %v2886 = vpop.permute.xlu0 %2885
        %v2887 = vlaneseq
        %v2888 = vshrl.u32 %v2887, 7
        %v2889 = vsub.s32 7, %v2888
        %v2890 = vrot.slane %v340, %v2889
        %2892 = vbcast.lane.b32.xlu0 %v2890, 256
        %v2893 = vpop.permute.xlu0 %2892
        %s2895 = sor.u32 256, 8
        %2896 = vbcast.lane.b32.xlu0 %v2890, %s2895
        %v2897 = vpop.permute.xlu0 %2896
        %s2899 = sor.u32 256, 16
        %2900 = vbcast.lane.b32.xlu0 %v2890, %s2899
        %v2901 = vpop.permute.xlu0 %2900
        %s2903 = sor.u32 256, 24
        %2904 = vbcast.lane.b32.xlu0 %v2890, %s2903
        %v2905 = vpop.permute.xlu0 %2904
        %s2907 = sor.u32 256, 32
        %2908 = vbcast.lane.b32.xlu0 %v2890, %s2907
        %v2909 = vpop.permute.xlu0 %2908
        %s2911 = sor.u32 256, 40
        %2912 = vbcast.lane.b32.xlu0 %v2890, %s2911
        %v2913 = vpop.permute.xlu0 %2912
        %s2915 = sor.u32 256, 48
        %2916 = vbcast.lane.b32.xlu0 %v2890, %s2915
        %v2917 = vpop.permute.xlu0 %2916
        %s2919 = sor.u32 256, 56
        %2920 = vbcast.lane.b32.xlu0 %v2890, %s2919
        %v2921 = vpop.permute.xlu0 %2920
        %s2923 = sor.u32 256, 64
        %2924 = vbcast.lane.b32.xlu0 %v2890, %s2923
        %v2925 = vpop.permute.xlu0 %2924
        %s2927 = sor.u32 256, 72
        %2928 = vbcast.lane.b32.xlu0 %v2890, %s2927
        %v2929 = vpop.permute.xlu0 %2928
        %s2931 = sor.u32 256, 80
        %2932 = vbcast.lane.b32.xlu0 %v2890, %s2931
        %v2933 = vpop.permute.xlu0 %2932
        %s2935 = sor.u32 256, 88
        %2936 = vbcast.lane.b32.xlu0 %v2890, %s2935
        %v2937 = vpop.permute.xlu0 %2936
        %s2939 = sor.u32 256, 96
        %2940 = vbcast.lane.b32.xlu0 %v2890, %s2939
        %v2941 = vpop.permute.xlu0 %2940
        %s2943 = sor.u32 256, 104
        %2944 = vbcast.lane.b32.xlu0 %v2890, %s2943
        %v2945 = vpop.permute.xlu0 %2944
        %s2947 = sor.u32 256, 112
        %2948 = vbcast.lane.b32.xlu0 %v2890, %s2947
        %v2949 = vpop.permute.xlu0 %2948
        %s2951 = sor.u32 256, 120
        %2952 = vbcast.lane.b32.xlu0 %v2890, %s2951
        %v2953 = vpop.permute.xlu0 %2952
        %v2954 = vmul.f32 %v1906, %v2424
        %v2955 = vmul.f32 %v1907, %v2424
        %v2956 = vmul.f32 %v1908, %v2424
        %v2957 = vmul.f32 %v1909, %v2424
        %v2958 = vmul.f32 %v1910, %v2428
        %v2959 = vmul.f32 %v1911, %v2428
        %v2960 = vmul.f32 %v1912, %v2428
        %v2961 = vmul.f32 %v1913, %v2428
        %v2962 = vmul.f32 %v1914, %v2432
        %v2963 = vmul.f32 %v1915, %v2432
        %v2964 = vmul.f32 %v1916, %v2432
        %v2965 = vmul.f32 %v1917, %v2432
        %v2966 = vmul.f32 %v1918, %v2436
        %v2967 = vmul.f32 %v1919, %v2436
        %v2968 = vmul.f32 %v1920, %v2436
        %v2969 = vmul.f32 %v1921, %v2436
        %v2970 = vmul.f32 %v1922, %v2440
        %v2971 = vmul.f32 %v1923, %v2440
        %v2972 = vmul.f32 %v1924, %v2440
        %v2973 = vmul.f32 %v1925, %v2440
        %v2974 = vmul.f32 %v1926, %v2444
        %v2975 = vmul.f32 %v1927, %v2444
        %v2976 = vmul.f32 %v1928, %v2444
        %v2977 = vmul.f32 %v1929, %v2444
        %v2978 = vmul.f32 %v1930, %v2448
        %v2979 = vmul.f32 %v1931, %v2448
        %v2980 = vmul.f32 %v1932, %v2448
        %v2981 = vmul.f32 %v1933, %v2448
        %v2982 = vmul.f32 %v1934, %v2452
        %v2983 = vmul.f32 %v1935, %v2452
        %v2984 = vmul.f32 %v1936, %v2452
        %v2985 = vmul.f32 %v1937, %v2452
        %v2986 = vmul.f32 %v1938, %v2456
        %v2987 = vmul.f32 %v1939, %v2456
        %v2988 = vmul.f32 %v1940, %v2456
        %v2989 = vmul.f32 %v1941, %v2456
        %v2990 = vmul.f32 %v1942, %v2460
        %v2991 = vmul.f32 %v1943, %v2460
        %v2992 = vmul.f32 %v1944, %v2460
        %v2993 = vmul.f32 %v1945, %v2460
        %v2994 = vmul.f32 %v1946, %v2464
        %v2995 = vmul.f32 %v1947, %v2464
        %v2996 = vmul.f32 %v1948, %v2464
        %v2997 = vmul.f32 %v1949, %v2464
        %v2998 = vmul.f32 %v1950, %v2468
        %v2999 = vmul.f32 %v1951, %v2468
        %v3000 = vmul.f32 %v1952, %v2468
        %v3001 = vmul.f32 %v1953, %v2468
        %v3002 = vmul.f32 %v1954, %v2472
        %v3003 = vmul.f32 %v1955, %v2472
        %v3004 = vmul.f32 %v1956, %v2472
        %v3005 = vmul.f32 %v1957, %v2472
        %v3006 = vmul.f32 %v1958, %v2476
        %v3007 = vmul.f32 %v1959, %v2476
        %v3008 = vmul.f32 %v1960, %v2476
        %v3009 = vmul.f32 %v1961, %v2476
        %v3010 = vmul.f32 %v1962, %v2480
        %v3011 = vmul.f32 %v1963, %v2480
        %v3012 = vmul.f32 %v1964, %v2480
        %v3013 = vmul.f32 %v1965, %v2480
        %v3014 = vmul.f32 %v1966, %v2484
        %v3015 = vmul.f32 %v1967, %v2484
        %v3016 = vmul.f32 %v1968, %v2484
        %v3017 = vmul.f32 %v1969, %v2484
        %v3018 = vmul.f32 %v1970, %v2491
        %v3019 = vmul.f32 %v1971, %v2491
        %v3020 = vmul.f32 %v1972, %v2491
        %v3021 = vmul.f32 %v1973, %v2491
        %v3022 = vmul.f32 %v1974, %v2495
        %v3023 = vmul.f32 %v1975, %v2495
        %v3024 = vmul.f32 %v1976, %v2495
        %v3025 = vmul.f32 %v1977, %v2495
        %v3026 = vmul.f32 %v1978, %v2499
        %v3027 = vmul.f32 %v1979, %v2499
        %v3028 = vmul.f32 %v1980, %v2499
        %v3029 = vmul.f32 %v1981, %v2499
        %v3030 = vmul.f32 %v1982, %v2503
        %v3031 = vmul.f32 %v1983, %v2503
        %v3032 = vmul.f32 %v1984, %v2503
        %v3033 = vmul.f32 %v1985, %v2503
        %v3034 = vmul.f32 %v1986, %v2507
        %v3035 = vmul.f32 %v1987, %v2507
        %v3036 = vmul.f32 %v1988, %v2507
        %v3037 = vmul.f32 %v1989, %v2507
        %v3038 = vmul.f32 %v1990, %v2511
        %v3039 = vmul.f32 %v1991, %v2511
        %v3040 = vmul.f32 %v1992, %v2511
        %v3041 = vmul.f32 %v1993, %v2511
        %v3042 = vmul.f32 %v1994, %v2515
        %v3043 = vmul.f32 %v1995, %v2515
        %v3044 = vmul.f32 %v1996, %v2515
        %v3045 = vmul.f32 %v1997, %v2515
        %v3046 = vmul.f32 %v1998, %v2519
        %v3047 = vmul.f32 %v1999, %v2519
        %v3048 = vmul.f32 %v2000, %v2519
        %v3049 = vmul.f32 %v2001, %v2519
        %v3050 = vmul.f32 %v2002, %v2523
        %v3051 = vmul.f32 %v2003, %v2523
        %v3052 = vmul.f32 %v2004, %v2523
        %v3053 = vmul.f32 %v2005, %v2523
        %v3054 = vmul.f32 %v2006, %v2527
        %v3055 = vmul.f32 %v2007, %v2527
        %v3056 = vmul.f32 %v2008, %v2527
        %v3057 = vmul.f32 %v2009, %v2527
        %v3058 = vmul.f32 %v2010, %v2531
        %v3059 = vmul.f32 %v2011, %v2531
        %v3060 = vmul.f32 %v2012, %v2531
        %v3061 = vmul.f32 %v2013, %v2531
        %v3062 = vmul.f32 %v2014, %v2535
        %v3063 = vmul.f32 %v2015, %v2535
        %v3064 = vmul.f32 %v2016, %v2535
        %v3065 = vmul.f32 %v2017, %v2535
        %v3066 = vmul.f32 %v2018, %v2539
        %v3067 = vmul.f32 %v2019, %v2539
        %v3068 = vmul.f32 %v2020, %v2539
        %v3069 = vmul.f32 %v2021, %v2539
        %v3070 = vmul.f32 %v2022, %v2543
        %v3071 = vmul.f32 %v2023, %v2543
        %v3072 = vmul.f32 %v2024, %v2543
        %v3073 = vmul.f32 %v2025, %v2543
        %v3074 = vmul.f32 %v2026, %v2547
        %v3075 = vmul.f32 %v2027, %v2547
        %v3076 = vmul.f32 %v2028, %v2547
        %v3077 = vmul.f32 %v2029, %v2547
        %v3078 = vmul.f32 %v2030, %v2551
        %v3079 = vmul.f32 %v2031, %v2551
        %v3080 = vmul.f32 %v2032, %v2551
        %v3081 = vmul.f32 %v2033, %v2551
        %v3082 = vmul.f32 %v2034, %v2558
        %v3083 = vmul.f32 %v2035, %v2558
        %v3084 = vmul.f32 %v2036, %v2558
        %v3085 = vmul.f32 %v2037, %v2558
        %v3086 = vmul.f32 %v2038, %v2562
        %v3087 = vmul.f32 %v2039, %v2562
        %v3088 = vmul.f32 %v2040, %v2562
        %v3089 = vmul.f32 %v2041, %v2562
        %v3090 = vmul.f32 %v2042, %v2566
        %v3091 = vmul.f32 %v2043, %v2566
        %v3092 = vmul.f32 %v2044, %v2566
        %v3093 = vmul.f32 %v2045, %v2566
        %v3094 = vmul.f32 %v2046, %v2570
        %v3095 = vmul.f32 %v2047, %v2570
        %v3096 = vmul.f32 %v2048, %v2570
        %v3097 = vmul.f32 %v2049, %v2570
        %v3098 = vmul.f32 %v2050, %v2574
        %v3099 = vmul.f32 %v2051, %v2574
        %v3100 = vmul.f32 %v2052, %v2574
        %v3101 = vmul.f32 %v2053, %v2574
        %v3102 = vmul.f32 %v2054, %v2578
        %v3103 = vmul.f32 %v2055, %v2578
        %v3104 = vmul.f32 %v2056, %v2578
        %v3105 = vmul.f32 %v2057, %v2578
        %v3106 = vmul.f32 %v2058, %v2582
        %v3107 = vmul.f32 %v2059, %v2582
        %v3108 = vmul.f32 %v2060, %v2582
        %v3109 = vmul.f32 %v2061, %v2582
        %v3110 = vmul.f32 %v2062, %v2586
        %v3111 = vmul.f32 %v2063, %v2586
        %v3112 = vmul.f32 %v2064, %v2586
        %v3113 = vmul.f32 %v2065, %v2586
        %v3114 = vmul.f32 %v2066, %v2590
        %v3115 = vmul.f32 %v2067, %v2590
        %v3116 = vmul.f32 %v2068, %v2590
        %v3117 = vmul.f32 %v2069, %v2590
        %v3118 = vmul.f32 %v2070, %v2594
        %v3119 = vmul.f32 %v2071, %v2594
        %v3120 = vmul.f32 %v2072, %v2594
        %v3121 = vmul.f32 %v2073, %v2594
        %v3122 = vmul.f32 %v2074, %v2598
        %v3123 = vmul.f32 %v2075, %v2598
        %v3124 = vmul.f32 %v2076, %v2598
        %v3125 = vmul.f32 %v2077, %v2598
        %v3126 = vmul.f32 %v2078, %v2602
        %v3127 = vmul.f32 %v2079, %v2602
        %v3128 = vmul.f32 %v2080, %v2602
        %v3129 = vmul.f32 %v2081, %v2602
        %v3130 = vmul.f32 %v2082, %v2606
        %v3131 = vmul.f32 %v2083, %v2606
        %v3132 = vmul.f32 %v2084, %v2606
        %v3133 = vmul.f32 %v2085, %v2606
        %v3134 = vmul.f32 %v2086, %v2610
        %v3135 = vmul.f32 %v2087, %v2610
        %v3136 = vmul.f32 %v2088, %v2610
        %v3137 = vmul.f32 %v2089, %v2610
        %v3138 = vmul.f32 %v2090, %v2614
        %v3139 = vmul.f32 %v2091, %v2614
        %v3140 = vmul.f32 %v2092, %v2614
        %v3141 = vmul.f32 %v2093, %v2614
        %v3142 = vmul.f32 %v2094, %v2618
        %v3143 = vmul.f32 %v2095, %v2618
        %v3144 = vmul.f32 %v2096, %v2618
        %v3145 = vmul.f32 %v2097, %v2618
        %v3146 = vmul.f32 %v2098, %v2625
        %v3147 = vmul.f32 %v2099, %v2625
        %v3148 = vmul.f32 %v2100, %v2625
        %v3149 = vmul.f32 %v2101, %v2625
        %v3150 = vmul.f32 %v2102, %v2629
        %v3151 = vmul.f32 %v2103, %v2629
        %v3152 = vmul.f32 %v2104, %v2629
        %v3153 = vmul.f32 %v2105, %v2629
        %v3154 = vmul.f32 %v2106, %v2633
        %v3155 = vmul.f32 %v2107, %v2633
        %v3156 = vmul.f32 %v2108, %v2633
        %v3157 = vmul.f32 %v2109, %v2633
        %v3158 = vmul.f32 %v2110, %v2637
        %v3159 = vmul.f32 %v2111, %v2637
        %v3160 = vmul.f32 %v2112, %v2637
        %v3161 = vmul.f32 %v2113, %v2637
        %v3162 = vmul.f32 %v2114, %v2641
        %v3163 = vmul.f32 %v2115, %v2641
        %v3164 = vmul.f32 %v2116, %v2641
        %v3165 = vmul.f32 %v2117, %v2641
        %v3166 = vmul.f32 %v2118, %v2645
        %v3167 = vmul.f32 %v2119, %v2645
        %v3168 = vmul.f32 %v2120, %v2645
        %v3169 = vmul.f32 %v2121, %v2645
        %v3170 = vmul.f32 %v2122, %v2649
        %v3171 = vmul.f32 %v2123, %v2649
        %v3172 = vmul.f32 %v2124, %v2649
        %v3173 = vmul.f32 %v2125, %v2649
        %v3174 = vmul.f32 %v2126, %v2653
        %v3175 = vmul.f32 %v2127, %v2653
        %v3176 = vmul.f32 %v2128, %v2653
        %v3177 = vmul.f32 %v2129, %v2653
        %v3178 = vmul.f32 %v2130, %v2657
        %v3179 = vmul.f32 %v2131, %v2657
        %v3180 = vmul.f32 %v2132, %v2657
        %v3181 = vmul.f32 %v2133, %v2657
        %v3182 = vmul.f32 %v2134, %v2661
        %v3183 = vmul.f32 %v2135, %v2661
        %v3184 = vmul.f32 %v2136, %v2661
        %v3185 = vmul.f32 %v2137, %v2661
        %v3186 = vmul.f32 %v2138, %v2665
        %v3187 = vmul.f32 %v2139, %v2665
        %v3188 = vmul.f32 %v2140, %v2665
        %v3189 = vmul.f32 %v2141, %v2665
        %v3190 = vmul.f32 %v2142, %v2669
        %v3191 = vmul.f32 %v2143, %v2669
        %v3192 = vmul.f32 %v2144, %v2669
        %v3193 = vmul.f32 %v2145, %v2669
        %v3194 = vmul.f32 %v2146, %v2673
        %v3195 = vmul.f32 %v2147, %v2673
        %v3196 = vmul.f32 %v2148, %v2673
        %v3197 = vmul.f32 %v2149, %v2673
        %v3198 = vmul.f32 %v2150, %v2677
        %v3199 = vmul.f32 %v2151, %v2677
        %v3200 = vmul.f32 %v2152, %v2677
        %v3201 = vmul.f32 %v2153, %v2677
        %v3202 = vmul.f32 %v2154, %v2681
        %v3203 = vmul.f32 %v2155, %v2681
        %v3204 = vmul.f32 %v2156, %v2681
        %v3205 = vmul.f32 %v2157, %v2681
        %v3206 = vmul.f32 %v2158, %v2685
        %v3207 = vmul.f32 %v2159, %v2685
        %v3208 = vmul.f32 %v2160, %v2685
        %v3209 = vmul.f32 %v2161, %v2685
        %v3210 = vmul.f32 %v2162, %v2692
        %v3211 = vmul.f32 %v2163, %v2692
        %v3212 = vmul.f32 %v2164, %v2692
        %v3213 = vmul.f32 %v2165, %v2692
        %v3214 = vmul.f32 %v2166, %v2696
        %v3215 = vmul.f32 %v2167, %v2696
        %v3216 = vmul.f32 %v2168, %v2696
        %v3217 = vmul.f32 %v2169, %v2696
        %v3218 = vmul.f32 %v2170, %v2700
        %v3219 = vmul.f32 %v2171, %v2700
        %v3220 = vmul.f32 %v2172, %v2700
        %v3221 = vmul.f32 %v2173, %v2700
        %v3222 = vmul.f32 %v2174, %v2704
        %v3223 = vmul.f32 %v2175, %v2704
        %v3224 = vmul.f32 %v2176, %v2704
        %v3225 = vmul.f32 %v2177, %v2704
        %v3226 = vmul.f32 %v2178, %v2708
        %v3227 = vmul.f32 %v2179, %v2708
        %v3228 = vmul.f32 %v2180, %v2708
        %v3229 = vmul.f32 %v2181, %v2708
        %v3230 = vmul.f32 %v2182, %v2712
        %v3231 = vmul.f32 %v2183, %v2712
        %v3232 = vmul.f32 %v2184, %v2712
        %v3233 = vmul.f32 %v2185, %v2712
        %v3234 = vmul.f32 %v2186, %v2716
        %v3235 = vmul.f32 %v2187, %v2716
        %v3236 = vmul.f32 %v2188, %v2716
        %v3237 = vmul.f32 %v2189, %v2716
        %v3238 = vmul.f32 %v2190, %v2720
        %v3239 = vmul.f32 %v2191, %v2720
        %v3240 = vmul.f32 %v2192, %v2720
        %v3241 = vmul.f32 %v2193, %v2720
        %v3242 = vmul.f32 %v2194, %v2724
        %v3243 = vmul.f32 %v2195, %v2724
        %v3244 = vmul.f32 %v2196, %v2724
        %v3245 = vmul.f32 %v2197, %v2724
        %v3246 = vmul.f32 %v2198, %v2728
        %v3247 = vmul.f32 %v2199, %v2728
        %v3248 = vmul.f32 %v2200, %v2728
        %v3249 = vmul.f32 %v2201, %v2728
        %v3250 = vmul.f32 %v2202, %v2732
        %v3251 = vmul.f32 %v2203, %v2732
        %v3252 = vmul.f32 %v2204, %v2732
        %v3253 = vmul.f32 %v2205, %v2732
        %v3254 = vmul.f32 %v2206, %v2736
        %v3255 = vmul.f32 %v2207, %v2736
        %v3256 = vmul.f32 %v2208, %v2736
        %v3257 = vmul.f32 %v2209, %v2736
        %v3258 = vmul.f32 %v2210, %v2740
        %v3259 = vmul.f32 %v2211, %v2740
        %v3260 = vmul.f32 %v2212, %v2740
        %v3261 = vmul.f32 %v2213, %v2740
        %v3262 = vmul.f32 %v2214, %v2744
        %v3263 = vmul.f32 %v2215, %v2744
        %v3264 = vmul.f32 %v2216, %v2744
        %v3265 = vmul.f32 %v2217, %v2744
        %v3266 = vmul.f32 %v2218, %v2748
        %v3267 = vmul.f32 %v2219, %v2748
        %v3268 = vmul.f32 %v2220, %v2748
        %v3269 = vmul.f32 %v2221, %v2748
        %v3270 = vmul.f32 %v2222, %v2752
        %v3271 = vmul.f32 %v2223, %v2752
        %v3272 = vmul.f32 %v2224, %v2752
        %v3273 = vmul.f32 %v2225, %v2752
        %v3274 = vmul.f32 %v2226, %v2759
        %v3275 = vmul.f32 %v2227, %v2759
        %v3276 = vmul.f32 %v2228, %v2759
        %v3277 = vmul.f32 %v2229, %v2759
        %v3278 = vmul.f32 %v2230, %v2763
        %v3279 = vmul.f32 %v2231, %v2763
        %v3280 = vmul.f32 %v2232, %v2763
        %v3281 = vmul.f32 %v2233, %v2763
        %v3282 = vmul.f32 %v2234, %v2767
        %v3283 = vmul.f32 %v2235, %v2767
        %v3284 = vmul.f32 %v2236, %v2767
        %v3285 = vmul.f32 %v2237, %v2767
        %v3286 = vmul.f32 %v2238, %v2771
        %v3287 = vmul.f32 %v2239, %v2771
        %v3288 = vmul.f32 %v2240, %v2771
        %v3289 = vmul.f32 %v2241, %v2771
        %v3290 = vmul.f32 %v2242, %v2775
        %v3291 = vmul.f32 %v2243, %v2775
        %v3292 = vmul.f32 %v2244, %v2775
        %v3293 = vmul.f32 %v2245, %v2775
        %v3294 = vmul.f32 %v2246, %v2779
        %v3295 = vmul.f32 %v2247, %v2779
        %v3296 = vmul.f32 %v2248, %v2779
        %v3297 = vmul.f32 %v2249, %v2779
        %v3298 = vmul.f32 %v2250, %v2783
        %v3299 = vmul.f32 %v2251, %v2783
        %v3300 = vmul.f32 %v2252, %v2783
        %v3301 = vmul.f32 %v2253, %v2783
        %v3302 = vmul.f32 %v2254, %v2787
        %v3303 = vmul.f32 %v2255, %v2787
        %v3304 = vmul.f32 %v2256, %v2787
        %v3305 = vmul.f32 %v2257, %v2787
        %v3306 = vmul.f32 %v2258, %v2791
        %v3307 = vmul.f32 %v2259, %v2791
        %v3308 = vmul.f32 %v2260, %v2791
        %v3309 = vmul.f32 %v2261, %v2791
        %v3310 = vmul.f32 %v2262, %v2795
        %v3311 = vmul.f32 %v2263, %v2795
        %v3312 = vmul.f32 %v2264, %v2795
        %v3313 = vmul.f32 %v2265, %v2795
        %v3314 = vmul.f32 %v2266, %v2799
        %v3315 = vmul.f32 %v2267, %v2799
        %v3316 = vmul.f32 %v2268, %v2799
        %v3317 = vmul.f32 %v2269, %v2799
        %v3318 = vmul.f32 %v2270, %v2803
        %v3319 = vmul.f32 %v2271, %v2803
        %v3320 = vmul.f32 %v2272, %v2803
        %v3321 = vmul.f32 %v2273, %v2803
        %v3322 = vmul.f32 %v2274, %v2807
        %v3323 = vmul.f32 %v2275, %v2807
        %v3324 = vmul.f32 %v2276, %v2807
        %v3325 = vmul.f32 %v2277, %v2807
        %v3326 = vmul.f32 %v2278, %v2811
        %v3327 = vmul.f32 %v2279, %v2811
        %v3328 = vmul.f32 %v2280, %v2811
        %v3329 = vmul.f32 %v2281, %v2811
        %v3330 = vmul.f32 %v2282, %v2815
        %v3331 = vmul.f32 %v2283, %v2815
        %v3332 = vmul.f32 %v2284, %v2815
        %v3333 = vmul.f32 %v2285, %v2815
        %v3334 = vmul.f32 %v2286, %v2819
        %v3335 = vmul.f32 %v2287, %v2819
        %v3336 = vmul.f32 %v2288, %v2819
        %v3337 = vmul.f32 %v2289, %v2819
        %v3338 = vmul.f32 %v2290, %v2826
        %v3339 = vmul.f32 %v2291, %v2826
        %v3340 = vmul.f32 %v2292, %v2826
        %v3341 = vmul.f32 %v2293, %v2826
        %v3342 = vmul.f32 %v2294, %v2830
        %v3343 = vmul.f32 %v2295, %v2830
        %v3344 = vmul.f32 %v2296, %v2830
        %v3345 = vmul.f32 %v2297, %v2830
        %v3346 = vmul.f32 %v2298, %v2834
        %v3347 = vmul.f32 %v2299, %v2834
        %v3348 = vmul.f32 %v2300, %v2834
        %v3349 = vmul.f32 %v2301, %v2834
        %v3350 = vmul.f32 %v2302, %v2838
        %v3351 = vmul.f32 %v2303, %v2838
        %v3352 = vmul.f32 %v2304, %v2838
        %v3353 = vmul.f32 %v2305, %v2838
        %v3354 = vmul.f32 %v2306, %v2842
        %v3355 = vmul.f32 %v2307, %v2842
        %v3356 = vmul.f32 %v2308, %v2842
        %v3357 = vmul.f32 %v2309, %v2842
        %v3358 = vmul.f32 %v2310, %v2846
        %v3359 = vmul.f32 %v2311, %v2846
        %v3360 = vmul.f32 %v2312, %v2846
        %v3361 = vmul.f32 %v2313, %v2846
        %v3362 = vmul.f32 %v2314, %v2850
        %v3363 = vmul.f32 %v2315, %v2850
        %v3364 = vmul.f32 %v2316, %v2850
        %v3365 = vmul.f32 %v2317, %v2850
        %v3366 = vmul.f32 %v2318, %v2854
        %v3367 = vmul.f32 %v2319, %v2854
        %v3368 = vmul.f32 %v2320, %v2854
        %v3369 = vmul.f32 %v2321, %v2854
        %v3370 = vmul.f32 %v2322, %v2858
        %v3371 = vmul.f32 %v2323, %v2858
        %v3372 = vmul.f32 %v2324, %v2858
        %v3373 = vmul.f32 %v2325, %v2858
        %v3374 = vmul.f32 %v2326, %v2862
        %v3375 = vmul.f32 %v2327, %v2862
        %v3376 = vmul.f32 %v2328, %v2862
        %v3377 = vmul.f32 %v2329, %v2862
        %v3378 = vmul.f32 %v2330, %v2866
        %v3379 = vmul.f32 %v2331, %v2866
        %v3380 = vmul.f32 %v2332, %v2866
        %v3381 = vmul.f32 %v2333, %v2866
        %v3382 = vmul.f32 %v2334, %v2870
        %v3383 = vmul.f32 %v2335, %v2870
        %v3384 = vmul.f32 %v2336, %v2870
        %v3385 = vmul.f32 %v2337, %v2870
        %v3386 = vmul.f32 %v2338, %v2874
        %v3387 = vmul.f32 %v2339, %v2874
        %v3388 = vmul.f32 %v2340, %v2874
        %v3389 = vmul.f32 %v2341, %v2874
        %v3390 = vmul.f32 %v2342, %v2878
        %v3391 = vmul.f32 %v2343, %v2878
        %v3392 = vmul.f32 %v2344, %v2878
        %v3393 = vmul.f32 %v2345, %v2878
        %v3394 = vmul.f32 %v2346, %v2882
        %v3395 = vmul.f32 %v2347, %v2882
        %v3396 = vmul.f32 %v2348, %v2882
        %v3397 = vmul.f32 %v2349, %v2882
        %v3398 = vmul.f32 %v2350, %v2886
        %v3399 = vmul.f32 %v2351, %v2886
        %v3400 = vmul.f32 %v2352, %v2886
        %v3401 = vmul.f32 %v2353, %v2886
        %v3402 = vmul.f32 %v2354, %v2893
        %v3403 = vmul.f32 %v2355, %v2893
        %v3404 = vmul.f32 %v2356, %v2893
        %v3405 = vmul.f32 %v2357, %v2893
        %v3406 = vmul.f32 %v2358, %v2897
        %v3407 = vmul.f32 %v2359, %v2897
        %v3408 = vmul.f32 %v2360, %v2897
        %v3409 = vmul.f32 %v2361, %v2897
        %v3410 = vmul.f32 %v2362, %v2901
        %v3411 = vmul.f32 %v2363, %v2901
        %v3412 = vmul.f32 %v2364, %v2901
        %v3413 = vmul.f32 %v2365, %v2901
        %v3414 = vmul.f32 %v2366, %v2905
        %v3415 = vmul.f32 %v2367, %v2905
        %v3416 = vmul.f32 %v2368, %v2905
        %v3417 = vmul.f32 %v2369, %v2905
        %v3418 = vmul.f32 %v2370, %v2909
        %v3419 = vmul.f32 %v2371, %v2909
        %v3420 = vmul.f32 %v2372, %v2909
        %v3421 = vmul.f32 %v2373, %v2909
        %v3422 = vmul.f32 %v2374, %v2913
        %v3423 = vmul.f32 %v2375, %v2913
        %v3424 = vmul.f32 %v2376, %v2913
        %v3425 = vmul.f32 %v2377, %v2913
        %v3426 = vmul.f32 %v2378, %v2917
        %v3427 = vmul.f32 %v2379, %v2917
        %v3428 = vmul.f32 %v2380, %v2917
        %v3429 = vmul.f32 %v2381, %v2917
        %v3430 = vmul.f32 %v2382, %v2921
        %v3431 = vmul.f32 %v2383, %v2921
        %v3432 = vmul.f32 %v2384, %v2921
        %v3433 = vmul.f32 %v2385, %v2921
        %v3434 = vmul.f32 %v2386, %v2925
        %v3435 = vmul.f32 %v2387, %v2925
        %v3436 = vmul.f32 %v2388, %v2925
        %v3437 = vmul.f32 %v2389, %v2925
        %v3438 = vmul.f32 %v2390, %v2929
        %v3439 = vmul.f32 %v2391, %v2929
        %v3440 = vmul.f32 %v2392, %v2929
        %v3441 = vmul.f32 %v2393, %v2929
        %v3442 = vmul.f32 %v2394, %v2933
        %v3443 = vmul.f32 %v2395, %v2933
        %v3444 = vmul.f32 %v2396, %v2933
        %v3445 = vmul.f32 %v2397, %v2933
        %v3446 = vmul.f32 %v2398, %v2937
        %v3447 = vmul.f32 %v2399, %v2937
        %v3448 = vmul.f32 %v2400, %v2937
        %v3449 = vmul.f32 %v2401, %v2937
        %v3450 = vmul.f32 %v2402, %v2941
        %v3451 = vmul.f32 %v2403, %v2941
        %v3452 = vmul.f32 %v2404, %v2941
        %v3453 = vmul.f32 %v2405, %v2941
        %v3454 = vmul.f32 %v2406, %v2945
        %v3455 = vmul.f32 %v2407, %v2945
        %v3456 = vmul.f32 %v2408, %v2945
        %v3457 = vmul.f32 %v2409, %v2945
        %v3458 = vmul.f32 %v2410, %v2949
        %v3459 = vmul.f32 %v2411, %v2949
        %v3460 = vmul.f32 %v2412, %v2949
        %v3461 = vmul.f32 %v2413, %v2949
        %v3462 = vmul.f32 %v2414, %v2953
        %v3463 = vmul.f32 %v2415, %v2953
        %v3464 = vmul.f32 %v2416, %v2953
        %v3465 = vmul.f32 %v2417, %v2953
        %v3466 = vadd.f32 %v2954, %v2958
        %v3467 = vadd.f32 %v3466, %v2962
        %v3468 = vadd.f32 %v3467, %v2966
        %v3469 = vadd.f32 %v3468, %v2970
        %v3470 = vadd.f32 %v3469, %v2974
        %v3471 = vadd.f32 %v3470, %v2978
        %v3472 = vadd.f32 %v3471, %v2982
        %v3473 = vadd.f32 %v3472, %v2986
        %v3474 = vadd.f32 %v3473, %v2990
        %v3475 = vadd.f32 %v3474, %v2994
        %v3476 = vadd.f32 %v3475, %v2998
        %v3477 = vadd.f32 %v3476, %v3002
        %v3478 = vadd.f32 %v3477, %v3006
        %v3479 = vadd.f32 %v3478, %v3010
        %v3480 = vadd.f32 %v3479, %v3014
        %v3481 = vrot.slane %v3480, 4
        %v3482 = vadd.f32 %v3480, %v3481
        %v3483 = vrot.slane %v3482, 2
        %v3484 = vadd.f32 %v3482, %v3483
        %v3485 = vrot.slane %v3484, 1
        %v3486 = vadd.f32 %v3484, %v3485
        %v3487 = vadd.f32 %v2955, %v2959
        %v3488 = vadd.f32 %v3487, %v2963
        %v3489 = vadd.f32 %v3488, %v2967
        %v3490 = vadd.f32 %v3489, %v2971
        %v3491 = vadd.f32 %v3490, %v2975
        %v3492 = vadd.f32 %v3491, %v2979
        %v3493 = vadd.f32 %v3492, %v2983
        %v3494 = vadd.f32 %v3493, %v2987
        %v3495 = vadd.f32 %v3494, %v2991
        %v3496 = vadd.f32 %v3495, %v2995
        %v3497 = vadd.f32 %v3496, %v2999
        %v3498 = vadd.f32 %v3497, %v3003
        %v3499 = vadd.f32 %v3498, %v3007
        %v3500 = vadd.f32 %v3499, %v3011
        %v3501 = vadd.f32 %v3500, %v3015
        %v3502 = vrot.slane %v3501, 4
        %v3503 = vadd.f32 %v3501, %v3502
        %v3504 = vrot.slane %v3503, 2
        %v3505 = vadd.f32 %v3503, %v3504
        %v3506 = vrot.slane %v3505, 1
        %v3507 = vadd.f32 %v3505, %v3506
        %v3508 = vadd.f32 %v2956, %v2960
        %v3509 = vadd.f32 %v3508, %v2964
        %v3510 = vadd.f32 %v3509, %v2968
        %v3511 = vadd.f32 %v3510, %v2972
        %v3512 = vadd.f32 %v3511, %v2976
        %v3513 = vadd.f32 %v3512, %v2980
        %v3514 = vadd.f32 %v3513, %v2984
        %v3515 = vadd.f32 %v3514, %v2988
        %v3516 = vadd.f32 %v3515, %v2992
        %v3517 = vadd.f32 %v3516, %v2996
        %v3518 = vadd.f32 %v3517, %v3000
        %v3519 = vadd.f32 %v3518, %v3004
        %v3520 = vadd.f32 %v3519, %v3008
        %v3521 = vadd.f32 %v3520, %v3012
        %v3522 = vadd.f32 %v3521, %v3016
        %v3523 = vrot.slane %v3522, 4
        %v3524 = vadd.f32 %v3522, %v3523
        %v3525 = vrot.slane %v3524, 2
        %v3526 = vadd.f32 %v3524, %v3525
        %v3527 = vrot.slane %v3526, 1
        %v3528 = vadd.f32 %v3526, %v3527
        %v3529 = vadd.f32 %v2957, %v2961
        %v3530 = vadd.f32 %v3529, %v2965
        %v3531 = vadd.f32 %v3530, %v2969
        %v3532 = vadd.f32 %v3531, %v2973
        %v3533 = vadd.f32 %v3532, %v2977
        %v3534 = vadd.f32 %v3533, %v2981
        %v3535 = vadd.f32 %v3534, %v2985
        %v3536 = vadd.f32 %v3535, %v2989
        %v3537 = vadd.f32 %v3536, %v2993
        %v3538 = vadd.f32 %v3537, %v2997
        %v3539 = vadd.f32 %v3538, %v3001
        %v3540 = vadd.f32 %v3539, %v3005
        %v3541 = vadd.f32 %v3540, %v3009
        %v3542 = vadd.f32 %v3541, %v3013
        %v3543 = vadd.f32 %v3542, %v3017
        %v3544 = vrot.slane %v3543, 4
        %v3545 = vadd.f32 %v3543, %v3544
        %v3546 = vrot.slane %v3545, 2
        %v3547 = vadd.f32 %v3545, %v3546
        %v3548 = vrot.slane %v3547, 1
        %v3549 = vadd.f32 %v3547, %v3548
        %v3550 = vadd.f32 %v3018, %v3022
        %v3551 = vadd.f32 %v3550, %v3026
        %v3552 = vadd.f32 %v3551, %v3030
        %v3553 = vadd.f32 %v3552, %v3034
        %v3554 = vadd.f32 %v3553, %v3038
        %v3555 = vadd.f32 %v3554, %v3042
        %v3556 = vadd.f32 %v3555, %v3046
        %v3557 = vadd.f32 %v3556, %v3050
        %v3558 = vadd.f32 %v3557, %v3054
        %v3559 = vadd.f32 %v3558, %v3058
        %v3560 = vadd.f32 %v3559, %v3062
        %v3561 = vadd.f32 %v3560, %v3066
        %v3562 = vadd.f32 %v3561, %v3070
        %v3563 = vadd.f32 %v3562, %v3074
        %v3564 = vadd.f32 %v3563, %v3078
        %v3565 = vrot.slane %v3564, 4
        %v3566 = vadd.f32 %v3564, %v3565
        %v3567 = vrot.slane %v3566, 2
        %v3568 = vadd.f32 %v3566, %v3567
        %v3569 = vrot.slane %v3568, 1
        %v3570 = vadd.f32 %v3568, %v3569
        %v3571 = vadd.f32 %v3019, %v3023
        %v3572 = vadd.f32 %v3571, %v3027
        %v3573 = vadd.f32 %v3572, %v3031
        %v3574 = vadd.f32 %v3573, %v3035
        %v3575 = vadd.f32 %v3574, %v3039
        %v3576 = vadd.f32 %v3575, %v3043
        %v3577 = vadd.f32 %v3576, %v3047
        %v3578 = vadd.f32 %v3577, %v3051
        %v3579 = vadd.f32 %v3578, %v3055
        %v3580 = vadd.f32 %v3579, %v3059
        %v3581 = vadd.f32 %v3580, %v3063
        %v3582 = vadd.f32 %v3581, %v3067
        %v3583 = vadd.f32 %v3582, %v3071
        %v3584 = vadd.f32 %v3583, %v3075
        %v3585 = vadd.f32 %v3584, %v3079
        %v3586 = vrot.slane %v3585, 4
        %v3587 = vadd.f32 %v3585, %v3586
        %v3588 = vrot.slane %v3587, 2
        %v3589 = vadd.f32 %v3587, %v3588
        %v3590 = vrot.slane %v3589, 1
        %v3591 = vadd.f32 %v3589, %v3590
        %v3592 = vadd.f32 %v3020, %v3024
        %v3593 = vadd.f32 %v3592, %v3028
        %v3594 = vadd.f32 %v3593, %v3032
        %v3595 = vadd.f32 %v3594, %v3036
        %v3596 = vadd.f32 %v3595, %v3040
        %v3597 = vadd.f32 %v3596, %v3044
        %v3598 = vadd.f32 %v3597, %v3048
        %v3599 = vadd.f32 %v3598, %v3052
        %v3600 = vadd.f32 %v3599, %v3056
        %v3601 = vadd.f32 %v3600, %v3060
        %v3602 = vadd.f32 %v3601, %v3064
        %v3603 = vadd.f32 %v3602, %v3068
        %v3604 = vadd.f32 %v3603, %v3072
        %v3605 = vadd.f32 %v3604, %v3076
        %v3606 = vadd.f32 %v3605, %v3080
        %v3607 = vrot.slane %v3606, 4
        %v3608 = vadd.f32 %v3606, %v3607
        %v3609 = vrot.slane %v3608, 2
        %v3610 = vadd.f32 %v3608, %v3609
        %v3611 = vrot.slane %v3610, 1
        %v3612 = vadd.f32 %v3610, %v3611
        %v3613 = vadd.f32 %v3021, %v3025
        %v3614 = vadd.f32 %v3613, %v3029
        %v3615 = vadd.f32 %v3614, %v3033
        %v3616 = vadd.f32 %v3615, %v3037
        %v3617 = vadd.f32 %v3616, %v3041
        %v3618 = vadd.f32 %v3617, %v3045
        %v3619 = vadd.f32 %v3618, %v3049
        %v3620 = vadd.f32 %v3619, %v3053
        %v3621 = vadd.f32 %v3620, %v3057
        %v3622 = vadd.f32 %v3621, %v3061
        %v3623 = vadd.f32 %v3622, %v3065
        %v3624 = vadd.f32 %v3623, %v3069
        %v3625 = vadd.f32 %v3624, %v3073
        %v3626 = vadd.f32 %v3625, %v3077
        %v3627 = vadd.f32 %v3626, %v3081
        %v3628 = vrot.slane %v3627, 4
        %v3629 = vadd.f32 %v3627, %v3628
        %v3630 = vrot.slane %v3629, 2
        %v3631 = vadd.f32 %v3629, %v3630
        %v3632 = vrot.slane %v3631, 1
        %v3633 = vadd.f32 %v3631, %v3632
        %v3634 = vadd.f32 %v3082, %v3086
        %v3635 = vadd.f32 %v3634, %v3090
        %v3636 = vadd.f32 %v3635, %v3094
        %v3637 = vadd.f32 %v3636, %v3098
        %v3638 = vadd.f32 %v3637, %v3102
        %v3639 = vadd.f32 %v3638, %v3106
        %v3640 = vadd.f32 %v3639, %v3110
        %v3641 = vadd.f32 %v3640, %v3114
        %v3642 = vadd.f32 %v3641, %v3118
        %v3643 = vadd.f32 %v3642, %v3122
        %v3644 = vadd.f32 %v3643, %v3126
        %v3645 = vadd.f32 %v3644, %v3130
        %v3646 = vadd.f32 %v3645, %v3134
        %v3647 = vadd.f32 %v3646, %v3138
        %v3648 = vadd.f32 %v3647, %v3142
        %v3649 = vrot.slane %v3648, 4
        %v3650 = vadd.f32 %v3648, %v3649
        %v3651 = vrot.slane %v3650, 2
        %v3652 = vadd.f32 %v3650, %v3651
        %v3653 = vrot.slane %v3652, 1
        %v3654 = vadd.f32 %v3652, %v3653
        %v3655 = vadd.f32 %v3083, %v3087
        %v3656 = vadd.f32 %v3655, %v3091
        %v3657 = vadd.f32 %v3656, %v3095
        %v3658 = vadd.f32 %v3657, %v3099
        %v3659 = vadd.f32 %v3658, %v3103
        %v3660 = vadd.f32 %v3659, %v3107
        %v3661 = vadd.f32 %v3660, %v3111
        %v3662 = vadd.f32 %v3661, %v3115
        %v3663 = vadd.f32 %v3662, %v3119
        %v3664 = vadd.f32 %v3663, %v3123
        %v3665 = vadd.f32 %v3664, %v3127
        %v3666 = vadd.f32 %v3665, %v3131
        %v3667 = vadd.f32 %v3666, %v3135
        %v3668 = vadd.f32 %v3667, %v3139
        %v3669 = vadd.f32 %v3668, %v3143
        %v3670 = vrot.slane %v3669, 4
        %v3671 = vadd.f32 %v3669, %v3670
        %v3672 = vrot.slane %v3671, 2
        %v3673 = vadd.f32 %v3671, %v3672
        %v3674 = vrot.slane %v3673, 1
        %v3675 = vadd.f32 %v3673, %v3674
        %v3676 = vadd.f32 %v3084, %v3088
        %v3677 = vadd.f32 %v3676, %v3092
        %v3678 = vadd.f32 %v3677, %v3096
        %v3679 = vadd.f32 %v3678, %v3100
        %v3680 = vadd.f32 %v3679, %v3104
        %v3681 = vadd.f32 %v3680, %v3108
        %v3682 = vadd.f32 %v3681, %v3112
        %v3683 = vadd.f32 %v3682, %v3116
        %v3684 = vadd.f32 %v3683, %v3120
        %v3685 = vadd.f32 %v3684, %v3124
        %v3686 = vadd.f32 %v3685, %v3128
        %v3687 = vadd.f32 %v3686, %v3132
        %v3688 = vadd.f32 %v3687, %v3136
        %v3689 = vadd.f32 %v3688, %v3140
        %v3690 = vadd.f32 %v3689, %v3144
        %v3691 = vrot.slane %v3690, 4
        %v3692 = vadd.f32 %v3690, %v3691
        %v3693 = vrot.slane %v3692, 2
        %v3694 = vadd.f32 %v3692, %v3693
        %v3695 = vrot.slane %v3694, 1
        %v3696 = vadd.f32 %v3694, %v3695
        %v3697 = vadd.f32 %v3085, %v3089
        %v3698 = vadd.f32 %v3697, %v3093
        %v3699 = vadd.f32 %v3698, %v3097
        %v3700 = vadd.f32 %v3699, %v3101
        %v3701 = vadd.f32 %v3700, %v3105
        %v3702 = vadd.f32 %v3701, %v3109
        %v3703 = vadd.f32 %v3702, %v3113
        %v3704 = vadd.f32 %v3703, %v3117
        %v3705 = vadd.f32 %v3704, %v3121
        %v3706 = vadd.f32 %v3705, %v3125
        %v3707 = vadd.f32 %v3706, %v3129
        %v3708 = vadd.f32 %v3707, %v3133
        %v3709 = vadd.f32 %v3708, %v3137
        %v3710 = vadd.f32 %v3709, %v3141
        %v3711 = vadd.f32 %v3710, %v3145
        %v3712 = vrot.slane %v3711, 4
        %v3713 = vadd.f32 %v3711, %v3712
        %v3714 = vrot.slane %v3713, 2
        %v3715 = vadd.f32 %v3713, %v3714
        %v3716 = vrot.slane %v3715, 1
        %v3717 = vadd.f32 %v3715, %v3716
        %v3718 = vadd.f32 %v3146, %v3150
        %v3719 = vadd.f32 %v3718, %v3154
        %v3720 = vadd.f32 %v3719, %v3158
        %v3721 = vadd.f32 %v3720, %v3162
        %v3722 = vadd.f32 %v3721, %v3166
        %v3723 = vadd.f32 %v3722, %v3170
        %v3724 = vadd.f32 %v3723, %v3174
        %v3725 = vadd.f32 %v3724, %v3178
        %v3726 = vadd.f32 %v3725, %v3182
        %v3727 = vadd.f32 %v3726, %v3186
        %v3728 = vadd.f32 %v3727, %v3190
        %v3729 = vadd.f32 %v3728, %v3194
        %v3730 = vadd.f32 %v3729, %v3198
        %v3731 = vadd.f32 %v3730, %v3202
        %v3732 = vadd.f32 %v3731, %v3206
        %v3733 = vrot.slane %v3732, 4
        %v3734 = vadd.f32 %v3732, %v3733
        %v3735 = vrot.slane %v3734, 2
        %v3736 = vadd.f32 %v3734, %v3735
        %v3737 = vrot.slane %v3736, 1
        %v3738 = vadd.f32 %v3736, %v3737
        %v3739 = vadd.f32 %v3147, %v3151
        %v3740 = vadd.f32 %v3739, %v3155
        %v3741 = vadd.f32 %v3740, %v3159
        %v3742 = vadd.f32 %v3741, %v3163
        %v3743 = vadd.f32 %v3742, %v3167
        %v3744 = vadd.f32 %v3743, %v3171
        %v3745 = vadd.f32 %v3744, %v3175
        %v3746 = vadd.f32 %v3745, %v3179
        %v3747 = vadd.f32 %v3746, %v3183
        %v3748 = vadd.f32 %v3747, %v3187
        %v3749 = vadd.f32 %v3748, %v3191
        %v3750 = vadd.f32 %v3749, %v3195
        %v3751 = vadd.f32 %v3750, %v3199
        %v3752 = vadd.f32 %v3751, %v3203
        %v3753 = vadd.f32 %v3752, %v3207
        %v3754 = vrot.slane %v3753, 4
        %v3755 = vadd.f32 %v3753, %v3754
        %v3756 = vrot.slane %v3755, 2
        %v3757 = vadd.f32 %v3755, %v3756
        %v3758 = vrot.slane %v3757, 1
        %v3759 = vadd.f32 %v3757, %v3758
        %v3760 = vadd.f32 %v3148, %v3152
        %v3761 = vadd.f32 %v3760, %v3156
        %v3762 = vadd.f32 %v3761, %v3160
        %v3763 = vadd.f32 %v3762, %v3164
        %v3764 = vadd.f32 %v3763, %v3168
        %v3765 = vadd.f32 %v3764, %v3172
        %v3766 = vadd.f32 %v3765, %v3176
        %v3767 = vadd.f32 %v3766, %v3180
        %v3768 = vadd.f32 %v3767, %v3184
        %v3769 = vadd.f32 %v3768, %v3188
        %v3770 = vadd.f32 %v3769, %v3192
        %v3771 = vadd.f32 %v3770, %v3196
        %v3772 = vadd.f32 %v3771, %v3200
        %v3773 = vadd.f32 %v3772, %v3204
        %v3774 = vadd.f32 %v3773, %v3208
        %v3775 = vrot.slane %v3774, 4
        %v3776 = vadd.f32 %v3774, %v3775
        %v3777 = vrot.slane %v3776, 2
        %v3778 = vadd.f32 %v3776, %v3777
        %v3779 = vrot.slane %v3778, 1
        %v3780 = vadd.f32 %v3778, %v3779
        %v3781 = vadd.f32 %v3149, %v3153
        %v3782 = vadd.f32 %v3781, %v3157
        %v3783 = vadd.f32 %v3782, %v3161
        %v3784 = vadd.f32 %v3783, %v3165
        %v3785 = vadd.f32 %v3784, %v3169
        %v3786 = vadd.f32 %v3785, %v3173
        %v3787 = vadd.f32 %v3786, %v3177
        %v3788 = vadd.f32 %v3787, %v3181
        %v3789 = vadd.f32 %v3788, %v3185
        %v3790 = vadd.f32 %v3789, %v3189
        %v3791 = vadd.f32 %v3790, %v3193
        %v3792 = vadd.f32 %v3791, %v3197
        %v3793 = vadd.f32 %v3792, %v3201
        %v3794 = vadd.f32 %v3793, %v3205
        %v3795 = vadd.f32 %v3794, %v3209
        %v3796 = vrot.slane %v3795, 4
        %v3797 = vadd.f32 %v3795, %v3796
        %v3798 = vrot.slane %v3797, 2
        %v3799 = vadd.f32 %v3797, %v3798
        %v3800 = vrot.slane %v3799, 1
        %v3801 = vadd.f32 %v3799, %v3800
        %v3802 = vadd.f32 %v3210, %v3214
        %v3803 = vadd.f32 %v3802, %v3218
        %v3804 = vadd.f32 %v3803, %v3222
        %v3805 = vadd.f32 %v3804, %v3226
        %v3806 = vadd.f32 %v3805, %v3230
        %v3807 = vadd.f32 %v3806, %v3234
        %v3808 = vadd.f32 %v3807, %v3238
        %v3809 = vadd.f32 %v3808, %v3242
        %v3810 = vadd.f32 %v3809, %v3246
        %v3811 = vadd.f32 %v3810, %v3250
        %v3812 = vadd.f32 %v3811, %v3254
        %v3813 = vadd.f32 %v3812, %v3258
        %v3814 = vadd.f32 %v3813, %v3262
        %v3815 = vadd.f32 %v3814, %v3266
        %v3816 = vadd.f32 %v3815, %v3270
        %v3817 = vrot.slane %v3816, 4
        %v3818 = vadd.f32 %v3816, %v3817
        %v3819 = vrot.slane %v3818, 2
        %v3820 = vadd.f32 %v3818, %v3819
        %v3821 = vrot.slane %v3820, 1
        %v3822 = vadd.f32 %v3820, %v3821
        %v3823 = vadd.f32 %v3211, %v3215
        %v3824 = vadd.f32 %v3823, %v3219
        %v3825 = vadd.f32 %v3824, %v3223
        %v3826 = vadd.f32 %v3825, %v3227
        %v3827 = vadd.f32 %v3826, %v3231
        %v3828 = vadd.f32 %v3827, %v3235
        %v3829 = vadd.f32 %v3828, %v3239
        %v3830 = vadd.f32 %v3829, %v3243
        %v3831 = vadd.f32 %v3830, %v3247
        %v3832 = vadd.f32 %v3831, %v3251
        %v3833 = vadd.f32 %v3832, %v3255
        %v3834 = vadd.f32 %v3833, %v3259
        %v3835 = vadd.f32 %v3834, %v3263
        %v3836 = vadd.f32 %v3835, %v3267
        %v3837 = vadd.f32 %v3836, %v3271
        %v3838 = vrot.slane %v3837, 4
        %v3839 = vadd.f32 %v3837, %v3838
        %v3840 = vrot.slane %v3839, 2
        %v3841 = vadd.f32 %v3839, %v3840
        %v3842 = vrot.slane %v3841, 1
        %v3843 = vadd.f32 %v3841, %v3842
        %v3844 = vadd.f32 %v3212, %v3216
        %v3845 = vadd.f32 %v3844, %v3220
        %v3846 = vadd.f32 %v3845, %v3224
        %v3847 = vadd.f32 %v3846, %v3228
        %v3848 = vadd.f32 %v3847, %v3232
        %v3849 = vadd.f32 %v3848, %v3236
        %v3850 = vadd.f32 %v3849, %v3240
        %v3851 = vadd.f32 %v3850, %v3244
        %v3852 = vadd.f32 %v3851, %v3248
        %v3853 = vadd.f32 %v3852, %v3252
        %v3854 = vadd.f32 %v3853, %v3256
        %v3855 = vadd.f32 %v3854, %v3260
        %v3856 = vadd.f32 %v3855, %v3264
        %v3857 = vadd.f32 %v3856, %v3268
        %v3858 = vadd.f32 %v3857, %v3272
        %v3859 = vrot.slane %v3858, 4
        %v3860 = vadd.f32 %v3858, %v3859
        %v3861 = vrot.slane %v3860, 2
        %v3862 = vadd.f32 %v3860, %v3861
        %v3863 = vrot.slane %v3862, 1
        %v3864 = vadd.f32 %v3862, %v3863
        %v3865 = vadd.f32 %v3213, %v3217
        %v3866 = vadd.f32 %v3865, %v3221
        %v3867 = vadd.f32 %v3866, %v3225
        %v3868 = vadd.f32 %v3867, %v3229
        %v3869 = vadd.f32 %v3868, %v3233
        %v3870 = vadd.f32 %v3869, %v3237
        %v3871 = vadd.f32 %v3870, %v3241
        %v3872 = vadd.f32 %v3871, %v3245
        %v3873 = vadd.f32 %v3872, %v3249
        %v3874 = vadd.f32 %v3873, %v3253
        %v3875 = vadd.f32 %v3874, %v3257
        %v3876 = vadd.f32 %v3875, %v3261
        %v3877 = vadd.f32 %v3876, %v3265
        %v3878 = vadd.f32 %v3877, %v3269
        %v3879 = vadd.f32 %v3878, %v3273
        %v3880 = vrot.slane %v3879, 4
        %v3881 = vadd.f32 %v3879, %v3880
        %v3882 = vrot.slane %v3881, 2
        %v3883 = vadd.f32 %v3881, %v3882
        %v3884 = vrot.slane %v3883, 1
        %v3885 = vadd.f32 %v3883, %v3884
        %v3886 = vadd.f32 %v3274, %v3278
        %v3887 = vadd.f32 %v3886, %v3282
        %v3888 = vadd.f32 %v3887, %v3286
        %v3889 = vadd.f32 %v3888, %v3290
        %v3890 = vadd.f32 %v3889, %v3294
        %v3891 = vadd.f32 %v3890, %v3298
        %v3892 = vadd.f32 %v3891, %v3302
        %v3893 = vadd.f32 %v3892, %v3306
        %v3894 = vadd.f32 %v3893, %v3310
        %v3895 = vadd.f32 %v3894, %v3314
        %v3896 = vadd.f32 %v3895, %v3318
        %v3897 = vadd.f32 %v3896, %v3322
        %v3898 = vadd.f32 %v3897, %v3326
        %v3899 = vadd.f32 %v3898, %v3330
        %v3900 = vadd.f32 %v3899, %v3334
        %v3901 = vrot.slane %v3900, 4
        %v3902 = vadd.f32 %v3900, %v3901
        %v3903 = vrot.slane %v3902, 2
        %v3904 = vadd.f32 %v3902, %v3903
        %v3905 = vrot.slane %v3904, 1
        %v3906 = vadd.f32 %v3904, %v3905
        %v3907 = vadd.f32 %v3275, %v3279
        %v3908 = vadd.f32 %v3907, %v3283
        %v3909 = vadd.f32 %v3908, %v3287
        %v3910 = vadd.f32 %v3909, %v3291
        %v3911 = vadd.f32 %v3910, %v3295
        %v3912 = vadd.f32 %v3911, %v3299
        %v3913 = vadd.f32 %v3912, %v3303
        %v3914 = vadd.f32 %v3913, %v3307
        %v3915 = vadd.f32 %v3914, %v3311
        %v3916 = vadd.f32 %v3915, %v3315
        %v3917 = vadd.f32 %v3916, %v3319
        %v3918 = vadd.f32 %v3917, %v3323
        %v3919 = vadd.f32 %v3918, %v3327
        %v3920 = vadd.f32 %v3919, %v3331
        %v3921 = vadd.f32 %v3920, %v3335
        %v3922 = vrot.slane %v3921, 4
        %v3923 = vadd.f32 %v3921, %v3922
        %v3924 = vrot.slane %v3923, 2
        %v3925 = vadd.f32 %v3923, %v3924
        %v3926 = vrot.slane %v3925, 1
        %v3927 = vadd.f32 %v3925, %v3926
        %v3928 = vadd.f32 %v3276, %v3280
        %v3929 = vadd.f32 %v3928, %v3284
        %v3930 = vadd.f32 %v3929, %v3288
        %v3931 = vadd.f32 %v3930, %v3292
        %v3932 = vadd.f32 %v3931, %v3296
        %v3933 = vadd.f32 %v3932, %v3300
        %v3934 = vadd.f32 %v3933, %v3304
        %v3935 = vadd.f32 %v3934, %v3308
        %v3936 = vadd.f32 %v3935, %v3312
        %v3937 = vadd.f32 %v3936, %v3316
        %v3938 = vadd.f32 %v3937, %v3320
        %v3939 = vadd.f32 %v3938, %v3324
        %v3940 = vadd.f32 %v3939, %v3328
        %v3941 = vadd.f32 %v3940, %v3332
        %v3942 = vadd.f32 %v3941, %v3336
        %v3943 = vrot.slane %v3942, 4
        %v3944 = vadd.f32 %v3942, %v3943
        %v3945 = vrot.slane %v3944, 2
        %v3946 = vadd.f32 %v3944, %v3945
        %v3947 = vrot.slane %v3946, 1
        %v3948 = vadd.f32 %v3946, %v3947
        %v3949 = vadd.f32 %v3277, %v3281
        %v3950 = vadd.f32 %v3949, %v3285
        %v3951 = vadd.f32 %v3950, %v3289
        %v3952 = vadd.f32 %v3951, %v3293
        %v3953 = vadd.f32 %v3952, %v3297
        %v3954 = vadd.f32 %v3953, %v3301
        %v3955 = vadd.f32 %v3954, %v3305
        %v3956 = vadd.f32 %v3955, %v3309
        %v3957 = vadd.f32 %v3956, %v3313
        %v3958 = vadd.f32 %v3957, %v3317
        %v3959 = vadd.f32 %v3958, %v3321
        %v3960 = vadd.f32 %v3959, %v3325
        %v3961 = vadd.f32 %v3960, %v3329
        %v3962 = vadd.f32 %v3961, %v3333
        %v3963 = vadd.f32 %v3962, %v3337
        %v3964 = vrot.slane %v3963, 4
        %v3965 = vadd.f32 %v3963, %v3964
        %v3966 = vrot.slane %v3965, 2
        %v3967 = vadd.f32 %v3965, %v3966
        %v3968 = vrot.slane %v3967, 1
        %v3969 = vadd.f32 %v3967, %v3968
        %v3970 = vadd.f32 %v3338, %v3342
        %v3971 = vadd.f32 %v3970, %v3346
        %v3972 = vadd.f32 %v3971, %v3350
        %v3973 = vadd.f32 %v3972, %v3354
        %v3974 = vadd.f32 %v3973, %v3358
        %v3975 = vadd.f32 %v3974, %v3362
        %v3976 = vadd.f32 %v3975, %v3366
        %v3977 = vadd.f32 %v3976, %v3370
        %v3978 = vadd.f32 %v3977, %v3374
        %v3979 = vadd.f32 %v3978, %v3378
        %v3980 = vadd.f32 %v3979, %v3382
        %v3981 = vadd.f32 %v3980, %v3386
        %v3982 = vadd.f32 %v3981, %v3390
        %v3983 = vadd.f32 %v3982, %v3394
        %v3984 = vadd.f32 %v3983, %v3398
        %v3985 = vrot.slane %v3984, 4
        %v3986 = vadd.f32 %v3984, %v3985
        %v3987 = vrot.slane %v3986, 2
        %v3988 = vadd.f32 %v3986, %v3987
        %v3989 = vrot.slane %v3988, 1
        %v3990 = vadd.f32 %v3988, %v3989
        %v3991 = vadd.f32 %v3339, %v3343
        %v3992 = vadd.f32 %v3991, %v3347
        %v3993 = vadd.f32 %v3992, %v3351
        %v3994 = vadd.f32 %v3993, %v3355
        %v3995 = vadd.f32 %v3994, %v3359
        %v3996 = vadd.f32 %v3995, %v3363
        %v3997 = vadd.f32 %v3996, %v3367
        %v3998 = vadd.f32 %v3997, %v3371
        %v3999 = vadd.f32 %v3998, %v3375
        %v4000 = vadd.f32 %v3999, %v3379
        %v4001 = vadd.f32 %v4000, %v3383
        %v4002 = vadd.f32 %v4001, %v3387
        %v4003 = vadd.f32 %v4002, %v3391
        %v4004 = vadd.f32 %v4003, %v3395
        %v4005 = vadd.f32 %v4004, %v3399
        %v4006 = vrot.slane %v4005, 4
        %v4007 = vadd.f32 %v4005, %v4006
        %v4008 = vrot.slane %v4007, 2
        %v4009 = vadd.f32 %v4007, %v4008
        %v4010 = vrot.slane %v4009, 1
        %v4011 = vadd.f32 %v4009, %v4010
        %v4012 = vadd.f32 %v3340, %v3344
        %v4013 = vadd.f32 %v4012, %v3348
        %v4014 = vadd.f32 %v4013, %v3352
        %v4015 = vadd.f32 %v4014, %v3356
        %v4016 = vadd.f32 %v4015, %v3360
        %v4017 = vadd.f32 %v4016, %v3364
        %v4018 = vadd.f32 %v4017, %v3368
        %v4019 = vadd.f32 %v4018, %v3372
        %v4020 = vadd.f32 %v4019, %v3376
        %v4021 = vadd.f32 %v4020, %v3380
        %v4022 = vadd.f32 %v4021, %v3384
        %v4023 = vadd.f32 %v4022, %v3388
        %v4024 = vadd.f32 %v4023, %v3392
        %v4025 = vadd.f32 %v4024, %v3396
        %v4026 = vadd.f32 %v4025, %v3400
        %v4027 = vrot.slane %v4026, 4
        %v4028 = vadd.f32 %v4026, %v4027
        %v4029 = vrot.slane %v4028, 2
        %v4030 = vadd.f32 %v4028, %v4029
        %v4031 = vrot.slane %v4030, 1
        %v4032 = vadd.f32 %v4030, %v4031
        %v4033 = vadd.f32 %v3341, %v3345
        %v4034 = vadd.f32 %v4033, %v3349
        %v4035 = vadd.f32 %v4034, %v3353
        %v4036 = vadd.f32 %v4035, %v3357
        %v4037 = vadd.f32 %v4036, %v3361
        %v4038 = vadd.f32 %v4037, %v3365
        %v4039 = vadd.f32 %v4038, %v3369
        %v4040 = vadd.f32 %v4039, %v3373
        %v4041 = vadd.f32 %v4040, %v3377
        %v4042 = vadd.f32 %v4041, %v3381
        %v4043 = vadd.f32 %v4042, %v3385
        %v4044 = vadd.f32 %v4043, %v3389
        %v4045 = vadd.f32 %v4044, %v3393
        %v4046 = vadd.f32 %v4045, %v3397
        %v4047 = vadd.f32 %v4046, %v3401
        %v4048 = vrot.slane %v4047, 4
        %v4049 = vadd.f32 %v4047, %v4048
        %v4050 = vrot.slane %v4049, 2
        %v4051 = vadd.f32 %v4049, %v4050
        %v4052 = vrot.slane %v4051, 1
        %v4053 = vadd.f32 %v4051, %v4052
        %v4054 = vadd.f32 %v3402, %v3406
        %v4055 = vadd.f32 %v4054, %v3410
        %v4056 = vadd.f32 %v4055, %v3414
        %v4057 = vadd.f32 %v4056, %v3418
        %v4058 = vadd.f32 %v4057, %v3422
        %v4059 = vadd.f32 %v4058, %v3426
        %v4060 = vadd.f32 %v4059, %v3430
        %v4061 = vadd.f32 %v4060, %v3434
        %v4062 = vadd.f32 %v4061, %v3438
        %v4063 = vadd.f32 %v4062, %v3442
        %v4064 = vadd.f32 %v4063, %v3446
        %v4065 = vadd.f32 %v4064, %v3450
        %v4066 = vadd.f32 %v4065, %v3454
        %v4067 = vadd.f32 %v4066, %v3458
        %v4068 = vadd.f32 %v4067, %v3462
        %v4069 = vrot.slane %v4068, 4
        %v4070 = vadd.f32 %v4068, %v4069
        %v4071 = vrot.slane %v4070, 2
        %v4072 = vadd.f32 %v4070, %v4071
        %v4073 = vrot.slane %v4072, 1
        %v4074 = vadd.f32 %v4072, %v4073
        %v4075 = vadd.f32 %v3403, %v3407
        %v4076 = vadd.f32 %v4075, %v3411
        %v4077 = vadd.f32 %v4076, %v3415
        %v4078 = vadd.f32 %v4077, %v3419
        %v4079 = vadd.f32 %v4078, %v3423
        %v4080 = vadd.f32 %v4079, %v3427
        %v4081 = vadd.f32 %v4080, %v3431
        %v4082 = vadd.f32 %v4081, %v3435
        %v4083 = vadd.f32 %v4082, %v3439
        %v4084 = vadd.f32 %v4083, %v3443
        %v4085 = vadd.f32 %v4084, %v3447
        %v4086 = vadd.f32 %v4085, %v3451
        %v4087 = vadd.f32 %v4086, %v3455
        %v4088 = vadd.f32 %v4087, %v3459
        %v4089 = vadd.f32 %v4088, %v3463
        %v4090 = vrot.slane %v4089, 4
        %v4091 = vadd.f32 %v4089, %v4090
        %v4092 = vrot.slane %v4091, 2
        %v4093 = vadd.f32 %v4091, %v4092
        %v4094 = vrot.slane %v4093, 1
        %v4095 = vadd.f32 %v4093, %v4094
        %v4096 = vadd.f32 %v3404, %v3408
        %v4097 = vadd.f32 %v4096, %v3412
        %v4098 = vadd.f32 %v4097, %v3416
        %v4099 = vadd.f32 %v4098, %v3420
        %v4100 = vadd.f32 %v4099, %v3424
        %v4101 = vadd.f32 %v4100, %v3428
        %v4102 = vadd.f32 %v4101, %v3432
        %v4103 = vadd.f32 %v4102, %v3436
        %v4104 = vadd.f32 %v4103, %v3440
        %v4105 = vadd.f32 %v4104, %v3444
        %v4106 = vadd.f32 %v4105, %v3448
        %v4107 = vadd.f32 %v4106, %v3452
        %v4108 = vadd.f32 %v4107, %v3456
        %v4109 = vadd.f32 %v4108, %v3460
        %v4110 = vadd.f32 %v4109, %v3464
        %v4111 = vrot.slane %v4110, 4
        %v4112 = vadd.f32 %v4110, %v4111
        %v4113 = vrot.slane %v4112, 2
        %v4114 = vadd.f32 %v4112, %v4113
        %v4115 = vrot.slane %v4114, 1
        %v4116 = vadd.f32 %v4114, %v4115
        %v4117 = vadd.f32 %v3405, %v3409
        %v4118 = vadd.f32 %v4117, %v3413
        %v4119 = vadd.f32 %v4118, %v3417
        %v4120 = vadd.f32 %v4119, %v3421
        %v4121 = vadd.f32 %v4120, %v3425
        %v4122 = vadd.f32 %v4121, %v3429
        %v4123 = vadd.f32 %v4122, %v3433
        %v4124 = vadd.f32 %v4123, %v3437
        %v4125 = vadd.f32 %v4124, %v3441
        %v4126 = vadd.f32 %v4125, %v3445
        %v4127 = vadd.f32 %v4126, %v3449
        %v4128 = vadd.f32 %v4127, %v3453
        %v4129 = vadd.f32 %v4128, %v3457
        %v4130 = vadd.f32 %v4129, %v3461
        %v4131 = vadd.f32 %v4130, %v3465
        %v4132 = vrot.slane %v4131, 4
        %v4133 = vadd.f32 %v4131, %v4132
        %v4134 = vrot.slane %v4133, 2
        %v4135 = vadd.f32 %v4133, %v4134
        %v4136 = vrot.slane %v4135, 1
        %v4137 = vadd.f32 %v4135, %v4136
        %v4138 = vld [vmem:[#allocation2] sm:$0xff]
        %v4139 = vpack.c.bf16 %v3486, %v3486
        %v4140 = vpack.c.bf16 %v3507, %v3507
        %v4141 = vpack.c.bf16 %v3528, %v3528
        %v4142 = vpack.c.bf16 %v3549, %v3549
        %v4143 = vpack.c.bf16 %v3570, %v3570
        %v4144 = vpack.c.bf16 %v3591, %v3591
        %v4145 = vpack.c.bf16 %v3612, %v3612
        %v4146 = vpack.c.bf16 %v3633, %v3633
        %v4147 = vpack.c.bf16 %v3654, %v3654
        %v4148 = vpack.c.bf16 %v3675, %v3675
        %v4149 = vpack.c.bf16 %v3696, %v3696
        %v4150 = vpack.c.bf16 %v3717, %v3717
        %v4151 = vpack.c.bf16 %v3738, %v3738
        %v4152 = vpack.c.bf16 %v3759, %v3759
        %v4153 = vpack.c.bf16 %v3780, %v3780
        %v4154 = vpack.c.bf16 %v3801, %v3801
        %v4155 = vpack.c.bf16 %v3822, %v3822
        %v4156 = vpack.c.bf16 %v3843, %v3843
        %v4157 = vpack.c.bf16 %v3864, %v3864
        %v4158 = vpack.c.bf16 %v3885, %v3885
        %v4159 = vpack.c.bf16 %v3906, %v3906
        %v4160 = vpack.c.bf16 %v3927, %v3927
        %v4161 = vpack.c.bf16 %v3948, %v3948
        %v4162 = vpack.c.bf16 %v3969, %v3969
        %v4163 = vpack.c.bf16 %v3990, %v3990
        %v4164 = vpack.c.bf16 %v4011, %v4011
        %v4165 = vpack.c.bf16 %v4032, %v4032
        %v4166 = vpack.c.bf16 %v4053, %v4053
        %v4167 = vpack.c.bf16 %v4074, %v4074
        %v4168 = vpack.c.bf16 %v4095, %v4095
        %v4169 = vpack.c.bf16 %v4116, %v4116
        %v4170 = vpack.c.bf16 %v4137, %v4137
        %v4171 = vld [vmem:[%s2] sm:$0xf]
        %v4172 = vld [vmem:[%s2 + $0x4] sm:$0xf]
        %v4173 = vld [vmem:[%s2 + $0x8] sm:$0xf]
        %v4174 = vld [vmem:[%s2 + $0xc] sm:$0xf]
        %v4175 = vld [vmem:[%s2 + $0x10] sm:$0xf]
        %v4176 = vld [vmem:[%s2 + $0x14] sm:$0xf]
        %v4177 = vld [vmem:[%s2 + $0x18] sm:$0xf]
        %v4178 = vld [vmem:[%s2 + $0x1c] sm:$0xf]
        %v4179 = vld [vmem:[%s2 + $0x20] sm:$0xf]
        %v4180 = vld [vmem:[%s2 + $0x24] sm:$0xf]
        %v4181 = vld [vmem:[%s2 + $0x28] sm:$0xf]
        %v4182 = vld [vmem:[%s2 + $0x2c] sm:$0xf]
        %v4183 = vld [vmem:[%s2 + $0x30] sm:$0xf]
        %v4184 = vld [vmem:[%s2 + $0x34] sm:$0xf]
        %v4185 = vld [vmem:[%s2 + $0x38] sm:$0xf]
        %v4186 = vld [vmem:[%s2 + $0x3c] sm:$0xf]
        %v4187 = vld [vmem:[%s2 + $0x40] sm:$0xf]
        %v4188 = vld [vmem:[%s2 + $0x44] sm:$0xf]
        %v4189 = vld [vmem:[%s2 + $0x48] sm:$0xf]
        %v4190 = vld [vmem:[%s2 + $0x4c] sm:$0xf]
        %v4191 = vld [vmem:[%s2 + $0x50] sm:$0xf]
        %v4192 = vld [vmem:[%s2 + $0x54] sm:$0xf]
        %v4193 = vld [vmem:[%s2 + $0x58] sm:$0xf]
        %v4194 = vld [vmem:[%s2 + $0x5c] sm:$0xf]
        %v4195 = vld [vmem:[%s2 + $0x60] sm:$0xf]
        %v4196 = vld [vmem:[%s2 + $0x64] sm:$0xf]
        %v4197 = vld [vmem:[%s2 + $0x68] sm:$0xf]
        %v4198 = vld [vmem:[%s2 + $0x6c] sm:$0xf]
        %v4199 = vld [vmem:[%s2 + $0x70] sm:$0xf]
        %v4200 = vld [vmem:[%s2 + $0x74] sm:$0xf]
        %v4201 = vld [vmem:[%s2 + $0x78] sm:$0xf]
        %v4202 = vld [vmem:[%s2 + $0x7c] sm:$0xf]
        %v4203 = vld [vmem:[%s2 + $0x80] sm:$0xf]
        %v4204 = vld [vmem:[%s2 + $0x84] sm:$0xf]
        %v4205 = vld [vmem:[%s2 + $0x88] sm:$0xf]
        %v4206 = vld [vmem:[%s2 + $0x8c] sm:$0xf]
        %v4207 = vld [vmem:[%s2 + $0x90] sm:$0xf]
        %v4208 = vld [vmem:[%s2 + $0x94] sm:$0xf]
        %v4209 = vld [vmem:[%s2 + $0x98] sm:$0xf]
        %v4210 = vld [vmem:[%s2 + $0x9c] sm:$0xf]
        %v4211 = vld [vmem:[%s2 + $0xa0] sm:$0xf]
        %v4212 = vld [vmem:[%s2 + $0xa4] sm:$0xf]
        %v4213 = vld [vmem:[%s2 + $0xa8] sm:$0xf]
        %v4214 = vld [vmem:[%s2 + $0xac] sm:$0xf]
        %v4215 = vld [vmem:[%s2 + $0xb0] sm:$0xf]
        %v4216 = vld [vmem:[%s2 + $0xb4] sm:$0xf]
        %v4217 = vld [vmem:[%s2 + $0xb8] sm:$0xf]
        %v4218 = vld [vmem:[%s2 + $0xbc] sm:$0xf]
        %v4219 = vld [vmem:[%s2 + $0xc0] sm:$0xf]
        %v4220 = vld [vmem:[%s2 + $0xc4] sm:$0xf]
        %v4221 = vld [vmem:[%s2 + $0xc8] sm:$0xf]
        %v4222 = vld [vmem:[%s2 + $0xcc] sm:$0xf]
        %v4223 = vld [vmem:[%s2 + $0xd0] sm:$0xf]
        %v4224 = vld [vmem:[%s2 + $0xd4] sm:$0xf]
        %v4225 = vld [vmem:[%s2 + $0xd8] sm:$0xf]
        %v4226 = vld [vmem:[%s2 + $0xdc] sm:$0xf]
        %v4227 = vld [vmem:[%s2 + $0xe0] sm:$0xf]
        %v4228 = vld [vmem:[%s2 + $0xe4] sm:$0xf]
        %v4229 = vld [vmem:[%s2 + $0xe8] sm:$0xf]
        %v4230 = vld [vmem:[%s2 + $0xec] sm:$0xf]
        %v4231 = vld [vmem:[%s2 + $0xf0] sm:$0xf]
        %v4232 = vld [vmem:[%s2 + $0xf4] sm:$0xf]
        %v4233 = vld [vmem:[%s2 + $0xf8] sm:$0xf]
        %v4234 = vld [vmem:[%s2 + $0xfc] sm:$0xf]
        %v4267 = vunpack.c.l.b16 %v4139
        %v4268 = vunpack.c.l.b16 %v4140
        %v4269 = vunpack.c.l.b16 %v4141
        %v4270 = vunpack.c.l.b16 %v4142
        %v4271 = vunpack.c.l.b16 %v4143
        %v4272 = vunpack.c.l.b16 %v4144
        %v4273 = vunpack.c.l.b16 %v4145
        %v4274 = vunpack.c.l.b16 %v4146
        %v4275 = vunpack.c.l.b16 %v4147
        %v4276 = vunpack.c.l.b16 %v4148
        %v4277 = vunpack.c.l.b16 %v4149
        %v4278 = vunpack.c.l.b16 %v4150
        %v4279 = vunpack.c.l.b16 %v4151
        %v4280 = vunpack.c.l.b16 %v4152
        %v4281 = vunpack.c.l.b16 %v4153
        %v4282 = vunpack.c.l.b16 %v4154
        %v4283 = vunpack.c.l.b16 %v4155
        %v4284 = vunpack.c.l.b16 %v4156
        %v4285 = vunpack.c.l.b16 %v4157
        %v4286 = vunpack.c.l.b16 %v4158
        %v4287 = vunpack.c.l.b16 %v4159
        %v4288 = vunpack.c.l.b16 %v4160
        %v4289 = vunpack.c.l.b16 %v4161
        %v4290 = vunpack.c.l.b16 %v4162
        %v4291 = vunpack.c.l.b16 %v4163
        %v4292 = vunpack.c.l.b16 %v4164
        %v4293 = vunpack.c.l.b16 %v4165
        %v4294 = vunpack.c.l.b16 %v4166
        %v4295 = vunpack.c.l.b16 %v4167
        %v4296 = vunpack.c.l.b16 %v4168
        %v4297 = vunpack.c.l.b16 %v4169
        %v4298 = vunpack.c.l.b16 %v4170
        %vm4299 = vcmask 1041409
        %v4300 = vsel %vm4299, %v4271, %v4267
        %vm4301 = vcmask 1042434
        %v4302 = vsel %vm4301, %v4275, %v4300
        %vm4303 = vcmask 1043459
        %v4304 = vsel %vm4303, %v4279, %v4302
        %vm4305 = vcmask 1044484
        %v4306 = vsel %vm4305, %v4283, %v4304
        %vm4307 = vcmask 1045509
        %v4308 = vsel %vm4307, %v4287, %v4306
        %vm4309 = vcmask 1046534
        %v4310 = vsel %vm4309, %v4291, %v4308
        %vm4311 = vcmask 1047559
        %v4312 = vsel %vm4311, %v4295, %v4310
        %v4313 = vsel %vm4299, %v4272, %v4268
        %v4314 = vsel %vm4301, %v4276, %v4313
        %v4315 = vsel %vm4303, %v4280, %v4314
        %v4316 = vsel %vm4305, %v4284, %v4315
        %v4317 = vsel %vm4307, %v4288, %v4316
        %v4318 = vsel %vm4309, %v4292, %v4317
        %v4319 = vsel %vm4311, %v4296, %v4318
        %v4320 = vsel %vm4299, %v4273, %v4269
        %v4321 = vsel %vm4301, %v4277, %v4320
        %v4322 = vsel %vm4303, %v4281, %v4321
        %v4323 = vsel %vm4305, %v4285, %v4322
        %v4324 = vsel %vm4307, %v4289, %v4323
        %v4325 = vsel %vm4309, %v4293, %v4324
        %v4326 = vsel %vm4311, %v4297, %v4325
        %v4327 = vsel %vm4299, %v4274, %v4270
        %v4328 = vsel %vm4301, %v4278, %v4327
        %v4329 = vsel %vm4303, %v4282, %v4328
        %v4330 = vsel %vm4305, %v4286, %v4329
        %v4331 = vsel %vm4307, %v4290, %v4330
        %v4332 = vsel %vm4309, %v4294, %v4331
        %v4333 = vsel %vm4311, %v4298, %v4332
        %v4334 = vpack.c.b16 %v4312, %v4312
        %v4335 = vpack.c.b16 %v4319, %v4319
        %v4336 = vpack.c.b16 %v4326, %v4326
        %v4337 = vpack.c.b16 %v4333, %v4333
        %v4406 = vunpack.c.l.b16 %v4171
        %v4407 = vunpack.c.l.b16 %v4172
        %v4408 = vunpack.c.l.b16 %v4173
        %v4409 = vunpack.c.l.b16 %v4174
        %v4410 = vunpack.c.l.b16 %v4175
        %v4411 = vunpack.c.l.b16 %v4176
        %v4412 = vunpack.c.l.b16 %v4177
        %v4413 = vunpack.c.l.b16 %v4178
        %v4414 = vunpack.c.l.b16 %v4179
        %v4415 = vunpack.c.l.b16 %v4180
        %v4416 = vunpack.c.l.b16 %v4181
        %v4417 = vunpack.c.l.b16 %v4182
        %v4418 = vunpack.c.l.b16 %v4183
        %v4419 = vunpack.c.l.b16 %v4184
        %v4420 = vunpack.c.l.b16 %v4185
        %v4421 = vunpack.c.l.b16 %v4186
        %v4422 = vunpack.c.l.b16 %v4187
        %v4423 = vunpack.c.l.b16 %v4188
        %v4424 = vunpack.c.l.b16 %v4189
        %v4425 = vunpack.c.l.b16 %v4190
        %v4426 = vunpack.c.l.b16 %v4191
        %v4427 = vunpack.c.l.b16 %v4192
        %v4428 = vunpack.c.l.b16 %v4193
        %v4429 = vunpack.c.l.b16 %v4194
        %v4430 = vunpack.c.l.b16 %v4195
        %v4431 = vunpack.c.l.b16 %v4196
        %v4432 = vunpack.c.l.b16 %v4197
        %v4433 = vunpack.c.l.b16 %v4198
        %v4434 = vunpack.c.l.b16 %v4199
        %v4435 = vunpack.c.l.b16 %v4200
        %v4436 = vunpack.c.l.b16 %v4201
        %v4437 = vunpack.c.l.b16 %v4202
        %v4438 = vunpack.c.l.b16 %v4203
        %v4439 = vunpack.c.l.b16 %v4204
        %v4440 = vunpack.c.l.b16 %v4205
        %v4441 = vunpack.c.l.b16 %v4206
        %v4442 = vunpack.c.l.b16 %v4207
        %v4443 = vunpack.c.l.b16 %v4208
        %v4444 = vunpack.c.l.b16 %v4209
        %v4445 = vunpack.c.l.b16 %v4210
        %v4446 = vunpack.c.l.b16 %v4211
        %v4447 = vunpack.c.l.b16 %v4212
        %v4448 = vunpack.c.l.b16 %v4213
        %v4449 = vunpack.c.l.b16 %v4214
        %v4450 = vunpack.c.l.b16 %v4215
        %v4451 = vunpack.c.l.b16 %v4216
        %v4452 = vunpack.c.l.b16 %v4217
        %v4453 = vunpack.c.l.b16 %v4218
        %v4454 = vunpack.c.l.b16 %v4219
        %v4455 = vunpack.c.l.b16 %v4220
        %v4456 = vunpack.c.l.b16 %v4221
        %v4457 = vunpack.c.l.b16 %v4222
        %v4458 = vunpack.c.l.b16 %v4223
        %v4459 = vunpack.c.l.b16 %v4224
        %v4460 = vunpack.c.l.b16 %v4225
        %v4461 = vunpack.c.l.b16 %v4226
        %v4462 = vunpack.c.l.b16 %v4227
        %v4463 = vunpack.c.l.b16 %v4228
        %v4464 = vunpack.c.l.b16 %v4229
        %v4465 = vunpack.c.l.b16 %v4230
        %v4466 = vunpack.c.l.b16 %v4231
        %v4467 = vunpack.c.l.b16 %v4232
        %v4468 = vunpack.c.l.b16 %v4233
        %v4469 = vunpack.c.l.b16 %v4234
        %v4470 = vpack.c.b16 %v4407, %v4406
        %v4471 = vpack.c.b16 %v4409, %v4408
        %v4472 = vpack.c.b16 %v4411, %v4410
        %v4473 = vpack.c.b16 %v4413, %v4412
        %v4474 = vpack.c.b16 %v4415, %v4414
        %v4475 = vpack.c.b16 %v4417, %v4416
        %v4476 = vpack.c.b16 %v4419, %v4418
        %v4477 = vpack.c.b16 %v4421, %v4420
        %v4478 = vpack.c.b16 %v4423, %v4422
        %v4479 = vpack.c.b16 %v4425, %v4424
        %v4480 = vpack.c.b16 %v4427, %v4426
        %v4481 = vpack.c.b16 %v4429, %v4428
        %v4482 = vpack.c.b16 %v4431, %v4430
        %v4483 = vpack.c.b16 %v4433, %v4432
        %v4484 = vpack.c.b16 %v4435, %v4434
        %v4485 = vpack.c.b16 %v4437, %v4436
        %v4486 = vpack.c.b16 %v4439, %v4438
        %v4487 = vpack.c.b16 %v4441, %v4440
        %v4488 = vpack.c.b16 %v4443, %v4442
        %v4489 = vpack.c.b16 %v4445, %v4444
        %v4490 = vpack.c.b16 %v4447, %v4446
        %v4491 = vpack.c.b16 %v4449, %v4448
        %v4492 = vpack.c.b16 %v4451, %v4450
        %v4493 = vpack.c.b16 %v4453, %v4452
        %v4494 = vpack.c.b16 %v4455, %v4454
        %v4495 = vpack.c.b16 %v4457, %v4456
        %v4496 = vpack.c.b16 %v4459, %v4458
        %v4497 = vpack.c.b16 %v4461, %v4460
        %v4498 = vpack.c.b16 %v4463, %v4462
        %v4499 = vpack.c.b16 %v4465, %v4464
        %v4500 = vpack.c.b16 %v4467, %v4466
        %v4501 = vpack.c.b16 %v4469, %v4468
        %4534 = vmatprep.subr.bf16.mxu0 0
        %4535 = vmatpush1.bf16.msra.mxu0 %v4477
        %4536 = vmatprep.subr.bf16.mxu0 0
        %4537 = vmatpush1.bf16.msra.mxu0 %v4476
        %4538 = vmatprep.subr.bf16.mxu0 0
        %4539 = vmatpush1.bf16.msra.mxu0 %v4475
        %4540 = vmatprep.subr.bf16.mxu0 0
        %4541 = vmatpush1.bf16.msra.mxu0 %v4474
        %4542 = vmatprep.subr.bf16.mxu0 0
        %4543 = vmatpush1.bf16.msra.mxu0 %v4473
        %4544 = vmatprep.subr.bf16.mxu0 0
        %4545 = vmatpush1.bf16.msra.mxu0 %v4472
        %4546 = vmatprep.subr.bf16.mxu0 0
        %4547 = vmatpush1.bf16.msra.mxu0 %v4471
        %4548 = vmatprep.subr.bf16.mxu0 0
        %4549 = vmatpush1.bf16.msra.mxu0 %v4470
        %4550 = vmatprep.subr.bf16.mxu0 0
        %4551 = vmatpush2.bf16.msra.mxu0 %v4485
        %4552 = vmatprep.subr.bf16.mxu0 0
        %4553 = vmatpush2.bf16.msra.mxu0 %v4484
        %4554 = vmatprep.subr.bf16.mxu0 0
        %4555 = vmatpush2.bf16.msra.mxu0 %v4483
        %4556 = vmatprep.subr.bf16.mxu0 0
        %4557 = vmatpush2.bf16.msra.mxu0 %v4482
        %4558 = vmatprep.subr.bf16.mxu0 0
        %4559 = vmatpush2.bf16.msra.mxu0 %v4481
        %4560 = vmatprep.subr.bf16.mxu0 0
        %4561 = vmatpush2.bf16.msra.mxu0 %v4480
        %4562 = vmatprep.subr.bf16.mxu0 0
        %4563 = vmatpush2.bf16.msra.mxu0 %v4479
        %4564 = vmatprep.subr.bf16.mxu0 0
        %4565 = vmatpush2.bf16.msra.mxu0 %v4478
        %4566 = vmatprep.mubr.bf16.mxu0 %v4335
        %4567 = vmatmul.mubr.bf16.gmra.mxu0 %v4334
        %v4568 = vpop.f32.mrf.mxu0
        %v4569 = vadd.f32 0.0, %v4568
        %v4570 = vpop.f32.mrf.mxu0
        %v4571 = vpop.f32.mrf.mxu0
        %v4572 = vpop.f32.mrf.mxu0
        %4573 = vdwg.mxu0
        %4574 = vmatprep.subr.bf16.mxu0 0
        %4575 = vmatpush1.bf16.msra.mxu0 %v4493
        %4576 = vmatprep.subr.bf16.mxu0 0
        %4577 = vmatpush1.bf16.msra.mxu0 %v4492
        %4578 = vmatprep.subr.bf16.mxu0 0
        %4579 = vmatpush1.bf16.msra.mxu0 %v4491
        %4580 = vmatprep.subr.bf16.mxu0 0
        %4581 = vmatpush1.bf16.msra.mxu0 %v4490
        %4582 = vmatprep.subr.bf16.mxu0 0
        %4583 = vmatpush1.bf16.msra.mxu0 %v4489
        %4584 = vmatprep.subr.bf16.mxu0 0
        %4585 = vmatpush1.bf16.msra.mxu0 %v4488
        %4586 = vmatprep.subr.bf16.mxu0 0
        %4587 = vmatpush1.bf16.msra.mxu0 %v4487
        %4588 = vmatprep.subr.bf16.mxu0 0
        %4589 = vmatpush1.bf16.msra.mxu0 %v4486
        %4590 = vmatprep.subr.bf16.mxu0 0
        %4591 = vmatpush2.bf16.msra.mxu0 %v4501
        %4592 = vmatprep.subr.bf16.mxu0 0
        %4593 = vmatpush2.bf16.msra.mxu0 %v4500
        %4594 = vmatprep.subr.bf16.mxu0 0
        %4595 = vmatpush2.bf16.msra.mxu0 %v4499
        %4596 = vmatprep.subr.bf16.mxu0 0
        %4597 = vmatpush2.bf16.msra.mxu0 %v4498
        %4598 = vmatprep.subr.bf16.mxu0 0
        %4599 = vmatpush2.bf16.msra.mxu0 %v4497
        %4600 = vmatprep.subr.bf16.mxu0 0
        %4601 = vmatpush2.bf16.msra.mxu0 %v4496
        %4602 = vmatprep.subr.bf16.mxu0 0
        %4603 = vmatpush2.bf16.msra.mxu0 %v4495
        %4604 = vmatprep.subr.bf16.mxu0 0
        %4605 = vmatpush2.bf16.msra.mxu0 %v4494
        %4606 = vmatprep.mubr.bf16.mxu0 %v4337
        %4607 = vmatmul.mubr.bf16.gmra.mxu0 %v4336
        %v4608 = vpop.f32.mrf.mxu0
        %v4609 = vadd.f32 %v4569, %v4608
        %v4610 = vpop.f32.mrf.mxu0
        %v4611 = vpop.f32.mrf.mxu0
        %v4612 = vpop.f32.mrf.mxu0
        %4613 = vdwg.mxu0
        %v4614 = vadd.f32 %v4138, %v4609
        %4615 = vst [vmem:[#allocation2] sm:$0xff] %v4614
        %v4616 = vld [vmem:[#allocation3] sm:$0xff]
        %4617 = vadd.xlane.f32.xlu0 %v340
        %v4618 = vpop.xlane.xlu0 %4617
        %v4619 = vadd.f32 %v4616, %v4618
        %vm4620 = vcmask 7168
        %4621 = vst.msk [vmem:[#allocation3] sm:$0xff] %vm4620, %v4619
        %p4622 = scmp.eq.s32.totalorder %s26, 1
        // Predicated region
        $region53: #{_domain_classifier_logits_padded.1} parent=47 // pred_check
          %p4623 = pneg %p4622
        $region54: #{_domain_classifier_logits_padded.1} parent=47 // pred_check_branch
          %4625 = sbr.rel (%p4623) target = $region56
        $region55: #{_domain_classifier_logits_padded.1} parent=47 // pred_region
          %v4626 = vld [vmem:[#allocation3] sm:$0xff]
          %v4627 = vmax.f32 %v4626, 1.0
          %v4628 = vld [vmem:[#allocation2] sm:$0xff]
          %v4629 = vrcp.pop %v4627
          %4631 = vset.pattern.permute.xlu0 0
          %4632 = vperm.xlu0 %4631, %v4629
          %v4633 = vpop.permute.xlu0 %4632
          %v4635 = vmul.f32 %v4628, %v4633
          %v4636 = vpack.c.bf16 %v4635, %v4635
          %v4637 = vld [vmem:[%s3] sm:$0xf]
          %v4638 = vld [vmem:[%s3 + $0x4] sm:$0xf]
          %v4639 = vld [vmem:[%s3 + $0x8] sm:$0xf]
          %v4640 = vld [vmem:[%s3 + $0xc] sm:$0xf]
          %v4641 = vld [vmem:[%s3 + $0x10] sm:$0xf]
          %v4642 = vld [vmem:[%s3 + $0x14] sm:$0xf]
          %v4643 = vld [vmem:[%s3 + $0x18] sm:$0xf]
          %v4644 = vld [vmem:[%s3 + $0x1c] sm:$0xf]
          %v4645 = vld [vmem:[%s3 + $0x20] sm:$0xf]
          %v4646 = vld [vmem:[%s3 + $0x24] sm:$0xf]
          %v4647 = vld [vmem:[%s3 + $0x28] sm:$0xf]
          %v4648 = vld [vmem:[%s3 + $0x2c] sm:$0xf]
          %v4649 = vld [vmem:[%s3 + $0x30] sm:$0xf]
          %v4650 = vld [vmem:[%s3 + $0x34] sm:$0xf]
          %v4651 = vld [vmem:[%s3 + $0x38] sm:$0xf]
          %v4652 = vld [vmem:[%s3 + $0x3c] sm:$0xf]
          %v4653 = vld [vmem:[%s4] sm:$0x1]
          %v4655 = vlaneseq
          %v4656 = vshrl.u32 %v4655, 7
          %v4657 = vsub.s32 0, %v4656
          %v4658 = vrot.slane %v4653, %v4657
          %v4676 = vunpack.c.l.b16 %v4637
          %v4677 = vunpack.c.l.b16 %v4638
          %v4678 = vunpack.c.l.b16 %v4639
          %v4679 = vunpack.c.l.b16 %v4640
          %v4680 = vunpack.c.l.b16 %v4641
          %v4681 = vunpack.c.l.b16 %v4642
          %v4682 = vunpack.c.l.b16 %v4643
          %v4683 = vunpack.c.l.b16 %v4644
          %v4684 = vunpack.c.l.b16 %v4645
          %v4685 = vunpack.c.l.b16 %v4646
          %v4686 = vunpack.c.l.b16 %v4647
          %v4687 = vunpack.c.l.b16 %v4648
          %v4688 = vunpack.c.l.b16 %v4649
          %v4689 = vunpack.c.l.b16 %v4650
          %v4690 = vunpack.c.l.b16 %v4651
          %v4691 = vunpack.c.l.b16 %v4652
          %v4692 = vpack.c.b16 %v4677, %v4676
          %v4693 = vpack.c.b16 %v4679, %v4678
          %v4694 = vpack.c.b16 %v4681, %v4680
          %v4695 = vpack.c.b16 %v4683, %v4682
          %v4696 = vpack.c.b16 %v4685, %v4684
          %v4697 = vpack.c.b16 %v4687, %v4686
          %v4698 = vpack.c.b16 %v4689, %v4688
          %v4699 = vpack.c.b16 %v4691, %v4690
          %4708 = vmatprep.subr.bf16.mxu0 0
          %4709 = vmatpush1.bf16.msra.mxu0 %v4699
          %4710 = vmatprep.subr.bf16.mxu0 0
          %4711 = vmatpush1.bf16.msra.mxu0 %v4698
          %4712 = vmatprep.subr.bf16.mxu0 0
          %4713 = vmatpush1.bf16.msra.mxu0 %v4697
          %4714 = vmatprep.subr.bf16.mxu0 0
          %4715 = vmatpush1.bf16.msra.mxu0 %v4696
          %4716 = vmatprep.subr.bf16.mxu0 0
          %4717 = vmatpush1.bf16.msra.mxu0 %v4695
          %4718 = vmatprep.subr.bf16.mxu0 0
          %4719 = vmatpush1.bf16.msra.mxu0 %v4694
          %4720 = vmatprep.subr.bf16.mxu0 0
          %4721 = vmatpush1.bf16.msra.mxu0 %v4693
          %4722 = vmatprep.subr.bf16.mxu0 0
          %4723 = vmatpush1.bf16.msra.mxu0 %v4692
          %4724 = vmatprep.subr.bf16.mxu0 0
          %4725 = vmatpush2.bf16.msra.mxu0 0
          %4726 = vmatprep.subr.bf16.mxu0 0
          %4727 = vmatpush2.bf16.msra.mxu0 0
          %4728 = vmatprep.subr.bf16.mxu0 0
          %4729 = vmatpush2.bf16.msra.mxu0 0
          %4730 = vmatprep.subr.bf16.mxu0 0
          %4731 = vmatpush2.bf16.msra.mxu0 0
          %4732 = vmatprep.subr.bf16.mxu0 0
          %4733 = vmatpush2.bf16.msra.mxu0 0
          %4734 = vmatprep.subr.bf16.mxu0 0
          %4735 = vmatpush2.bf16.msra.mxu0 0
          %4736 = vmatprep.subr.bf16.mxu0 0
          %4737 = vmatpush2.bf16.msra.mxu0 0
          %4738 = vmatprep.subr.bf16.mxu0 0
          %4739 = vmatpush2.bf16.msra.mxu0 0
          %4740 = vmatprep.mubr.bf16.mxu0 0
          %4741 = vmatmul.mubr.bf16.gmra.mxu0 %v4636
          %v4742 = vpop.f32.mrf.mxu0
          %v4743 = vadd.f32 %v4658, %v4742
          %v4744 = vpop.f32.mrf.mxu0
          %v4745 = vpop.f32.mrf.mxu0
          %v4746 = vpop.f32.mrf.mxu0
          %4747 = vdwg.mxu0
          %v4748 = vmax.f32 %v4743, 0.0
          %v4749 = vpack.c.bf16 %v4748, %v4748
          %v4750 = vld [vmem:[%s5] sm:$0xf]
          %v4751 = vld [vmem:[%s5 + $0x4] sm:$0xf]
          %v4752 = vld [vmem:[%s5 + $0x8] sm:$0xf]
          %v4753 = vld [vmem:[%s5 + $0xc] sm:$0xf]
          %v4754 = vld [vmem:[%s5 + $0x10] sm:$0xf]
          %v4755 = vld [vmem:[%s5 + $0x14] sm:$0xf]
          %v4756 = vld [vmem:[%s5 + $0x18] sm:$0xf]
          %v4757 = vld [vmem:[%s5 + $0x1c] sm:$0xf]
          %v4758 = vld [vmem:[%s5 + $0x20] sm:$0xf]
          %v4759 = vld [vmem:[%s5 + $0x24] sm:$0xf]
          %v4760 = vld [vmem:[%s5 + $0x28] sm:$0xf]
          %v4761 = vld [vmem:[%s5 + $0x2c] sm:$0xf]
          %v4762 = vld [vmem:[%s5 + $0x30] sm:$0xf]
          %v4763 = vld [vmem:[%s5 + $0x34] sm:$0xf]
          %v4764 = vld [vmem:[%s5 + $0x38] sm:$0xf]
          %v4765 = vld [vmem:[%s5 + $0x3c] sm:$0xf]
          %v4766 = vld [vmem:[%s6] sm:$0x1]
          %v4768 = vlaneseq
          %v4769 = vshrl.u32 %v4768, 7
          %v4770 = vsub.s32 0, %v4769
          %v4771 = vrot.slane %v4766, %v4770
          %v4789 = vunpack.c.l.b16 %v4750
          %v4790 = vunpack.c.l.b16 %v4751
          %v4791 = vunpack.c.l.b16 %v4752
          %v4792 = vunpack.c.l.b16 %v4753
          %v4793 = vunpack.c.l.b16 %v4754
          %v4794 = vunpack.c.l.b16 %v4755
          %v4795 = vunpack.c.l.b16 %v4756
          %v4796 = vunpack.c.l.b16 %v4757
          %v4797 = vunpack.c.l.b16 %v4758
          %v4798 = vunpack.c.l.b16 %v4759
          %v4799 = vunpack.c.l.b16 %v4760
          %v4800 = vunpack.c.l.b16 %v4761
          %v4801 = vunpack.c.l.b16 %v4762
          %v4802 = vunpack.c.l.b16 %v4763
          %v4803 = vunpack.c.l.b16 %v4764
          %v4804 = vunpack.c.l.b16 %v4765
          %v4805 = vpack.c.b16 %v4790, %v4789
          %v4806 = vpack.c.b16 %v4792, %v4791
          %v4807 = vpack.c.b16 %v4794, %v4793
          %v4808 = vpack.c.b16 %v4796, %v4795
          %v4809 = vpack.c.b16 %v4798, %v4797
          %v4810 = vpack.c.b16 %v4800, %v4799
          %v4811 = vpack.c.b16 %v4802, %v4801
          %v4812 = vpack.c.b16 %v4804, %v4803
          %4821 = vmatprep.subr.bf16.mxu0 0
          %4822 = vmatpush1.bf16.msra.mxu0 %v4812
          %4823 = vmatprep.subr.bf16.mxu0 0
          %4824 = vmatpush1.bf16.msra.mxu0 %v4811
          %4825 = vmatprep.subr.bf16.mxu0 0
          %4826 = vmatpush1.bf16.msra.mxu0 %v4810
          %4827 = vmatprep.subr.bf16.mxu0 0
          %4828 = vmatpush1.bf16.msra.mxu0 %v4809
          %4829 = vmatprep.subr.bf16.mxu0 0
          %4830 = vmatpush1.bf16.msra.mxu0 %v4808
          %4831 = vmatprep.subr.bf16.mxu0 0
          %4832 = vmatpush1.bf16.msra.mxu0 %v4807
          %4833 = vmatprep.subr.bf16.mxu0 0
          %4834 = vmatpush1.bf16.msra.mxu0 %v4806
          %4835 = vmatprep.subr.bf16.mxu0 0
          %4836 = vmatpush1.bf16.msra.mxu0 %v4805
          %4837 = vmatprep.subr.bf16.mxu0 0
          %4838 = vmatpush2.bf16.msra.mxu0 0
          %4839 = vmatprep.subr.bf16.mxu0 0
          %4840 = vmatpush2.bf16.msra.mxu0 0
          %4841 = vmatprep.subr.bf16.mxu0 0
          %4842 = vmatpush2.bf16.msra.mxu0 0
          %4843 = vmatprep.subr.bf16.mxu0 0
          %4844 = vmatpush2.bf16.msra.mxu0 0
          %4845 = vmatprep.subr.bf16.mxu0 0
          %4846 = vmatpush2.bf16.msra.mxu0 0
          %4847 = vmatprep.subr.bf16.mxu0 0
          %4848 = vmatpush2.bf16.msra.mxu0 0
          %4849 = vmatprep.subr.bf16.mxu0 0
          %4850 = vmatpush2.bf16.msra.mxu0 0
          %4851 = vmatprep.subr.bf16.mxu0 0
          %4852 = vmatpush2.bf16.msra.mxu0 0
          %4853 = vmatprep.mubr.bf16.mxu0 0
          %4854 = vmatmul.mubr.bf16.gmra.mxu0 %v4749
          %v4855 = vpop.f32.mrf.mxu0
          %v4856 = vadd.f32 %v4771, %v4855
          %v4857 = vpop.f32.mrf.mxu0
          %v4858 = vpop.f32.mrf.mxu0
          %v4859 = vpop.f32.mrf.mxu0
          %4860 = vdwg.mxu0
          %4861 = vst [vmem:[%s314] sm:$0xff] %v4856
        $region56: #{_domain_classifier_logits_padded.1} parent=47 // pred_fallthru
          _
        %s4862 = sand.u32 %s202, 1
        %s4863 = scalar_lea.sflag [#allocation5], %s4862
        %s4864 = sand.u32 %s202, 1
        %s4865 = smul.addr %s4864, 8
        %s4866 = scalar_lea.vmem [#allocation4], %s4865
        // Predicated region
        $region57: #{_domain_classifier_logits_padded.1} parent=47 // pred_check
          %p4867 = pneg %p212
        $region58: #{_domain_classifier_logits_padded.1} parent=47 // pred_check_branch
          %4869 = sbr.rel (%p4867) target = $region60
        $region59: #{_domain_classifier_logits_padded.1} parent=47 // pred_region
          %s4871 = ssub.s32 128, 128
          %4872 = vsyncadd %s4863, %s4871
          %s4873 = smul.addr %s25, 128
          %s4874 = scalar_lea.hbm %s7, %s4873
          %s4876 = sshll.u32 %s4866, 4
          %s4877 = int_to_ptr.vmem [resolvable:$true] %s4876
          %4879 = dma.vmem_to_hbm [thread:$0]  %s4877, 128, %s4874, %s4863
        $region60: #{_domain_classifier_logits_padded.1} parent=47 // pred_fallthru
          _
      $region48: #{_domain_classifier_logits_padded.1} parent=5 // pred_fallthru
        _
      %p4880 = scmp.le.s32.totalorder 2, %s16
      // Predicated region
      $region61: #{_domain_classifier_logits_padded.1} parent=5 // pred_check
        %p4881 = pneg %p4880
      $region62: #{_domain_classifier_logits_padded.1} parent=5 // pred_check_branch
        %4883 = sbr.rel (%p4881) target = $region64
      $region63: #{_domain_classifier_logits_padded.1} parent=5 // pred_region
        %s4884 = ssub.s32 %s16, 2
        // Predicated region
        $region65: #{_domain_classifier_logits_padded.1} parent=63 // pred_check
          %p4885 = pneg %p218
        $region66: #{_domain_classifier_logits_padded.1} parent=63 // pred_check_branch
          %4887 = sbr.rel (%p4885) target = $region68
        $region67: #{_domain_classifier_logits_padded.1} parent=63 // pred_region
          %s4888 = sand.u32 %s203, 1
          %s4889 = scalar_lea.sflag [#allocation5], %s4888
          %s4890 = sand.u32 %s203, 1
          %s4891 = smul.addr %s4890, 8
          %s4892 = scalar_lea.vmem [#allocation4], %s4891
          %4893 = dma.done %s4889, 128
        $region68: #{_domain_classifier_logits_padded.1} parent=63 // pred_fallthru
          _
      $region64: #{_domain_classifier_logits_padded.1} parent=5 // pred_fallthru
        _
    $region6: #{_domain_classifier_logits_padded.1} parent=1 // loop_footer
      %s20 = sadd.s32 1, %s16
    $region7: #{_domain_classifier_logits_padded.1} parent=1 // loop_footer_branch
      %15 = sbr.rel target = $region3
    $region8: #{_domain_classifier_logits_padded.1} parent=1 // loop_exit
      _
    %4894 = vsyncpa [#allocation5], 1
    %s4895 = scalar_lea.sflag [#allocation5], 1
    %4896 = vsyncpa %s4895, 1

</llo_original>
